<compile_context>
chip_gen: v5e
topology: v5e:2x2
jax: 0.10.0
libtpu: 0.0.40
codegen_flags: <defaults>
</compile_context>

<pallas_src>
import functools
import math

import jax
import jax.numpy as jnp
from jax.experimental import pallas as pl
from jax.experimental.pallas import tpu as pltpu


# ----------------------------------------------------------------------------
# Configuration (all offsets used by BOTH the packer and the kernel)
# ----------------------------------------------------------------------------
def make_cfg(B=2, S=8, E=32, H=8, F=64, HID=32, TGT=8, IN_F=4):
    assert E % H == 0
    BS = B * S
    HBS = H * BS
    E3, F3, W3 = 3 * E, 3 * F, 3 * HBS
    r128 = lambda n: ((n + 127) // 128) * 128
    return dict(
        B=B, S=S, E=E, H=H, F=F, HID=HID, TGT=TGT, IN_F=IN_F,
        BS=BS, HBS=HBS, E3=E3, F3=F3, W3=W3, dh=E // H,
        # stage-1 fused-QKV lane layout: q|k|v groups at 128-aligned strides
        s1_qs=r128(E3),
        # stage-1 [Wo_blockdiag | Wff1_blockdiag] slab column offsets
        s1_wff1=r128(E3),
        # stage-2 per-layer [Wqkv | Wo | Wff1] slab column offsets
        s2_wo=r128(3 * E), s2_wff1=r128(3 * E) + r128(E),
        # static-table slab column offsets
        ta_m01=W3, ta_sel=2 * W3,
        tb_avg=W3,
        tc_rep=r128(E3),
        # fusion / decoder / embedding slab column offsets
        hw_fus=0, hw_d1=E, hw_d2=E + HID, hw_emb=E + HID + 2 * TGT,
    )


# ----------------------------------------------------------------------------
# Fused Pallas kernel
# ----------------------------------------------------------------------------
def _seastar_kernel(src_ref, s1_wqkv_ref, s1_wa_ref, s1_wff2_ref,
                    s2_wa_ref, s2_wff2_ref, s1_vec_ref, s2_vec_ref,
                    head_w_ref, head_vec_ref, tab_a_ref, tab_b_ref, tab_c_ref,
                    out_ref, *, cfg):
    f32 = jnp.float32
    B, E, H, F, HID, TGT, IN_F = (cfg[k] for k in
                                  ('B', 'E', 'H', 'F', 'HID', 'TGT', 'IN_F'))
    BS, HBS, E3, F3, W3 = (cfg[k] for k in ('BS', 'HBS', 'E3', 'F3', 'W3'))

    def mm(a, b):
        return jnp.dot(a, b, preferred_element_type=f32)

    def layer_norm(y, g, b, avg):
        # var = E[y^2] - mu^2: two INDEPENDENT reductions that overlap in the pipe.
        if avg is None:                      # single branch: plain cross-lane moments
            mu = jnp.mean(y, axis=-1, keepdims=True)
            ex2 = jnp.mean(y * y, axis=-1, keepdims=True)
        else:                                # fused branches: segmented mean via MXU
            mu = mm(y, avg)
            ex2 = mm(y * y, avg)
        var = ex2 - mu * mu
        return (y - mu) * jax.lax.rsqrt(var + 1e-5) * g + b

    def attn_ffn(x_in, x_res, nb, qs, *, wqkv, bqkv, wo, bo, wff1, bff1,
                 wff2, bff2, ln1g, ln1b, ln2g, ln2b,
                 repT, maskK, rep, maskV, mask01, avg):
        """nb lane-fused post-LN nn.TransformerEncoderLayer(s).

        x_in: (BS, E) projection input; x_res: (BS, nb*E) residual input.
        """
        G = nb * E
        qkv = mm(x_in, wqkv) + bqkv          # one in-projection: [q | k | v] groups
        q = qkv[:, 0:G]                      # 1/sqrt(dh) already folded into Wq/bq
        k = qkv[:, qs:qs + G]
        v = qkv[:, 2 * qs:2 * qs + G]

        # Block-diagonal head layout: one matmul yields every (branch, head) score.
        k_bd = mm(k.T, repT) * maskK         # (G, nb*H*BS)
        s = mm(q, k_bd)                      # (BS, nb*H*BS) exact per-head scores

        # Row-global max is a valid shared softmax stabilizer (num & den share it).
        m = jnp.max(s, axis=-1, keepdims=True)
        p = jnp.exp(s - m) * mask01          # cross-sequence keys -> exactly 0

        v_st = mm(rep, v) * maskV            # (nb*H*BS, G)
        num = mm(p, v_st)                    # (BS, G)  per-head weighted values
        den = mm(p, maskV)                   # (BS, G)  per-head denominators
        attn = num * pl.reciprocal(jnp.maximum(den, 1e-30), approx=True)
        attn = mm(attn, wo) + bo

        h1 = layer_norm(x_res + attn, ln1g, ln1b, avg)
        ff = jnp.maximum(mm(h1, wff1) + bff1, 0.0)
        ff = mm(ff, wff2) + bff2
        return layer_norm(h1 + ff, ln2g, ln2b, avg)

    # ---- embedding: Linear(IN_F -> E) stand-in for SEASTAREmbedding ----
    emb_w = head_w_ref[0:IN_F, cfg['hw_emb']:cfg['hw_emb'] + E]
    x = mm(src_ref[...], emb_w) + head_vec_ref[0:1, 0:E]            # (BS, E)

    # ---- stage 1: the 3 parallel encoders fused into ONE wide pass ----
    s1v = s1_vec_ref[...]
    x3 = jnp.concatenate([x, x, x], axis=-1)                        # per-branch residual
    s1_out = attn_ffn(
        x, x3, 3, cfg['s1_qs'],
        wqkv=s1_wqkv_ref[...], bqkv=s1v[0:1, :],
        wo=s1_wa_ref[:, 0:E3], bo=s1v[1:2, 0:E3],
        wff1=s1_wa_ref[:, cfg['s1_wff1']:cfg['s1_wff1'] + F3], bff1=s1v[6:7, 0:F3],
        wff2=s1_wff2_ref[...], bff2=s1v[7:8, 0:E3],
        ln1g=s1v[2:3, 0:E3], ln1b=s1v[3:4, 0:E3],
        ln2g=s1v[4:5, 0:E3], ln2b=s1v[5:6, 0:E3],
        repT=tab_a_ref[:, 0:W3],
        mask01=tab_a_ref[:, cfg['ta_m01']:cfg['ta_m01'] + W3],
        maskK=tab_b_ref[:, 0:W3],
        maskV=tab_c_ref[:, 0:E3],
        rep=tab_c_ref[:, cfg['tc_rep']:cfg['tc_rep'] + BS],
        avg=tab_b_ref[:, cfg['tb_avg']:cfg['tb_avg'] + E3])

    # s1_out lanes are already [sp1 | tp1 | en1] -> fusion concat is free.
    fused = (mm(s1_out, head_w_ref[0:E3, cfg['hw_fus']:cfg['hw_fus'] + E])
             + head_vec_ref[1:2, 0:E])

    # ---- stage 2: 3 sequential encoder layers (spatial_2, environ_2, temporal_2) ----
    y = fused
    for l in range(3):
        wa = s2_wa_ref[l]                    # (E, .) packed [Wqkv | Wo | Wff1]
        vec = s2_vec_ref[l]                  # (8, .) packed per-layer vectors
        y = attn_ffn(
            y, y, 1, E,
            wqkv=wa[:, 0:3 * E], bqkv=vec[0:1, 0:3 * E],
            wo=wa[:, cfg['s2_wo']:cfg['s2_wo'] + E], bo=vec[1:2, 0:E],
            wff1=wa[:, cfg['s2_wff1']:cfg['s2_wff1'] + F], bff1=vec[6:7, 0:F],
            wff2=s2_wff2_ref[l], bff2=vec[7:8, 0:E],
            ln1g=vec[2:3, 0:E], ln1b=vec[3:4, 0:E],
            ln2g=vec[4:5, 0:E], ln2b=vec[5:6, 0:E],
            repT=tab_a_ref[:, 0:HBS],
            mask01=tab_a_ref[:, cfg['ta_m01']:cfg['ta_m01'] + HBS],
            maskK=tab_b_ref[0:E, 0:HBS],
            maskV=tab_c_ref[0:HBS, 0:E],
            rep=tab_c_ref[0:HBS, cfg['tc_rep']:cfg['tc_rep'] + BS],
            avg=None)

    # ---- last timestep per sequence + decoder MLP (dropout = identity) ----
    sel = tab_a_ref[0:B, cfg['ta_sel']:cfg['ta_sel'] + BS]          # (B, BS)
    last = mm(sel, y)                                               # (B, E)
    h = jnp.maximum(mm(last, head_w_ref[0:E, cfg['hw_d1']:cfg['hw_d1'] + HID])
                    + head_vec_ref[2:3, 0:HID], 0.0)
    out_ref[...] = (mm(h, head_w_ref[0:HID, cfg['hw_d2']:cfg['hw_d2'] + 2 * TGT])
                    + head_vec_ref[3:4, 0:2 * TGT])                 # (B, 2*TGT)


# ----------------------------------------------------------------------------
# Static block-diagonal attention tables (built once, packed into 3 slabs)
# ----------------------------------------------------------------------------
def _build_tables(cfg):
    f32 = jnp.float32
    B, S, E = cfg['B'], cfg['S'], cfg['E']
    BS, HBS, E3, W3, dh = cfg['BS'], cfg['HBS'], cfg['E3'], cfg['W3'], cfg['dh']

    j = jnp.arange(W3)                       # score-column index = (branch, head, key)
    b_j, h_j, c_j = j // HBS, (j % HBS) // BS, j % BS
    r = jnp.arange(BS)                       # query-row / key-row index
    f = jnp.arange(E3)                       # feature index = (branch, head, dim)
    b_f, h_f = f // E, (f % E) // dh

    repT = (r[:, None] == c_j[None, :]).astype(f32)                      # (BS, W3)
    mask01 = ((r[:, None] // S) == (c_j[None, :] // S)).astype(f32)      # (BS, W3)
    maskK = ((b_f[:, None] == b_j[None, :]) &
             (h_f[:, None] == h_j[None, :])).astype(f32)                 # (E3, W3)
    avg = (b_f[:, None] == b_f[None, :]).astype(f32) / E                 # (E3, E3)
    sel = (r[None, :] == jnp.arange(B)[:, None] * S + (S - 1)).astype(f32)  # (B, BS)

    tab_a = jnp.zeros((BS, 2 * W3 + BS), f32)
    tab_a = (tab_a.at[:, 0:W3].set(repT)
                  .at[:, cfg['ta_m01']:cfg['ta_m01'] + W3].set(mask01)
                  .at[0:B, cfg['ta_sel']:cfg['ta_sel'] + BS].set(sel))
    tab_b = jnp.zeros((E3, W3 + E3), f32)
    tab_b = (tab_b.at[:, 0:W3].set(maskK)
                  .at[:, cfg['tb_avg']:cfg['tb_avg'] + E3].set(avg))
    tab_c = jnp.zeros((W3, cfg['tc_rep'] + BS), f32)
    tab_c = (tab_c.at[:, 0:E3].set(maskK.T)                              # maskV
                  .at[:, cfg['tc_rep']:cfg['tc_rep'] + BS].set(repT.T))  # rep
    return dict(tab_a=tab_a, tab_b=tab_b, tab_c=tab_c)


# ----------------------------------------------------------------------------
# Deterministic synthetic parameters, packed into a handful of VMEM slabs
# ----------------------------------------------------------------------------
def init_and_pack_params(key, cfg):
    f32 = jnp.float32
    E, F, HID, TGT, IN_F = (cfg[k] for k in ('E', 'F', 'HID', 'TGT', 'IN_F'))
    E3, F3 = cfg['E3'], cfg['F3']
    qs = cfg['s1_qs']
    scale = 1.0 / math.sqrt(cfg['dh'])       # folded into Wq / bq at pack time

    def dense(k, i, o):
        return jax.random.normal(k, (i, o), f32) * 0.02

    keys = jax.random.split(key, 8)
    # Layer order: 0..2 = spatial_1, temporal_1, environ_1 (parallel stage 1)
    #              3..5 = spatial_2, environ_2, temporal_2 (sequential stage 2)
    layers = []
    for lk in jax.random.split(keys[0], 6):
        kq, kk, kv, ko, k1, k2 = jax.random.split(lk, 6)
        layers.append(dict(
            wq=dense(kq, E, E), wk=dense(kk, E, E), wv=dense(kv, E, E),
            bq=jnp.zeros((E,), f32), bk=jnp.zeros((E,), f32),
            bv=jnp.zeros((E,), f32),
            wo=dense(ko, E, E), bo=jnp.zeros((E,), f32),
            ln1g=jnp.ones((E,), f32), ln1b=jnp.zeros((E,), f32),
            ln2g=jnp.ones((E,), f32), ln2b=jnp.zeros((E,), f32),
            wff1=dense(k1, E, F), bff1=jnp.zeros((F,), f32),
            wff2=dense(k2, F, E), bff2=jnp.zeros((E,), f32)))
    emb_w, emb_b = dense(keys[1], IN_F, E), jnp.zeros((E,), f32)
    fus_w, fus_b = dense(keys[2], E3, E), jnp.zeros((E,), f32)
    d1_w, d1_b = dense(keys[3], E, HID), jnp.zeros((HID,), f32)
    d2_w, d2_b = dense(keys[4], HID, 2 * TGT), jnp.zeros((2 * TGT,), f32)

    s1, s2 = layers[:3], layers[3:]

    def cat(name, axis=0):
        return jnp.concatenate([l[name] for l in s1], axis=axis)

    def blockdiag(mats):
        r, c = mats[0].shape
        out = jnp.zeros((3 * r, 3 * c), f32)
        for i, m in enumerate(mats):
            out = out.at[i * r:(i + 1) * r, i * c:(i + 1) * c].set(m)
        return out

    # --- stage-1 slabs: three branches fused along lanes / block-diagonal ---
    s1_wqkv = jnp.zeros((E, 2 * qs + E3), f32)
    s1_wqkv = (s1_wqkv
               .at[:, 0:E3].set(cat('wq', 1) * scale)
               .at[:, qs:qs + E3].set(cat('wk', 1))
               .at[:, 2 * qs:2 * qs + E3].set(cat('wv', 1)))
    s1_wa = jnp.zeros((E3, cfg['s1_wff1'] + F3), f32)
    s1_wa = (s1_wa
             .at[:, 0:E3].set(blockdiag([l['wo'] for l in s1]))
             .at[:, cfg['s1_wff1']:cfg['s1_wff1'] + F3].set(
                 blockdiag([l['wff1'] for l in s1])))
    s1_wff2 = blockdiag([l['wff2'] for l in s1])                     # (F3, E3)
    s1_vec = jnp.zeros((8, 2 * qs + E3), f32)
    s1_vec = (s1_vec
              .at[0, 0:E3].set(cat('bq') * scale)
              .at[0, qs:qs + E3].set(cat('bk'))
              .at[0, 2 * qs:2 * qs + E3].set(cat('bv'))
              .at[1, 0:E3].set(cat('bo'))
              .at[2, 0:E3].set(cat('ln1g')).at[3, 0:E3].set(cat('ln1b'))
              .at[4, 0:E3].set(cat('ln2g')).at[5, 0:E3].set(cat('ln2b'))
              .at[6, 0:F3].set(cat('bff1'))
              .at[7, 0:E3].set(cat('bff2')))

    # --- stage-2 slabs: per-layer weights stacked on a leading axis of 3 ---
    s2_wa = jnp.zeros((3, E, cfg['s2_wff1'] + F), f32)
    s2_vec = jnp.zeros((3, 8, max(3 * E, F)), f32)
    s2_wff2 = jnp.stack([l['wff2'] for l in s2])                     # (3, F, E)
    for i, l in enumerate(s2):
        wqkv = jnp.concatenate([l['wq'] * scale, l['wk'], l['wv']], axis=1)
        s2_wa = (s2_wa
                 .at[i, :, 0:3 * E].set(wqkv)
                 .at[i, :, cfg['s2_wo']:cfg['s2_wo'] + E].set(l['wo'])
                 .at[i, :, cfg['s2_wff1']:cfg['s2_wff1'] + F].set(l['wff1']))
        s2_vec = (s2_vec
                  .at[i, 0, 0:3 * E].set(
                      jnp.concatenate([l['bq'] * scale, l['bk'], l['bv']]))
                  .at[i, 1, 0:E].set(l['bo'])
                  .at[i, 2, 0:E].set(l['ln1g']).at[i, 3, 0:E].set(l['ln1b'])
                  .at[i, 4, 0:E].set(l['ln2g']).at[i, 5, 0:E].set(l['ln2b'])
                  .at[i, 6, 0:F].set(l['bff1'])
                  .at[i, 7, 0:E].set(l['bff2']))

    # --- fusion / decoder / embedding slab ---
    head_rows = max(E3, E, HID, IN_F)
    head_w = jnp.zeros((head_rows, cfg['hw_emb'] + E), f32)
    head_w = (head_w
              .at[0:E3, cfg['hw_fus']:cfg['hw_fus'] + E].set(fus_w)
              .at[0:E, cfg['hw_d1']:cfg['hw_d1'] + HID].set(d1_w)
              .at[0:HID, cfg['hw_d2']:cfg['hw_d2'] + 2 * TGT].set(d2_w)
              .at[0:IN_F, cfg['hw_emb']:cfg['hw_emb'] + E].set(emb_w))
    head_vec = jnp.zeros((4, max(E, HID, 2 * TGT)), f32)
    head_vec = (head_vec
                .at[0, 0:E].set(emb_b).at[1, 0:E].set(fus_b)
                .at[2, 0:HID].set(d1_b).at[3, 0:2 * TGT].set(d2_b))

    packed = dict(s1_wqkv=s1_wqkv, s1_wa=s1_wa, s1_wff2=s1_wff2,
                  s2_wa=s2_wa, s2_wff2=s2_wff2, s1_vec=s1_vec, s2_vec=s2_vec,
                  head_w=head_w, head_vec=head_vec)
    packed.update(_build_tables(cfg))
    return packed


# ----------------------------------------------------------------------------
# SEASTAR forward — a single grid-less pallas_call
# ----------------------------------------------------------------------------
def seastar_forward(packed, src, dist, type_dist, env_dist, *, cfg):
    del dist, type_dist, env_dist            # reference forward() only uses src_e
    B, S, TGT, IN_F = cfg['B'], cfg['S'], cfg['TGT'], cfg['IN_F']
    assert src.shape == (B, S, IN_F), src.shape
    src_flat = src.reshape(B * S, IN_F).astype(jnp.float32)

    out = pl.pallas_call(
        functools.partial(_seastar_kernel, cfg=cfg),
        out_shape=jax.ShapeDtypeStruct((B, 2 * TGT), jnp.float32),
        compiler_params=pltpu.CompilerParams(
            vmem_limit_bytes=32 * 1024 * 1024),
    )(src_flat, packed['s1_wqkv'], packed['s1_wa'], packed['s1_wff2'],
      packed['s2_wa'], packed['s2_wff2'], packed['s1_vec'], packed['s2_vec'],
      packed['head_w'], packed['head_vec'], packed['tab_a'], packed['tab_b'],
      packed['tab_c'])
    return out.reshape(B, TGT, 2)


# ----------------------------------------------------------------------------
# Demo
# ----------------------------------------------------------------------------
if __name__ == "__main__":
    # src_dims = (8, 8, 8, 8) -> embedding_size E = 32, num_heads = 8 (dh = 4),
    # hidden = 32, src_len = 8, tgt_len = 8, dim_feedforward stand-in = 64.
    B, S, E, H = 2, 8, 32, 8
    FF, HIDDEN, TGT_LEN, G = 64, 32, 8, 6

    cfg = make_cfg(B=B, S=S, E=E, H=H, F=FF, HID=HIDDEN, TGT=TGT_LEN, IN_F=4)

    key = jax.random.PRNGKey(0)
    k_par, k_src, k_d, k_t, k_e = jax.random.split(key, 5)

    packed = init_and_pack_params(k_par, cfg)

    src = jax.random.normal(k_src, (B, S, 4), jnp.float32)
    dist = jax.random.normal(k_d, (B, S, G), jnp.float32)
    type_dist = jax.random.normal(k_t, (B, S, G), jnp.float32)
    env_dist = jax.random.normal(k_e, (B, S, G), jnp.float32)

    fwd = jax.jit(functools.partial(seastar_forward, cfg=cfg))
    pred = jax.block_until_ready(fwd(packed, src, dist, type_dist, env_dist))

    assert pred.shape == (B, TGT_LEN, 2), pred.shape
    assert bool(jnp.all(jnp.isfinite(pred)))
    print("KERNEL_OK")
</pallas_src>

<mosaic_0001>
module attributes {stable_mosaic.version = 11 : i64} {
  func.func @_seastar_kernel(%arg0: memref<16x4xf32, #tpu.memory_space<vmem>>, %arg1: memref<32x352xf32, #tpu.memory_space<vmem>>, %arg2: memref<96x320xf32, #tpu.memory_space<vmem>>, %arg3: memref<192x96xf32, #tpu.memory_space<vmem>>, %arg4: memref<3x32x320xf32, #tpu.memory_space<vmem>>, %arg5: memref<3x64x32xf32, #tpu.memory_space<vmem>>, %arg6: memref<8x352xf32, #tpu.memory_space<vmem>>, %arg7: memref<3x8x96xf32, #tpu.memory_space<vmem>>, %arg8: memref<96x112xf32, #tpu.memory_space<vmem>>, %arg9: memref<4x32xf32, #tpu.memory_space<vmem>>, %arg10: memref<16x784xf32, #tpu.memory_space<vmem>>, %arg11: memref<96x480xf32, #tpu.memory_space<vmem>>, %arg12: memref<384x144xf32, #tpu.memory_space<vmem>>, %arg13: memref<2x16xf32, #tpu.memory_space<vmem>>) attributes {dimension_semantics = [], scalar_prefetch = 0 : i64, scratch_operands = 0 : i64, tpu.core_type = #tpu.core_type<tc>} {
    %c0 = arith.constant 0 : index
    %c80 = arith.constant 80 : index
    %0 = vector.load %arg8[%c0, %c80] : memref<96x112xf32, #tpu.memory_space<vmem>>, vector<4x32xf32>
    %c0_0 = arith.constant 0 : index
    %c0_1 = arith.constant 0 : index
    %1 = vector.load %arg0[%c0_0, %c0_1] : memref<16x4xf32, #tpu.memory_space<vmem>>, vector<16x4xf32>
    %cst = arith.constant dense<0.000000e+00> : vector<16x32xf32>
    %2 = tpu.matmul %1, %0, %cst {dimension_numbers = #tpu.dot_dimension_numbers<[1], [0], [0], [1], [0, 0, 1, 1], [], []>} : vector<16x4xf32>, vector<4x32xf32>, vector<16x32xf32> -> vector<16x32xf32>
    %c0_2 = arith.constant 0 : index
    %c0_3 = arith.constant 0 : index
    %3 = vector.load %arg9[%c0_2, %c0_3] : memref<4x32xf32, #tpu.memory_space<vmem>>, vector<1x32xf32>
    %4 = vector.broadcast %3 : vector<1x32xf32> to vector<16x32xf32>
    %5 = arith.addf %2, %4 : vector<16x32xf32>
    %c0_4 = arith.constant 0 : index
    %c0_5 = arith.constant 0 : index
    %6 = vector.load %arg6[%c0_4, %c0_5] : memref<8x352xf32, #tpu.memory_space<vmem>>, vector<8x352xf32>
    %7 = tpu.concatenate %5, %5, %5 in 1 : vector<16x32xf32>, vector<16x32xf32>, vector<16x32xf32> -> vector<16x96xf32>
    %c0_6 = arith.constant 0 : index
    %c0_7 = arith.constant 0 : index
    %8 = vector.load %arg1[%c0_6, %c0_7] : memref<32x352xf32, #tpu.memory_space<vmem>>, vector<32x352xf32>
    %9 = vector.extract_strided_slice %6 {offsets = [0, 0], sizes = [1, 352], strides = [1, 1]} : vector<8x352xf32> to vector<1x352xf32>
    %c0_8 = arith.constant 0 : index
    %c0_9 = arith.constant 0 : index
    %10 = vector.load %arg2[%c0_8, %c0_9] : memref<96x320xf32, #tpu.memory_space<vmem>>, vector<96x96xf32>
    %11 = vector.extract_strided_slice %6 {offsets = [1, 0], sizes = [1, 96], strides = [1, 1]} : vector<8x352xf32> to vector<1x96xf32>
    %c0_10 = arith.constant 0 : index
    %c128 = arith.constant 128 : index
    %12 = vector.load %arg2[%c0_10, %c128] : memref<96x320xf32, #tpu.memory_space<vmem>>, vector<96x192xf32>
    %13 = vector.extract_strided_slice %6 {offsets = [6, 0], sizes = [1, 192], strides = [1, 1]} : vector<8x352xf32> to vector<1x192xf32>
    %c0_11 = arith.constant 0 : index
    %c0_12 = arith.constant 0 : index
    %14 = vector.load %arg3[%c0_11, %c0_12] : memref<192x96xf32, #tpu.memory_space<vmem>>, vector<192x96xf32>
    %15 = vector.extract_strided_slice %6 {offsets = [7, 0], sizes = [1, 96], strides = [1, 1]} : vector<8x352xf32> to vector<1x96xf32>
    %16 = vector.extract_strided_slice %6 {offsets = [2, 0], sizes = [1, 96], strides = [1, 1]} : vector<8x352xf32> to vector<1x96xf32>
    %17 = vector.extract_strided_slice %6 {offsets = [3, 0], sizes = [1, 96], strides = [1, 1]} : vector<8x352xf32> to vector<1x96xf32>
    %18 = vector.extract_strided_slice %6 {offsets = [4, 0], sizes = [1, 96], strides = [1, 1]} : vector<8x352xf32> to vector<1x96xf32>
    %19 = vector.extract_strided_slice %6 {offsets = [5, 0], sizes = [1, 96], strides = [1, 1]} : vector<8x352xf32> to vector<1x96xf32>
    %c0_13 = arith.constant 0 : index
    %c0_14 = arith.constant 0 : index
    %20 = vector.load %arg10[%c0_13, %c0_14] : memref<16x784xf32, #tpu.memory_space<vmem>>, vector<16x384xf32>
    %c0_15 = arith.constant 0 : index
    %c384 = arith.constant 384 : index
    %21 = vector.load %arg10[%c0_15, %c384] : memref<16x784xf32, #tpu.memory_space<vmem>>, vector<16x384xf32>
    %c0_16 = arith.constant 0 : index
    %c0_17 = arith.constant 0 : index
    %22 = vector.load %arg11[%c0_16, %c0_17] : memref<96x480xf32, #tpu.memory_space<vmem>>, vector<96x384xf32>
    %c0_18 = arith.constant 0 : index
    %c0_19 = arith.constant 0 : index
    %23 = vector.load %arg12[%c0_18, %c0_19] : memref<384x144xf32, #tpu.memory_space<vmem>>, vector<384x96xf32>
    %c0_20 = arith.constant 0 : index
    %c128_21 = arith.constant 128 : index
    %24 = vector.load %arg12[%c0_20, %c128_21] : memref<384x144xf32, #tpu.memory_space<vmem>>, vector<384x16xf32>
    %c0_22 = arith.constant 0 : index
    %c384_23 = arith.constant 384 : index
    %25 = vector.load %arg11[%c0_22, %c384_23] : memref<96x480xf32, #tpu.memory_space<vmem>>, vector<96x96xf32>
    %cst_24 = arith.constant dense<0.000000e+00> : vector<16x352xf32>
    %26 = tpu.matmul %5, %8, %cst_24 {dimension_numbers = #tpu.dot_dimension_numbers<[1], [0], [0], [1], [0, 0, 1, 1], [], []>} : vector<16x32xf32>, vector<32x352xf32>, vector<16x352xf32> -> vector<16x352xf32>
    %27 = vector.broadcast %9 : vector<1x352xf32> to vector<16x352xf32>
    %28 = arith.addf %26, %27 : vector<16x352xf32>
    %29 = vector.extract_strided_slice %28 {offsets = [0, 0], sizes = [16, 96], strides = [1, 1]} : vector<16x352xf32> to vector<16x96xf32>
    %30 = vector.extract_strided_slice %28 {offsets = [0, 128], sizes = [16, 96], strides = [1, 1]} : vector<16x352xf32> to vector<16x96xf32>
    %31 = vector.extract_strided_slice %28 {offsets = [0, 256], sizes = [16, 96], strides = [1, 1]} : vector<16x352xf32> to vector<16x96xf32>
    %32 = tpu.transpose %30, [1, 0] : vector<16x96xf32> -> vector<96x16xf32>
    %cst_25 = arith.constant dense<0.000000e+00> : vector<96x384xf32>
    %33 = tpu.matmul %32, %20, %cst_25 {dimension_numbers = #tpu.dot_dimension_numbers<[1], [0], [0], [1], [0, 0, 1, 1], [], []>} : vector<96x16xf32>, vector<16x384xf32>, vector<96x384xf32> -> vector<96x384xf32>
    %34 = arith.mulf %33, %22 : vector<96x384xf32>
    %cst_26 = arith.constant dense<0.000000e+00> : vector<16x384xf32>
    %35 = tpu.matmul %29, %34, %cst_26 {dimension_numbers = #tpu.dot_dimension_numbers<[1], [0], [0], [1], [0, 0, 1, 1], [], []>} : vector<16x96xf32>, vector<96x384xf32>, vector<16x384xf32> -> vector<16x384xf32>
    %cst_27 = arith.constant dense<0xFF800000> : vector<16xf32>
    %36 = vector.multi_reduction <maximumf>, %35, %cst_27 [1] : vector<16x384xf32> to vector<16xf32>
    %37 = vector.shape_cast %36 : vector<16xf32> to vector<16x1xf32>
    %38 = vector.broadcast %37 : vector<16x1xf32> to vector<16x384xf32>
    %39 = arith.subf %35, %38 : vector<16x384xf32>
    %40 = math.exp %39 : vector<16x384xf32>
    %41 = arith.mulf %40, %21 : vector<16x384xf32>
    %cst_28 = arith.constant dense<0.000000e+00> : vector<384x96xf32>
    %42 = tpu.matmul %24, %31, %cst_28 {dimension_numbers = #tpu.dot_dimension_numbers<[1], [0], [0], [1], [0, 0, 1, 1], [], []>} : vector<384x16xf32>, vector<16x96xf32>, vector<384x96xf32> -> vector<384x96xf32>
    %43 = arith.mulf %42, %23 : vector<384x96xf32>
    %cst_29 = arith.constant dense<0.000000e+00> : vector<16x96xf32>
    %44 = tpu.matmul %41, %43, %cst_29 {dimension_numbers = #tpu.dot_dimension_numbers<[1], [0], [0], [1], [0, 0, 1, 1], [], []>} : vector<16x384xf32>, vector<384x96xf32>, vector<16x96xf32> -> vector<16x96xf32>
    %cst_30 = arith.constant dense<0.000000e+00> : vector<16x96xf32>
    %45 = tpu.matmul %41, %23, %cst_30 {dimension_numbers = #tpu.dot_dimension_numbers<[1], [0], [0], [1], [0, 0, 1, 1], [], []>} : vector<16x384xf32>, vector<384x96xf32>, vector<16x96xf32> -> vector<16x96xf32>
    %cst_31 = arith.constant 1.000000e-30 : f32
    %46 = vector.broadcast %cst_31 : f32 to vector<16x96xf32>
    %47 = arith.maximumf %45, %46 : vector<16x96xf32>
    %48 = tpu.reciprocal %47 {approx = true} : vector<16x96xf32> -> vector<16x96xf32>
    %49 = arith.mulf %44, %48 : vector<16x96xf32>
    %cst_32 = arith.constant dense<0.000000e+00> : vector<16x96xf32>
    %50 = tpu.matmul %49, %10, %cst_32 {dimension_numbers = #tpu.dot_dimension_numbers<[1], [0], [0], [1], [0, 0, 1, 1], [], []>} : vector<16x96xf32>, vector<96x96xf32>, vector<16x96xf32> -> vector<16x96xf32>
    %51 = vector.broadcast %11 : vector<1x96xf32> to vector<16x96xf32>
    %52 = arith.addf %50, %51 : vector<16x96xf32>
    %53 = arith.addf %7, %52 : vector<16x96xf32>
    %cst_33 = arith.constant dense<0.000000e+00> : vector<16x96xf32>
    %54 = tpu.matmul %53, %25, %cst_33 {dimension_numbers = #tpu.dot_dimension_numbers<[1], [0], [0], [1], [0, 0, 1, 1], [], []>} : vector<16x96xf32>, vector<96x96xf32>, vector<16x96xf32> -> vector<16x96xf32>
    %55 = arith.mulf %53, %53 : vector<16x96xf32>
    %cst_34 = arith.constant dense<0.000000e+00> : vector<16x96xf32>
    %56 = tpu.matmul %55, %25, %cst_34 {dimension_numbers = #tpu.dot_dimension_numbers<[1], [0], [0], [1], [0, 0, 1, 1], [], []>} : vector<16x96xf32>, vector<96x96xf32>, vector<16x96xf32> -> vector<16x96xf32>
    %57 = arith.mulf %54, %54 : vector<16x96xf32>
    %58 = arith.subf %56, %57 : vector<16x96xf32>
    %59 = arith.subf %53, %54 : vector<16x96xf32>
    %cst_35 = arith.constant 9.99999974E-6 : f32
    %60 = vector.broadcast %cst_35 : f32 to vector<16x96xf32>
    %61 = arith.addf %58, %60 : vector<16x96xf32>
    %62 = math.rsqrt %61 : vector<16x96xf32>
    %63 = arith.mulf %59, %62 : vector<16x96xf32>
    %64 = vector.broadcast %16 : vector<1x96xf32> to vector<16x96xf32>
    %65 = arith.mulf %63, %64 : vector<16x96xf32>
    %66 = vector.broadcast %17 : vector<1x96xf32> to vector<16x96xf32>
    %67 = arith.addf %65, %66 : vector<16x96xf32>
    %cst_36 = arith.constant dense<0.000000e+00> : vector<16x192xf32>
    %68 = tpu.matmul %67, %12, %cst_36 {dimension_numbers = #tpu.dot_dimension_numbers<[1], [0], [0], [1], [0, 0, 1, 1], [], []>} : vector<16x96xf32>, vector<96x192xf32>, vector<16x192xf32> -> vector<16x192xf32>
    %69 = vector.broadcast %13 : vector<1x192xf32> to vector<16x192xf32>
    %70 = arith.addf %68, %69 : vector<16x192xf32>
    %cst_37 = arith.constant 0.000000e+00 : f32
    %71 = vector.broadcast %cst_37 : f32 to vector<16x192xf32>
    %72 = arith.maximumf %70, %71 : vector<16x192xf32>
    %cst_38 = arith.constant dense<0.000000e+00> : vector<16x96xf32>
    %73 = tpu.matmul %72, %14, %cst_38 {dimension_numbers = #tpu.dot_dimension_numbers<[1], [0], [0], [1], [0, 0, 1, 1], [], []>} : vector<16x192xf32>, vector<192x96xf32>, vector<16x96xf32> -> vector<16x96xf32>
    %74 = vector.broadcast %15 : vector<1x96xf32> to vector<16x96xf32>
    %75 = arith.addf %73, %74 : vector<16x96xf32>
    %76 = arith.addf %67, %75 : vector<16x96xf32>
    %cst_39 = arith.constant dense<0.000000e+00> : vector<16x96xf32>
    %77 = tpu.matmul %76, %25, %cst_39 {dimension_numbers = #tpu.dot_dimension_numbers<[1], [0], [0], [1], [0, 0, 1, 1], [], []>} : vector<16x96xf32>, vector<96x96xf32>, vector<16x96xf32> -> vector<16x96xf32>
    %78 = arith.mulf %76, %76 : vector<16x96xf32>
    %cst_40 = arith.constant dense<0.000000e+00> : vector<16x96xf32>
    %79 = tpu.matmul %78, %25, %cst_40 {dimension_numbers = #tpu.dot_dimension_numbers<[1], [0], [0], [1], [0, 0, 1, 1], [], []>} : vector<16x96xf32>, vector<96x96xf32>, vector<16x96xf32> -> vector<16x96xf32>
    %80 = arith.mulf %77, %77 : vector<16x96xf32>
    %81 = arith.subf %79, %80 : vector<16x96xf32>
    %82 = arith.subf %76, %77 : vector<16x96xf32>
    %cst_41 = arith.constant 9.99999974E-6 : f32
    %83 = vector.broadcast %cst_41 : f32 to vector<16x96xf32>
    %84 = arith.addf %81, %83 : vector<16x96xf32>
    %85 = math.rsqrt %84 : vector<16x96xf32>
    %86 = arith.mulf %82, %85 : vector<16x96xf32>
    %87 = vector.broadcast %18 : vector<1x96xf32> to vector<16x96xf32>
    %88 = arith.mulf %86, %87 : vector<16x96xf32>
    %89 = vector.broadcast %19 : vector<1x96xf32> to vector<16x96xf32>
    %90 = arith.addf %88, %89 : vector<16x96xf32>
    %c0_42 = arith.constant 0 : index
    %c0_43 = arith.constant 0 : index
    %91 = vector.load %arg8[%c0_42, %c0_43] : memref<96x112xf32, #tpu.memory_space<vmem>>, vector<96x32xf32>
    %cst_44 = arith.constant dense<0.000000e+00> : vector<16x32xf32>
    %92 = tpu.matmul %90, %91, %cst_44 {dimension_numbers = #tpu.dot_dimension_numbers<[1], [0], [0], [1], [0, 0, 1, 1], [], []>} : vector<16x96xf32>, vector<96x32xf32>, vector<16x32xf32> -> vector<16x32xf32>
    %c1 = arith.constant 1 : index
    %c0_45 = arith.constant 0 : index
    %93 = vector.load %arg9[%c1, %c0_45] : memref<4x32xf32, #tpu.memory_space<vmem>>, vector<1x32xf32>
    %94 = vector.broadcast %93 : vector<1x32xf32> to vector<16x32xf32>
    %95 = arith.addf %92, %94 : vector<16x32xf32>
    %c0_46 = arith.constant 0 : index
    %c0_47 = arith.constant 0 : index
    %c0_48 = arith.constant 0 : index
    %96 = vector.load %arg4[%c0_46, %c0_47, %c0_48] : memref<3x32x320xf32, #tpu.memory_space<vmem>>, vector<1x32x320xf32>
    %97 = vector.shape_cast %96 : vector<1x32x320xf32> to vector<32x320xf32>
    %c0_49 = arith.constant 0 : index
    %c0_50 = arith.constant 0 : index
    %c0_51 = arith.constant 0 : index
    %98 = vector.load %arg7[%c0_49, %c0_50, %c0_51] : memref<3x8x96xf32, #tpu.memory_space<vmem>>, vector<1x8x96xf32>
    %99 = vector.shape_cast %98 : vector<1x8x96xf32> to vector<8x96xf32>
    %100 = vector.extract_strided_slice %97 {offsets = [0, 0], sizes = [32, 96], strides = [1, 1]} : vector<32x320xf32> to vector<32x96xf32>
    %101 = vector.extract_strided_slice %99 {offsets = [0, 0], sizes = [1, 96], strides = [1, 1]} : vector<8x96xf32> to vector<1x96xf32>
    %102 = vector.extract_strided_slice %97 {offsets = [0, 128], sizes = [32, 32], strides = [1, 1]} : vector<32x320xf32> to vector<32x32xf32>
    %103 = vector.extract_strided_slice %99 {offsets = [1, 0], sizes = [1, 32], strides = [1, 1]} : vector<8x96xf32> to vector<1x32xf32>
    %104 = vector.extract_strided_slice %97 {offsets = [0, 256], sizes = [32, 64], strides = [1, 1]} : vector<32x320xf32> to vector<32x64xf32>
    %105 = vector.extract_strided_slice %99 {offsets = [6, 0], sizes = [1, 64], strides = [1, 1]} : vector<8x96xf32> to vector<1x64xf32>
    %c0_52 = arith.constant 0 : index
    %c0_53 = arith.constant 0 : index
    %c0_54 = arith.constant 0 : index
    %106 = vector.load %arg5[%c0_52, %c0_53, %c0_54] : memref<3x64x32xf32, #tpu.memory_space<vmem>>, vector<1x64x32xf32>
    %107 = vector.shape_cast %106 : vector<1x64x32xf32> to vector<64x32xf32>
    %108 = vector.extract_strided_slice %99 {offsets = [7, 0], sizes = [1, 32], strides = [1, 1]} : vector<8x96xf32> to vector<1x32xf32>
    %109 = vector.extract_strided_slice %99 {offsets = [2, 0], sizes = [1, 32], strides = [1, 1]} : vector<8x96xf32> to vector<1x32xf32>
    %110 = vector.extract_strided_slice %99 {offsets = [3, 0], sizes = [1, 32], strides = [1, 1]} : vector<8x96xf32> to vector<1x32xf32>
    %111 = vector.extract_strided_slice %99 {offsets = [4, 0], sizes = [1, 32], strides = [1, 1]} : vector<8x96xf32> to vector<1x32xf32>
    %112 = vector.extract_strided_slice %99 {offsets = [5, 0], sizes = [1, 32], strides = [1, 1]} : vector<8x96xf32> to vector<1x32xf32>
    %c0_55 = arith.constant 0 : index
    %c0_56 = arith.constant 0 : index
    %113 = vector.load %arg10[%c0_55, %c0_56] : memref<16x784xf32, #tpu.memory_space<vmem>>, vector<16x128xf32>
    %c0_57 = arith.constant 0 : index
    %c384_58 = arith.constant 384 : index
    %114 = vector.load %arg10[%c0_57, %c384_58] : memref<16x784xf32, #tpu.memory_space<vmem>>, vector<16x128xf32>
    %c0_59 = arith.constant 0 : index
    %c0_60 = arith.constant 0 : index
    %115 = vector.load %arg11[%c0_59, %c0_60] : memref<96x480xf32, #tpu.memory_space<vmem>>, vector<32x128xf32>
    %c0_61 = arith.constant 0 : index
    %c0_62 = arith.constant 0 : index
    %116 = vector.load %arg12[%c0_61, %c0_62] : memref<384x144xf32, #tpu.memory_space<vmem>>, vector<128x32xf32>
    %c0_63 = arith.constant 0 : index
    %c128_64 = arith.constant 128 : index
    %117 = vector.load %arg12[%c0_63, %c128_64] : memref<384x144xf32, #tpu.memory_space<vmem>>, vector<128x16xf32>
    %cst_65 = arith.constant dense<0.000000e+00> : vector<16x96xf32>
    %118 = tpu.matmul %95, %100, %cst_65 {dimension_numbers = #tpu.dot_dimension_numbers<[1], [0], [0], [1], [0, 0, 1, 1], [], []>} : vector<16x32xf32>, vector<32x96xf32>, vector<16x96xf32> -> vector<16x96xf32>
    %119 = vector.broadcast %101 : vector<1x96xf32> to vector<16x96xf32>
    %120 = arith.addf %118, %119 : vector<16x96xf32>
    %121 = vector.extract_strided_slice %120 {offsets = [0, 0], sizes = [16, 32], strides = [1, 1]} : vector<16x96xf32> to vector<16x32xf32>
    %122 = vector.extract_strided_slice %120 {offsets = [0, 32], sizes = [16, 32], strides = [1, 1]} : vector<16x96xf32> to vector<16x32xf32>
    %123 = vector.extract_strided_slice %120 {offsets = [0, 64], sizes = [16, 32], strides = [1, 1]} : vector<16x96xf32> to vector<16x32xf32>
    %124 = tpu.transpose %122, [1, 0] : vector<16x32xf32> -> vector<32x16xf32>
    %cst_66 = arith.constant dense<0.000000e+00> : vector<32x128xf32>
    %125 = tpu.matmul %124, %113, %cst_66 {dimension_numbers = #tpu.dot_dimension_numbers<[1], [0], [0], [1], [0, 0, 1, 1], [], []>} : vector<32x16xf32>, vector<16x128xf32>, vector<32x128xf32> -> vector<32x128xf32>
    %126 = arith.mulf %125, %115 : vector<32x128xf32>
    %cst_67 = arith.constant dense<0.000000e+00> : vector<16x128xf32>
    %127 = tpu.matmul %121, %126, %cst_67 {dimension_numbers = #tpu.dot_dimension_numbers<[1], [0], [0], [1], [0, 0, 1, 1], [], []>} : vector<16x32xf32>, vector<32x128xf32>, vector<16x128xf32> -> vector<16x128xf32>
    %cst_68 = arith.constant dense<0xFF800000> : vector<16xf32>
    %128 = vector.multi_reduction <maximumf>, %127, %cst_68 [1] : vector<16x128xf32> to vector<16xf32>
    %129 = vector.shape_cast %128 : vector<16xf32> to vector<16x1xf32>
    %130 = vector.broadcast %129 : vector<16x1xf32> to vector<16x128xf32>
    %131 = arith.subf %127, %130 : vector<16x128xf32>
    %132 = math.exp %131 : vector<16x128xf32>
    %133 = arith.mulf %132, %114 : vector<16x128xf32>
    %cst_69 = arith.constant dense<0.000000e+00> : vector<128x32xf32>
    %134 = tpu.matmul %117, %123, %cst_69 {dimension_numbers = #tpu.dot_dimension_numbers<[1], [0], [0], [1], [0, 0, 1, 1], [], []>} : vector<128x16xf32>, vector<16x32xf32>, vector<128x32xf32> -> vector<128x32xf32>
    %135 = arith.mulf %134, %116 : vector<128x32xf32>
    %cst_70 = arith.constant dense<0.000000e+00> : vector<16x32xf32>
    %136 = tpu.matmul %133, %135, %cst_70 {dimension_numbers = #tpu.dot_dimension_numbers<[1], [0], [0], [1], [0, 0, 1, 1], [], []>} : vector<16x128xf32>, vector<128x32xf32>, vector<16x32xf32> -> vector<16x32xf32>
    %cst_71 = arith.constant dense<0.000000e+00> : vector<16x32xf32>
    %137 = tpu.matmul %133, %116, %cst_71 {dimension_numbers = #tpu.dot_dimension_numbers<[1], [0], [0], [1], [0, 0, 1, 1], [], []>} : vector<16x128xf32>, vector<128x32xf32>, vector<16x32xf32> -> vector<16x32xf32>
    %cst_72 = arith.constant 1.000000e-30 : f32
    %138 = vector.broadcast %cst_72 : f32 to vector<16x32xf32>
    %139 = arith.maximumf %137, %138 : vector<16x32xf32>
    %140 = tpu.reciprocal %139 {approx = true} : vector<16x32xf32> -> vector<16x32xf32>
    %141 = arith.mulf %136, %140 : vector<16x32xf32>
    %cst_73 = arith.constant dense<0.000000e+00> : vector<16x32xf32>
    %142 = tpu.matmul %141, %102, %cst_73 {dimension_numbers = #tpu.dot_dimension_numbers<[1], [0], [0], [1], [0, 0, 1, 1], [], []>} : vector<16x32xf32>, vector<32x32xf32>, vector<16x32xf32> -> vector<16x32xf32>
    %143 = vector.broadcast %103 : vector<1x32xf32> to vector<16x32xf32>
    %144 = arith.addf %142, %143 : vector<16x32xf32>
    %145 = arith.addf %95, %144 : vector<16x32xf32>
    %cst_74 = arith.constant dense<0.000000e+00> : vector<16xf32>
    %146 = vector.multi_reduction <add>, %145, %cst_74 [1] : vector<16x32xf32> to vector<16xf32>
    %147 = vector.shape_cast %146 : vector<16xf32> to vector<16x1xf32>
    %cst_75 = arith.constant 3.200000e+01 : f32
    %148 = vector.broadcast %cst_75 : f32 to vector<16x1xf32>
    %149 = arith.divf %147, %148 : vector<16x1xf32>
    %150 = arith.mulf %145, %145 : vector<16x32xf32>
    %cst_76 = arith.constant dense<0.000000e+00> : vector<16xf32>
    %151 = vector.multi_reduction <add>, %150, %cst_76 [1] : vector<16x32xf32> to vector<16xf32>
    %152 = vector.shape_cast %151 : vector<16xf32> to vector<16x1xf32>
    %cst_77 = arith.constant 3.200000e+01 : f32
    %153 = vector.broadcast %cst_77 : f32 to vector<16x1xf32>
    %154 = arith.divf %152, %153 : vector<16x1xf32>
    %155 = arith.mulf %149, %149 : vector<16x1xf32>
    %156 = arith.subf %154, %155 : vector<16x1xf32>
    %157 = vector.broadcast %149 : vector<16x1xf32> to vector<16x32xf32>
    %158 = arith.subf %145, %157 : vector<16x32xf32>
    %cst_78 = arith.constant 9.99999974E-6 : f32
    %159 = vector.broadcast %cst_78 : f32 to vector<16x1xf32>
    %160 = arith.addf %156, %159 : vector<16x1xf32>
    %161 = math.rsqrt %160 : vector<16x1xf32>
    %162 = vector.broadcast %161 : vector<16x1xf32> to vector<16x32xf32>
    %163 = arith.mulf %158, %162 : vector<16x32xf32>
    %164 = vector.broadcast %109 : vector<1x32xf32> to vector<16x32xf32>
    %165 = arith.mulf %163, %164 : vector<16x32xf32>
    %166 = vector.broadcast %110 : vector<1x32xf32> to vector<16x32xf32>
    %167 = arith.addf %165, %166 : vector<16x32xf32>
    %cst_79 = arith.constant dense<0.000000e+00> : vector<16x64xf32>
    %168 = tpu.matmul %167, %104, %cst_79 {dimension_numbers = #tpu.dot_dimension_numbers<[1], [0], [0], [1], [0, 0, 1, 1], [], []>} : vector<16x32xf32>, vector<32x64xf32>, vector<16x64xf32> -> vector<16x64xf32>
    %169 = vector.broadcast %105 : vector<1x64xf32> to vector<16x64xf32>
    %170 = arith.addf %168, %169 : vector<16x64xf32>
    %cst_80 = arith.constant 0.000000e+00 : f32
    %171 = vector.broadcast %cst_80 : f32 to vector<16x64xf32>
    %172 = arith.maximumf %170, %171 : vector<16x64xf32>
    %cst_81 = arith.constant dense<0.000000e+00> : vector<16x32xf32>
    %173 = tpu.matmul %172, %107, %cst_81 {dimension_numbers = #tpu.dot_dimension_numbers<[1], [0], [0], [1], [0, 0, 1, 1], [], []>} : vector<16x64xf32>, vector<64x32xf32>, vector<16x32xf32> -> vector<16x32xf32>
    %174 = vector.broadcast %108 : vector<1x32xf32> to vector<16x32xf32>
    %175 = arith.addf %173, %174 : vector<16x32xf32>
    %176 = arith.addf %167, %175 : vector<16x32xf32>
    %cst_82 = arith.constant dense<0.000000e+00> : vector<16xf32>
    %177 = vector.multi_reduction <add>, %176, %cst_82 [1] : vector<16x32xf32> to vector<16xf32>
    %178 = vector.shape_cast %177 : vector<16xf32> to vector<16x1xf32>
    %cst_83 = arith.constant 3.200000e+01 : f32
    %179 = vector.broadcast %cst_83 : f32 to vector<16x1xf32>
    %180 = arith.divf %178, %179 : vector<16x1xf32>
    %181 = arith.mulf %176, %176 : vector<16x32xf32>
    %cst_84 = arith.constant dense<0.000000e+00> : vector<16xf32>
    %182 = vector.multi_reduction <add>, %181, %cst_84 [1] : vector<16x32xf32> to vector<16xf32>
    %183 = vector.shape_cast %182 : vector<16xf32> to vector<16x1xf32>
    %cst_85 = arith.constant 3.200000e+01 : f32
    %184 = vector.broadcast %cst_85 : f32 to vector<16x1xf32>
    %185 = arith.divf %183, %184 : vector<16x1xf32>
    %186 = arith.mulf %180, %180 : vector<16x1xf32>
    %187 = arith.subf %185, %186 : vector<16x1xf32>
    %188 = vector.broadcast %180 : vector<16x1xf32> to vector<16x32xf32>
    %189 = arith.subf %176, %188 : vector<16x32xf32>
    %cst_86 = arith.constant 9.99999974E-6 : f32
    %190 = vector.broadcast %cst_86 : f32 to vector<16x1xf32>
    %191 = arith.addf %187, %190 : vector<16x1xf32>
    %192 = math.rsqrt %191 : vector<16x1xf32>
    %193 = vector.broadcast %192 : vector<16x1xf32> to vector<16x32xf32>
    %194 = arith.mulf %189, %193 : vector<16x32xf32>
    %195 = vector.broadcast %111 : vector<1x32xf32> to vector<16x32xf32>
    %196 = arith.mulf %194, %195 : vector<16x32xf32>
    %197 = vector.broadcast %112 : vector<1x32xf32> to vector<16x32xf32>
    %198 = arith.addf %196, %197 : vector<16x32xf32>
    %c1_87 = arith.constant 1 : index
    %c0_88 = arith.constant 0 : index
    %c0_89 = arith.constant 0 : index
    %199 = vector.load %arg4[%c1_87, %c0_88, %c0_89] : memref<3x32x320xf32, #tpu.memory_space<vmem>>, vector<1x32x320xf32>
    %200 = vector.shape_cast %199 : vector<1x32x320xf32> to vector<32x320xf32>
    %c1_90 = arith.constant 1 : index
    %c0_91 = arith.constant 0 : index
    %c0_92 = arith.constant 0 : index
    %201 = vector.load %arg7[%c1_90, %c0_91, %c0_92] : memref<3x8x96xf32, #tpu.memory_space<vmem>>, vector<1x8x96xf32>
    %202 = vector.shape_cast %201 : vector<1x8x96xf32> to vector<8x96xf32>
    %203 = vector.extract_strided_slice %200 {offsets = [0, 0], sizes = [32, 96], strides = [1, 1]} : vector<32x320xf32> to vector<32x96xf32>
    %204 = vector.extract_strided_slice %202 {offsets = [0, 0], sizes = [1, 96], strides = [1, 1]} : vector<8x96xf32> to vector<1x96xf32>
    %205 = vector.extract_strided_slice %200 {offsets = [0, 128], sizes = [32, 32], strides = [1, 1]} : vector<32x320xf32> to vector<32x32xf32>
    %206 = vector.extract_strided_slice %202 {offsets = [1, 0], sizes = [1, 32], strides = [1, 1]} : vector<8x96xf32> to vector<1x32xf32>
    %207 = vector.extract_strided_slice %200 {offsets = [0, 256], sizes = [32, 64], strides = [1, 1]} : vector<32x320xf32> to vector<32x64xf32>
    %208 = vector.extract_strided_slice %202 {offsets = [6, 0], sizes = [1, 64], strides = [1, 1]} : vector<8x96xf32> to vector<1x64xf32>
    %c1_93 = arith.constant 1 : index
    %c0_94 = arith.constant 0 : index
    %c0_95 = arith.constant 0 : index
    %209 = vector.load %arg5[%c1_93, %c0_94, %c0_95] : memref<3x64x32xf32, #tpu.memory_space<vmem>>, vector<1x64x32xf32>
    %210 = vector.shape_cast %209 : vector<1x64x32xf32> to vector<64x32xf32>
    %211 = vector.extract_strided_slice %202 {offsets = [7, 0], sizes = [1, 32], strides = [1, 1]} : vector<8x96xf32> to vector<1x32xf32>
    %212 = vector.extract_strided_slice %202 {offsets = [2, 0], sizes = [1, 32], strides = [1, 1]} : vector<8x96xf32> to vector<1x32xf32>
    %213 = vector.extract_strided_slice %202 {offsets = [3, 0], sizes = [1, 32], strides = [1, 1]} : vector<8x96xf32> to vector<1x32xf32>
    %214 = vector.extract_strided_slice %202 {offsets = [4, 0], sizes = [1, 32], strides = [1, 1]} : vector<8x96xf32> to vector<1x32xf32>
    %215 = vector.extract_strided_slice %202 {offsets = [5, 0], sizes = [1, 32], strides = [1, 1]} : vector<8x96xf32> to vector<1x32xf32>
    %c0_96 = arith.constant 0 : index
    %c0_97 = arith.constant 0 : index
    %216 = vector.load %arg10[%c0_96, %c0_97] : memref<16x784xf32, #tpu.memory_space<vmem>>, vector<16x128xf32>
    %c0_98 = arith.constant 0 : index
    %c384_99 = arith.constant 384 : index
    %217 = vector.load %arg10[%c0_98, %c384_99] : memref<16x784xf32, #tpu.memory_space<vmem>>, vector<16x128xf32>
    %c0_100 = arith.constant 0 : index
    %c0_101 = arith.constant 0 : index
    %218 = vector.load %arg11[%c0_100, %c0_101] : memref<96x480xf32, #tpu.memory_space<vmem>>, vector<32x128xf32>
    %c0_102 = arith.constant 0 : index
    %c0_103 = arith.constant 0 : index
    %219 = vector.load %arg12[%c0_102, %c0_103] : memref<384x144xf32, #tpu.memory_space<vmem>>, vector<128x32xf32>
    %c0_104 = arith.constant 0 : index
    %c128_105 = arith.constant 128 : index
    %220 = vector.load %arg12[%c0_104, %c128_105] : memref<384x144xf32, #tpu.memory_space<vmem>>, vector<128x16xf32>
    %cst_106 = arith.constant dense<0.000000e+00> : vector<16x96xf32>
    %221 = tpu.matmul %198, %203, %cst_106 {dimension_numbers = #tpu.dot_dimension_numbers<[1], [0], [0], [1], [0, 0, 1, 1], [], []>} : vector<16x32xf32>, vector<32x96xf32>, vector<16x96xf32> -> vector<16x96xf32>
    %222 = vector.broadcast %204 : vector<1x96xf32> to vector<16x96xf32>
    %223 = arith.addf %221, %222 : vector<16x96xf32>
    %224 = vector.extract_strided_slice %223 {offsets = [0, 0], sizes = [16, 32], strides = [1, 1]} : vector<16x96xf32> to vector<16x32xf32>
    %225 = vector.extract_strided_slice %223 {offsets = [0, 32], sizes = [16, 32], strides = [1, 1]} : vector<16x96xf32> to vector<16x32xf32>
    %226 = vector.extract_strided_slice %223 {offsets = [0, 64], sizes = [16, 32], strides = [1, 1]} : vector<16x96xf32> to vector<16x32xf32>
    %227 = tpu.transpose %225, [1, 0] : vector<16x32xf32> -> vector<32x16xf32>
    %cst_107 = arith.constant dense<0.000000e+00> : vector<32x128xf32>
    %228 = tpu.matmul %227, %216, %cst_107 {dimension_numbers = #tpu.dot_dimension_numbers<[1], [0], [0], [1], [0, 0, 1, 1], [], []>} : vector<32x16xf32>, vector<16x128xf32>, vector<32x128xf32> -> vector<32x128xf32>
    %229 = arith.mulf %228, %218 : vector<32x128xf32>
    %cst_108 = arith.constant dense<0.000000e+00> : vector<16x128xf32>
    %230 = tpu.matmul %224, %229, %cst_108 {dimension_numbers = #tpu.dot_dimension_numbers<[1], [0], [0], [1], [0, 0, 1, 1], [], []>} : vector<16x32xf32>, vector<32x128xf32>, vector<16x128xf32> -> vector<16x128xf32>
    %cst_109 = arith.constant dense<0xFF800000> : vector<16xf32>
    %231 = vector.multi_reduction <maximumf>, %230, %cst_109 [1] : vector<16x128xf32> to vector<16xf32>
    %232 = vector.shape_cast %231 : vector<16xf32> to vector<16x1xf32>
    %233 = vector.broadcast %232 : vector<16x1xf32> to vector<16x128xf32>
    %234 = arith.subf %230, %233 : vector<16x128xf32>
    %235 = math.exp %234 : vector<16x128xf32>
    %236 = arith.mulf %235, %217 : vector<16x128xf32>
    %cst_110 = arith.constant dense<0.000000e+00> : vector<128x32xf32>
    %237 = tpu.matmul %220, %226, %cst_110 {dimension_numbers = #tpu.dot_dimension_numbers<[1], [0], [0], [1], [0, 0, 1, 1], [], []>} : vector<128x16xf32>, vector<16x32xf32>, vector<128x32xf32> -> vector<128x32xf32>
    %238 = arith.mulf %237, %219 : vector<128x32xf32>
    %cst_111 = arith.constant dense<0.000000e+00> : vector<16x32xf32>
    %239 = tpu.matmul %236, %238, %cst_111 {dimension_numbers = #tpu.dot_dimension_numbers<[1], [0], [0], [1], [0, 0, 1, 1], [], []>} : vector<16x128xf32>, vector<128x32xf32>, vector<16x32xf32> -> vector<16x32xf32>
    %cst_112 = arith.constant dense<0.000000e+00> : vector<16x32xf32>
    %240 = tpu.matmul %236, %219, %cst_112 {dimension_numbers = #tpu.dot_dimension_numbers<[1], [0], [0], [1], [0, 0, 1, 1], [], []>} : vector<16x128xf32>, vector<128x32xf32>, vector<16x32xf32> -> vector<16x32xf32>
    %cst_113 = arith.constant 1.000000e-30 : f32
    %241 = vector.broadcast %cst_113 : f32 to vector<16x32xf32>
    %242 = arith.maximumf %240, %241 : vector<16x32xf32>
    %243 = tpu.reciprocal %242 {approx = true} : vector<16x32xf32> -> vector<16x32xf32>
    %244 = arith.mulf %239, %243 : vector<16x32xf32>
    %cst_114 = arith.constant dense<0.000000e+00> : vector<16x32xf32>
    %245 = tpu.matmul %244, %205, %cst_114 {dimension_numbers = #tpu.dot_dimension_numbers<[1], [0], [0], [1], [0, 0, 1, 1], [], []>} : vector<16x32xf32>, vector<32x32xf32>, vector<16x32xf32> -> vector<16x32xf32>
    %246 = vector.broadcast %206 : vector<1x32xf32> to vector<16x32xf32>
    %247 = arith.addf %245, %246 : vector<16x32xf32>
    %248 = arith.addf %198, %247 : vector<16x32xf32>
    %cst_115 = arith.constant dense<0.000000e+00> : vector<16xf32>
    %249 = vector.multi_reduction <add>, %248, %cst_115 [1] : vector<16x32xf32> to vector<16xf32>
    %250 = vector.shape_cast %249 : vector<16xf32> to vector<16x1xf32>
    %cst_116 = arith.constant 3.200000e+01 : f32
    %251 = vector.broadcast %cst_116 : f32 to vector<16x1xf32>
    %252 = arith.divf %250, %251 : vector<16x1xf32>
    %253 = arith.mulf %248, %248 : vector<16x32xf32>
    %cst_117 = arith.constant dense<0.000000e+00> : vector<16xf32>
    %254 = vector.multi_reduction <add>, %253, %cst_117 [1] : vector<16x32xf32> to vector<16xf32>
    %255 = vector.shape_cast %254 : vector<16xf32> to vector<16x1xf32>
    %cst_118 = arith.constant 3.200000e+01 : f32
    %256 = vector.broadcast %cst_118 : f32 to vector<16x1xf32>
    %257 = arith.divf %255, %256 : vector<16x1xf32>
    %258 = arith.mulf %252, %252 : vector<16x1xf32>
    %259 = arith.subf %257, %258 : vector<16x1xf32>
    %260 = vector.broadcast %252 : vector<16x1xf32> to vector<16x32xf32>
    %261 = arith.subf %248, %260 : vector<16x32xf32>
    %cst_119 = arith.constant 9.99999974E-6 : f32
    %262 = vector.broadcast %cst_119 : f32 to vector<16x1xf32>
    %263 = arith.addf %259, %262 : vector<16x1xf32>
    %264 = math.rsqrt %263 : vector<16x1xf32>
    %265 = vector.broadcast %264 : vector<16x1xf32> to vector<16x32xf32>
    %266 = arith.mulf %261, %265 : vector<16x32xf32>
    %267 = vector.broadcast %212 : vector<1x32xf32> to vector<16x32xf32>
    %268 = arith.mulf %266, %267 : vector<16x32xf32>
    %269 = vector.broadcast %213 : vector<1x32xf32> to vector<16x32xf32>
    %270 = arith.addf %268, %269 : vector<16x32xf32>
    %cst_120 = arith.constant dense<0.000000e+00> : vector<16x64xf32>
    %271 = tpu.matmul %270, %207, %cst_120 {dimension_numbers = #tpu.dot_dimension_numbers<[1], [0], [0], [1], [0, 0, 1, 1], [], []>} : vector<16x32xf32>, vector<32x64xf32>, vector<16x64xf32> -> vector<16x64xf32>
    %272 = vector.broadcast %208 : vector<1x64xf32> to vector<16x64xf32>
    %273 = arith.addf %271, %272 : vector<16x64xf32>
    %cst_121 = arith.constant 0.000000e+00 : f32
    %274 = vector.broadcast %cst_121 : f32 to vector<16x64xf32>
    %275 = arith.maximumf %273, %274 : vector<16x64xf32>
    %cst_122 = arith.constant dense<0.000000e+00> : vector<16x32xf32>
    %276 = tpu.matmul %275, %210, %cst_122 {dimension_numbers = #tpu.dot_dimension_numbers<[1], [0], [0], [1], [0, 0, 1, 1], [], []>} : vector<16x64xf32>, vector<64x32xf32>, vector<16x32xf32> -> vector<16x32xf32>
    %277 = vector.broadcast %211 : vector<1x32xf32> to vector<16x32xf32>
    %278 = arith.addf %276, %277 : vector<16x32xf32>
    %279 = arith.addf %270, %278 : vector<16x32xf32>
    %cst_123 = arith.constant dense<0.000000e+00> : vector<16xf32>
    %280 = vector.multi_reduction <add>, %279, %cst_123 [1] : vector<16x32xf32> to vector<16xf32>
    %281 = vector.shape_cast %280 : vector<16xf32> to vector<16x1xf32>
    %cst_124 = arith.constant 3.200000e+01 : f32
    %282 = vector.broadcast %cst_124 : f32 to vector<16x1xf32>
    %283 = arith.divf %281, %282 : vector<16x1xf32>
    %284 = arith.mulf %279, %279 : vector<16x32xf32>
    %cst_125 = arith.constant dense<0.000000e+00> : vector<16xf32>
    %285 = vector.multi_reduction <add>, %284, %cst_125 [1] : vector<16x32xf32> to vector<16xf32>
    %286 = vector.shape_cast %285 : vector<16xf32> to vector<16x1xf32>
    %cst_126 = arith.constant 3.200000e+01 : f32
    %287 = vector.broadcast %cst_126 : f32 to vector<16x1xf32>
    %288 = arith.divf %286, %287 : vector<16x1xf32>
    %289 = arith.mulf %283, %283 : vector<16x1xf32>
    %290 = arith.subf %288, %289 : vector<16x1xf32>
    %291 = vector.broadcast %283 : vector<16x1xf32> to vector<16x32xf32>
    %292 = arith.subf %279, %291 : vector<16x32xf32>
    %cst_127 = arith.constant 9.99999974E-6 : f32
    %293 = vector.broadcast %cst_127 : f32 to vector<16x1xf32>
    %294 = arith.addf %290, %293 : vector<16x1xf32>
    %295 = math.rsqrt %294 : vector<16x1xf32>
    %296 = vector.broadcast %295 : vector<16x1xf32> to vector<16x32xf32>
    %297 = arith.mulf %292, %296 : vector<16x32xf32>
    %298 = vector.broadcast %214 : vector<1x32xf32> to vector<16x32xf32>
    %299 = arith.mulf %297, %298 : vector<16x32xf32>
    %300 = vector.broadcast %215 : vector<1x32xf32> to vector<16x32xf32>
    %301 = arith.addf %299, %300 : vector<16x32xf32>
    %c2 = arith.constant 2 : index
    %c0_128 = arith.constant 0 : index
    %c0_129 = arith.constant 0 : index
    %302 = vector.load %arg4[%c2, %c0_128, %c0_129] : memref<3x32x320xf32, #tpu.memory_space<vmem>>, vector<1x32x320xf32>
    %303 = vector.shape_cast %302 : vector<1x32x320xf32> to vector<32x320xf32>
    %c2_130 = arith.constant 2 : index
    %c0_131 = arith.constant 0 : index
    %c0_132 = arith.constant 0 : index
    %304 = vector.load %arg7[%c2_130, %c0_131, %c0_132] : memref<3x8x96xf32, #tpu.memory_space<vmem>>, vector<1x8x96xf32>
    %305 = vector.shape_cast %304 : vector<1x8x96xf32> to vector<8x96xf32>
    %306 = vector.extract_strided_slice %303 {offsets = [0, 0], sizes = [32, 96], strides = [1, 1]} : vector<32x320xf32> to vector<32x96xf32>
    %307 = vector.extract_strided_slice %305 {offsets = [0, 0], sizes = [1, 96], strides = [1, 1]} : vector<8x96xf32> to vector<1x96xf32>
    %308 = vector.extract_strided_slice %303 {offsets = [0, 128], sizes = [32, 32], strides = [1, 1]} : vector<32x320xf32> to vector<32x32xf32>
    %309 = vector.extract_strided_slice %305 {offsets = [1, 0], sizes = [1, 32], strides = [1, 1]} : vector<8x96xf32> to vector<1x32xf32>
    %310 = vector.extract_strided_slice %303 {offsets = [0, 256], sizes = [32, 64], strides = [1, 1]} : vector<32x320xf32> to vector<32x64xf32>
    %311 = vector.extract_strided_slice %305 {offsets = [6, 0], sizes = [1, 64], strides = [1, 1]} : vector<8x96xf32> to vector<1x64xf32>
    %c2_133 = arith.constant 2 : index
    %c0_134 = arith.constant 0 : index
    %c0_135 = arith.constant 0 : index
    %312 = vector.load %arg5[%c2_133, %c0_134, %c0_135] : memref<3x64x32xf32, #tpu.memory_space<vmem>>, vector<1x64x32xf32>
    %313 = vector.shape_cast %312 : vector<1x64x32xf32> to vector<64x32xf32>
    %314 = vector.extract_strided_slice %305 {offsets = [7, 0], sizes = [1, 32], strides = [1, 1]} : vector<8x96xf32> to vector<1x32xf32>
    %315 = vector.extract_strided_slice %305 {offsets = [2, 0], sizes = [1, 32], strides = [1, 1]} : vector<8x96xf32> to vector<1x32xf32>
    %316 = vector.extract_strided_slice %305 {offsets = [3, 0], sizes = [1, 32], strides = [1, 1]} : vector<8x96xf32> to vector<1x32xf32>
    %317 = vector.extract_strided_slice %305 {offsets = [4, 0], sizes = [1, 32], strides = [1, 1]} : vector<8x96xf32> to vector<1x32xf32>
    %318 = vector.extract_strided_slice %305 {offsets = [5, 0], sizes = [1, 32], strides = [1, 1]} : vector<8x96xf32> to vector<1x32xf32>
    %c0_136 = arith.constant 0 : index
    %c0_137 = arith.constant 0 : index
    %319 = vector.load %arg10[%c0_136, %c0_137] : memref<16x784xf32, #tpu.memory_space<vmem>>, vector<16x128xf32>
    %c0_138 = arith.constant 0 : index
    %c384_139 = arith.constant 384 : index
    %320 = vector.load %arg10[%c0_138, %c384_139] : memref<16x784xf32, #tpu.memory_space<vmem>>, vector<16x128xf32>
    %c0_140 = arith.constant 0 : index
    %c0_141 = arith.constant 0 : index
    %321 = vector.load %arg11[%c0_140, %c0_141] : memref<96x480xf32, #tpu.memory_space<vmem>>, vector<32x128xf32>
    %c0_142 = arith.constant 0 : index
    %c0_143 = arith.constant 0 : index
    %322 = vector.load %arg12[%c0_142, %c0_143] : memref<384x144xf32, #tpu.memory_space<vmem>>, vector<128x32xf32>
    %c0_144 = arith.constant 0 : index
    %c128_145 = arith.constant 128 : index
    %323 = vector.load %arg12[%c0_144, %c128_145] : memref<384x144xf32, #tpu.memory_space<vmem>>, vector<128x16xf32>
    %cst_146 = arith.constant dense<0.000000e+00> : vector<16x96xf32>
    %324 = tpu.matmul %301, %306, %cst_146 {dimension_numbers = #tpu.dot_dimension_numbers<[1], [0], [0], [1], [0, 0, 1, 1], [], []>} : vector<16x32xf32>, vector<32x96xf32>, vector<16x96xf32> -> vector<16x96xf32>
    %325 = vector.broadcast %307 : vector<1x96xf32> to vector<16x96xf32>
    %326 = arith.addf %324, %325 : vector<16x96xf32>
    %327 = vector.extract_strided_slice %326 {offsets = [0, 0], sizes = [16, 32], strides = [1, 1]} : vector<16x96xf32> to vector<16x32xf32>
    %328 = vector.extract_strided_slice %326 {offsets = [0, 32], sizes = [16, 32], strides = [1, 1]} : vector<16x96xf32> to vector<16x32xf32>
    %329 = vector.extract_strided_slice %326 {offsets = [0, 64], sizes = [16, 32], strides = [1, 1]} : vector<16x96xf32> to vector<16x32xf32>
    %330 = tpu.transpose %328, [1, 0] : vector<16x32xf32> -> vector<32x16xf32>
    %cst_147 = arith.constant dense<0.000000e+00> : vector<32x128xf32>
    %331 = tpu.matmul %330, %319, %cst_147 {dimension_numbers = #tpu.dot_dimension_numbers<[1], [0], [0], [1], [0, 0, 1, 1], [], []>} : vector<32x16xf32>, vector<16x128xf32>, vector<32x128xf32> -> vector<32x128xf32>
    %332 = arith.mulf %331, %321 : vector<32x128xf32>
    %cst_148 = arith.constant dense<0.000000e+00> : vector<16x128xf32>
    %333 = tpu.matmul %327, %332, %cst_148 {dimension_numbers = #tpu.dot_dimension_numbers<[1], [0], [0], [1], [0, 0, 1, 1], [], []>} : vector<16x32xf32>, vector<32x128xf32>, vector<16x128xf32> -> vector<16x128xf32>
    %cst_149 = arith.constant dense<0xFF800000> : vector<16xf32>
    %334 = vector.multi_reduction <maximumf>, %333, %cst_149 [1] : vector<16x128xf32> to vector<16xf32>
    %335 = vector.shape_cast %334 : vector<16xf32> to vector<16x1xf32>
    %336 = vector.broadcast %335 : vector<16x1xf32> to vector<16x128xf32>
    %337 = arith.subf %333, %336 : vector<16x128xf32>
    %338 = math.exp %337 : vector<16x128xf32>
    %339 = arith.mulf %338, %320 : vector<16x128xf32>
    %cst_150 = arith.constant dense<0.000000e+00> : vector<128x32xf32>
    %340 = tpu.matmul %323, %329, %cst_150 {dimension_numbers = #tpu.dot_dimension_numbers<[1], [0], [0], [1], [0, 0, 1, 1], [], []>} : vector<128x16xf32>, vector<16x32xf32>, vector<128x32xf32> -> vector<128x32xf32>
    %341 = arith.mulf %340, %322 : vector<128x32xf32>
    %cst_151 = arith.constant dense<0.000000e+00> : vector<16x32xf32>
    %342 = tpu.matmul %339, %341, %cst_151 {dimension_numbers = #tpu.dot_dimension_numbers<[1], [0], [0], [1], [0, 0, 1, 1], [], []>} : vector<16x128xf32>, vector<128x32xf32>, vector<16x32xf32> -> vector<16x32xf32>
    %cst_152 = arith.constant dense<0.000000e+00> : vector<16x32xf32>
    %343 = tpu.matmul %339, %322, %cst_152 {dimension_numbers = #tpu.dot_dimension_numbers<[1], [0], [0], [1], [0, 0, 1, 1], [], []>} : vector<16x128xf32>, vector<128x32xf32>, vector<16x32xf32> -> vector<16x32xf32>
    %cst_153 = arith.constant 1.000000e-30 : f32
    %344 = vector.broadcast %cst_153 : f32 to vector<16x32xf32>
    %345 = arith.maximumf %343, %344 : vector<16x32xf32>
    %346 = tpu.reciprocal %345 {approx = true} : vector<16x32xf32> -> vector<16x32xf32>
    %347 = arith.mulf %342, %346 : vector<16x32xf32>
    %cst_154 = arith.constant dense<0.000000e+00> : vector<16x32xf32>
    %348 = tpu.matmul %347, %308, %cst_154 {dimension_numbers = #tpu.dot_dimension_numbers<[1], [0], [0], [1], [0, 0, 1, 1], [], []>} : vector<16x32xf32>, vector<32x32xf32>, vector<16x32xf32> -> vector<16x32xf32>
    %349 = vector.broadcast %309 : vector<1x32xf32> to vector<16x32xf32>
    %350 = arith.addf %348, %349 : vector<16x32xf32>
    %351 = arith.addf %301, %350 : vector<16x32xf32>
    %cst_155 = arith.constant dense<0.000000e+00> : vector<16xf32>
    %352 = vector.multi_reduction <add>, %351, %cst_155 [1] : vector<16x32xf32> to vector<16xf32>
    %353 = vector.shape_cast %352 : vector<16xf32> to vector<16x1xf32>
    %cst_156 = arith.constant 3.200000e+01 : f32
    %354 = vector.broadcast %cst_156 : f32 to vector<16x1xf32>
    %355 = arith.divf %353, %354 : vector<16x1xf32>
    %356 = arith.mulf %351, %351 : vector<16x32xf32>
    %cst_157 = arith.constant dense<0.000000e+00> : vector<16xf32>
    %357 = vector.multi_reduction <add>, %356, %cst_157 [1] : vector<16x32xf32> to vector<16xf32>
    %358 = vector.shape_cast %357 : vector<16xf32> to vector<16x1xf32>
    %cst_158 = arith.constant 3.200000e+01 : f32
    %359 = vector.broadcast %cst_158 : f32 to vector<16x1xf32>
    %360 = arith.divf %358, %359 : vector<16x1xf32>
    %361 = arith.mulf %355, %355 : vector<16x1xf32>
    %362 = arith.subf %360, %361 : vector<16x1xf32>
    %363 = vector.broadcast %355 : vector<16x1xf32> to vector<16x32xf32>
    %364 = arith.subf %351, %363 : vector<16x32xf32>
    %cst_159 = arith.constant 9.99999974E-6 : f32
    %365 = vector.broadcast %cst_159 : f32 to vector<16x1xf32>
    %366 = arith.addf %362, %365 : vector<16x1xf32>
    %367 = math.rsqrt %366 : vector<16x1xf32>
    %368 = vector.broadcast %367 : vector<16x1xf32> to vector<16x32xf32>
    %369 = arith.mulf %364, %368 : vector<16x32xf32>
    %370 = vector.broadcast %315 : vector<1x32xf32> to vector<16x32xf32>
    %371 = arith.mulf %369, %370 : vector<16x32xf32>
    %372 = vector.broadcast %316 : vector<1x32xf32> to vector<16x32xf32>
    %373 = arith.addf %371, %372 : vector<16x32xf32>
    %cst_160 = arith.constant dense<0.000000e+00> : vector<16x64xf32>
    %374 = tpu.matmul %373, %310, %cst_160 {dimension_numbers = #tpu.dot_dimension_numbers<[1], [0], [0], [1], [0, 0, 1, 1], [], []>} : vector<16x32xf32>, vector<32x64xf32>, vector<16x64xf32> -> vector<16x64xf32>
    %375 = vector.broadcast %311 : vector<1x64xf32> to vector<16x64xf32>
    %376 = arith.addf %374, %375 : vector<16x64xf32>
    %cst_161 = arith.constant 0.000000e+00 : f32
    %377 = vector.broadcast %cst_161 : f32 to vector<16x64xf32>
    %378 = arith.maximumf %376, %377 : vector<16x64xf32>
    %cst_162 = arith.constant dense<0.000000e+00> : vector<16x32xf32>
    %379 = tpu.matmul %378, %313, %cst_162 {dimension_numbers = #tpu.dot_dimension_numbers<[1], [0], [0], [1], [0, 0, 1, 1], [], []>} : vector<16x64xf32>, vector<64x32xf32>, vector<16x32xf32> -> vector<16x32xf32>
    %380 = vector.broadcast %314 : vector<1x32xf32> to vector<16x32xf32>
    %381 = arith.addf %379, %380 : vector<16x32xf32>
    %382 = arith.addf %373, %381 : vector<16x32xf32>
    %cst_163 = arith.constant dense<0.000000e+00> : vector<16xf32>
    %383 = vector.multi_reduction <add>, %382, %cst_163 [1] : vector<16x32xf32> to vector<16xf32>
    %384 = vector.shape_cast %383 : vector<16xf32> to vector<16x1xf32>
    %cst_164 = arith.constant 3.200000e+01 : f32
    %385 = vector.broadcast %cst_164 : f32 to vector<16x1xf32>
    %386 = arith.divf %384, %385 : vector<16x1xf32>
    %387 = arith.mulf %382, %382 : vector<16x32xf32>
    %cst_165 = arith.constant dense<0.000000e+00> : vector<16xf32>
    %388 = vector.multi_reduction <add>, %387, %cst_165 [1] : vector<16x32xf32> to vector<16xf32>
    %389 = vector.shape_cast %388 : vector<16xf32> to vector<16x1xf32>
    %cst_166 = arith.constant 3.200000e+01 : f32
    %390 = vector.broadcast %cst_166 : f32 to vector<16x1xf32>
    %391 = arith.divf %389, %390 : vector<16x1xf32>
    %392 = arith.mulf %386, %386 : vector<16x1xf32>
    %393 = arith.subf %391, %392 : vector<16x1xf32>
    %394 = vector.broadcast %386 : vector<16x1xf32> to vector<16x32xf32>
    %395 = arith.subf %382, %394 : vector<16x32xf32>
    %cst_167 = arith.constant 9.99999974E-6 : f32
    %396 = vector.broadcast %cst_167 : f32 to vector<16x1xf32>
    %397 = arith.addf %393, %396 : vector<16x1xf32>
    %398 = math.rsqrt %397 : vector<16x1xf32>
    %399 = vector.broadcast %398 : vector<16x1xf32> to vector<16x32xf32>
    %400 = arith.mulf %395, %399 : vector<16x32xf32>
    %401 = vector.broadcast %317 : vector<1x32xf32> to vector<16x32xf32>
    %402 = arith.mulf %400, %401 : vector<16x32xf32>
    %403 = vector.broadcast %318 : vector<1x32xf32> to vector<16x32xf32>
    %404 = arith.addf %402, %403 : vector<16x32xf32>
    %c0_168 = arith.constant 0 : index
    %c768 = arith.constant 768 : index
    %405 = vector.load %arg10[%c0_168, %c768] : memref<16x784xf32, #tpu.memory_space<vmem>>, vector<2x16xf32>
    %cst_169 = arith.constant dense<0.000000e+00> : vector<2x32xf32>
    %406 = tpu.matmul %405, %404, %cst_169 {dimension_numbers = #tpu.dot_dimension_numbers<[1], [0], [0], [1], [0, 0, 1, 1], [], []>} : vector<2x16xf32>, vector<16x32xf32>, vector<2x32xf32> -> vector<2x32xf32>
    %c0_170 = arith.constant 0 : index
    %c32 = arith.constant 32 : index
    %407 = vector.load %arg8[%c0_170, %c32] : memref<96x112xf32, #tpu.memory_space<vmem>>, vector<32x32xf32>
    %cst_171 = arith.constant dense<0.000000e+00> : vector<2x32xf32>
    %408 = tpu.matmul %406, %407, %cst_171 {dimension_numbers = #tpu.dot_dimension_numbers<[1], [0], [0], [1], [0, 0, 1, 1], [], []>} : vector<2x32xf32>, vector<32x32xf32>, vector<2x32xf32> -> vector<2x32xf32>
    %c2_172 = arith.constant 2 : index
    %c0_173 = arith.constant 0 : index
    %409 = vector.load %arg9[%c2_172, %c0_173] : memref<4x32xf32, #tpu.memory_space<vmem>>, vector<1x32xf32>
    %410 = vector.broadcast %409 : vector<1x32xf32> to vector<2x32xf32>
    %411 = arith.addf %408, %410 : vector<2x32xf32>
    %cst_174 = arith.constant 0.000000e+00 : f32
    %412 = vector.broadcast %cst_174 : f32 to vector<2x32xf32>
    %413 = arith.maximumf %411, %412 : vector<2x32xf32>
    %c0_175 = arith.constant 0 : index
    %c64 = arith.constant 64 : index
    %414 = vector.load %arg8[%c0_175, %c64] : memref<96x112xf32, #tpu.memory_space<vmem>>, vector<32x16xf32>
    %cst_176 = arith.constant dense<0.000000e+00> : vector<2x16xf32>
    %415 = tpu.matmul %413, %414, %cst_176 {dimension_numbers = #tpu.dot_dimension_numbers<[1], [0], [0], [1], [0, 0, 1, 1], [], []>} : vector<2x32xf32>, vector<32x16xf32>, vector<2x16xf32> -> vector<2x16xf32>
    %c3 = arith.constant 3 : index
    %c0_177 = arith.constant 0 : index
    %416 = vector.load %arg9[%c3, %c0_177] : memref<4x32xf32, #tpu.memory_space<vmem>>, vector<1x16xf32>
    %417 = vector.broadcast %416 : vector<1x16xf32> to vector<2x16xf32>
    %418 = arith.addf %415, %417 : vector<2x16xf32>
    %c0_178 = arith.constant 0 : index
    %c0_179 = arith.constant 0 : index
    %419 = vector.load %arg13[%c0_178, %c0_179] : memref<2x16xf32, #tpu.memory_space<vmem>>, vector<2x16xf32>
    tpu.vector_store %arg13[%c0_178, %c0_179], %418 {strides = array<i32>} : memref<2x16xf32, #tpu.memory_space<vmem>>, vector<2x16xf32>,
    return
  }
}

</mosaic_0001>

<llo_original>
// kernel: seastar_forward.1
$region0: #{seastar_forward.1}
  #allocation0 [shape = 'u32[]', space=smem, size = 0x4, offset = 0x4, fixed_abs, tag = 'smem constant byte address 0x4 - core index']
  #allocation1 [shape = 'u32[72,128]{1,0:T(1,128)}', space=vmem, size = 0x9000, scoped, tag = 'internal scratch']
  %s0 = inlined_call_operand.vmem [shape: f32[16,4], index: 0, kind: input, shape index: {}]
  %s1 = inlined_call_operand.vmem [shape: f32[32,352], index: 1, kind: input, shape index: {}]
  %s2 = inlined_call_operand.vmem [shape: f32[96,320], index: 2, kind: input, shape index: {}]
  %s3 = inlined_call_operand.vmem [shape: f32[192,96], index: 3, kind: input, shape index: {}]
  %s4 = inlined_call_operand.vmem [shape: f32[3,32,320], index: 4, kind: input, shape index: {}]
  %s5 = inlined_call_operand.vmem [shape: f32[3,64,32], index: 5, kind: input, shape index: {}]
  %s6 = inlined_call_operand.vmem [shape: f32[8,352], index: 6, kind: input, shape index: {}]
  %s7 = inlined_call_operand.vmem [shape: f32[3,8,96], index: 7, kind: input, shape index: {}]
  %s8 = inlined_call_operand.vmem [shape: f32[96,112], index: 8, kind: input, shape index: {}]
  %s9 = inlined_call_operand.vmem [shape: f32[4,32], index: 9, kind: input, shape index: {}]
  %s10 = inlined_call_operand.vmem [shape: f32[16,784], index: 10, kind: input, shape index: {}]
  %s11 = inlined_call_operand.vmem [shape: f32[96,480], index: 11, kind: input, shape index: {}]
  %s12 = inlined_call_operand.vmem [shape: f32[384,144], index: 12, kind: input, shape index: {}]
  %s13 = inlined_call_operand.vmem [shape: f32[2,16], index: 13, kind: output, shape index: {}]
  %s14 = sld [smem:[#allocation0]]
  $region62: #{seastar_forward.1} parent=0
    _
  %s16 = ssub.s32 1, %s14
  %s17 = scalar_select 0, %s16, %s14
  // Predicated region
  $region2: #{seastar_forward.1} parent=0 // pred_check
    _
  $region3: #{seastar_forward.1} parent=0 // pred_check_branch
    %19 = sbr.rel (0) target = $region5
  $region4: #{seastar_forward.1} parent=0 // pred_region
    _
  $region5: #{seastar_forward.1} parent=0 // pred_fallthru
    _
  // Predicated region
  $region6: #{seastar_forward.1} parent=0 // pred_check
    _
  $region7: #{seastar_forward.1} parent=0 // pred_check_branch
    %21 = sbr.rel (0) target = $region9
  $region8: #{seastar_forward.1} parent=0 // pred_region
    _
  $region9: #{seastar_forward.1} parent=0 // pred_fallthru
    _
  // Predicated region
  $region10: #{seastar_forward.1} parent=0 // pred_check
    _
  $region11: #{seastar_forward.1} parent=0 // pred_check_branch
    %23 = sbr.rel (0) target = $region13
  $region12: #{seastar_forward.1} parent=0 // pred_region
    _
  $region13: #{seastar_forward.1} parent=0 // pred_fallthru
    _
  // Predicated region
  $region14: #{seastar_forward.1} parent=0 // pred_check
    _
  $region15: #{seastar_forward.1} parent=0 // pred_check_branch
    %25 = sbr.rel (0) target = $region17
  $region16: #{seastar_forward.1} parent=0 // pred_region
    _
  $region17: #{seastar_forward.1} parent=0 // pred_fallthru
    _
  // Predicated region
  $region18: #{seastar_forward.1} parent=0 // pred_check
    _
  $region19: #{seastar_forward.1} parent=0 // pred_check_branch
    %27 = sbr.rel (0) target = $region21
  $region20: #{seastar_forward.1} parent=0 // pred_region
    _
  $region21: #{seastar_forward.1} parent=0 // pred_fallthru
    _
  // Predicated region
  $region22: #{seastar_forward.1} parent=0 // pred_check
    _
  $region23: #{seastar_forward.1} parent=0 // pred_check_branch
    %29 = sbr.rel (0) target = $region25
  $region24: #{seastar_forward.1} parent=0 // pred_region
    _
  $region25: #{seastar_forward.1} parent=0 // pred_fallthru
    _
  // Predicated region
  $region26: #{seastar_forward.1} parent=0 // pred_check
    _
  $region27: #{seastar_forward.1} parent=0 // pred_check_branch
    %31 = sbr.rel (0) target = $region29
  $region28: #{seastar_forward.1} parent=0 // pred_region
    _
  $region29: #{seastar_forward.1} parent=0 // pred_fallthru
    _
  // Predicated region
  $region30: #{seastar_forward.1} parent=0 // pred_check
    _
  $region31: #{seastar_forward.1} parent=0 // pred_check_branch
    %33 = sbr.rel (0) target = $region33
  $region32: #{seastar_forward.1} parent=0 // pred_region
    _
  $region33: #{seastar_forward.1} parent=0 // pred_fallthru
    _
  // Predicated region
  $region34: #{seastar_forward.1} parent=0 // pred_check
    _
  $region35: #{seastar_forward.1} parent=0 // pred_check_branch
    %35 = sbr.rel (0) target = $region37
  $region36: #{seastar_forward.1} parent=0 // pred_region
    _
  $region37: #{seastar_forward.1} parent=0 // pred_fallthru
    _
  // Predicated region
  $region38: #{seastar_forward.1} parent=0 // pred_check
    _
  $region39: #{seastar_forward.1} parent=0 // pred_check_branch
    %37 = sbr.rel (0) target = $region41
  $region40: #{seastar_forward.1} parent=0 // pred_region
    _
  $region41: #{seastar_forward.1} parent=0 // pred_fallthru
    _
  // Predicated region
  $region42: #{seastar_forward.1} parent=0 // pred_check
    _
  $region43: #{seastar_forward.1} parent=0 // pred_check_branch
    %39 = sbr.rel (0) target = $region45
  $region44: #{seastar_forward.1} parent=0 // pred_region
    _
  $region45: #{seastar_forward.1} parent=0 // pred_fallthru
    _
  // Predicated region
  $region46: #{seastar_forward.1} parent=0 // pred_check
    _
  $region47: #{seastar_forward.1} parent=0 // pred_check_branch
    %41 = sbr.rel (0) target = $region49
  $region48: #{seastar_forward.1} parent=0 // pred_region
    _
  $region49: #{seastar_forward.1} parent=0 // pred_fallthru
    _
  // Predicated region
  $region50: #{seastar_forward.1} parent=0 // pred_check
    _
  $region51: #{seastar_forward.1} parent=0 // pred_check_branch
    %43 = sbr.rel (0) target = $region53
  $region52: #{seastar_forward.1} parent=0 // pred_region
    _
  $region53: #{seastar_forward.1} parent=0 // pred_fallthru
    _
  %v44 = vld [vmem:[%s8] sm:$0xf]
  %v45 = vld [vmem:[%s0] sm:$0xff]
  %v46 = vld [vmem:[%s0 + $0x8] sm:$0xff]
  %v47 = vld [vmem:[%s9] sm:$0x1]
  %v48 = vperm.slane %v47, 0
  %50 = vrot.lane.b32.xlu0 %v44, 48
  %v51 = vpop.permute.xlu0 %50
  %vm52 = vcmask 31744
  %v54 = vsel %vm52, %v45, 0
  %v57 = vsel %vm52, %v46, 0
  %vm59 = vcmask 1043456
  %v60 = vsel %vm59, %v51, 0
  %62 = vmatpush.msra.mxu0 0.0
  %63 = vmatpush.msra.mxu0 0.0
  %64 = vmatpush.msra.mxu0 0.0
  %65 = vmatpush.msra.mxu0 0.0
  %66 = vmatpush.msra.mxu0 0.0
  %67 = vmatpush.msra.mxu0 0.0
  %68 = vmatpush.msra.mxu0 0.0
  %69 = vmatpush.msra.mxu0 0.0
  %70 = vmatpush.msra.mxu0 0.0
  %71 = vmatpush.msra.mxu0 0.0
  %72 = vmatpush.msra.mxu0 0.0
  %73 = vmatpush.msra.mxu0 0.0
  %74 = vmatpush.msra.mxu0 0.0
  %75 = vmatpush.msra.mxu0 0.0
  %76 = vmatpush.msra.mxu0 0.0
  %77 = vmatpush.msra.mxu0 %v60
  %78 = vmatmul.f32.gmra.mxu0 %v54
  %v79 = vpop.f32.mrf.mxu0
  %v80 = vadd.f32 %v48, %v79
  %81 = vmatmul.f32.gmra.mxu0 %v57
  %v82 = vpop.f32.mrf.mxu0
  %v83 = vadd.f32 %v48, %v82
  %84 = vdwg.mxu0
  %v85 = vld [vmem:[%s6] sm:$0xff]
  %v86 = vld [vmem:[%s6 + $0x8] sm:$0xff]
  %v87 = vld [vmem:[%s6 + $0x10] sm:$0xff]
  %90 = vrot.lane.b32.xlu0 %v80, 32
  %v91 = vpop.permute.xlu0 %90
  %92 = vrot.lane.b32.xlu0 %v83, 32
  %v93 = vpop.permute.xlu0 %92
  %96 = vrot.lane.b32.xlu0 %v80, 64
  %v97 = vpop.permute.xlu0 %96
  %98 = vrot.lane.b32.xlu0 %v83, 64
  %v99 = vpop.permute.xlu0 %98
  %vm102 = vcmask 261120
  %v103 = vsel %vm102, %v80, %v91
  %v104 = vsel %vm102, %v83, %v93
  %vm105 = vcmask 523264
  %v106 = vsel %vm105, %v103, %v97
  %v107 = vsel %vm105, %v104, %v99
  %v108 = vld [vmem:[%s1] sm:$0xff]
  %v109 = vld [vmem:[%s1 + $0x8] sm:$0xff]
  %v110 = vld [vmem:[%s1 + $0x10] sm:$0xff]
  %v111 = vld [vmem:[%s1 + $0x18] sm:$0xff]
  %v112 = vld [vmem:[%s1 + $0x20] sm:$0xff]
  %v113 = vld [vmem:[%s1 + $0x28] sm:$0xff]
  %v114 = vld [vmem:[%s1 + $0x30] sm:$0xff]
  %v115 = vld [vmem:[%s1 + $0x38] sm:$0xff]
  %v116 = vld [vmem:[%s1 + $0x40] sm:$0xff]
  %v117 = vld [vmem:[%s1 + $0x48] sm:$0xff]
  %v118 = vld [vmem:[%s1 + $0x50] sm:$0xff]
  %v119 = vld [vmem:[%s1 + $0x58] sm:$0xff]
  %v120 = vld [vmem:[%s2] sm:$0xff]
  %v121 = vld [vmem:[%s2 + $0x18] sm:$0xff]
  %v122 = vld [vmem:[%s2 + $0x30] sm:$0xff]
  %v123 = vld [vmem:[%s2 + $0x48] sm:$0xff]
  %v124 = vld [vmem:[%s2 + $0x60] sm:$0xff]
  %v125 = vld [vmem:[%s2 + $0x78] sm:$0xff]
  %v126 = vld [vmem:[%s2 + $0x90] sm:$0xff]
  %v127 = vld [vmem:[%s2 + $0xa8] sm:$0xff]
  %v128 = vld [vmem:[%s2 + $0xc0] sm:$0xff]
  %v129 = vld [vmem:[%s2 + $0xd8] sm:$0xff]
  %v130 = vld [vmem:[%s2 + $0xf0] sm:$0xff]
  %v131 = vld [vmem:[%s2 + $0x108] sm:$0xff]
  %v132 = vld [vmem:[%s2 + $0x8] sm:$0xff]
  %v133 = vld [vmem:[%s2 + $0x10] sm:$0xff]
  %v134 = vld [vmem:[%s2 + $0x20] sm:$0xff]
  %v135 = vld [vmem:[%s2 + $0x28] sm:$0xff]
  %v136 = vld [vmem:[%s2 + $0x38] sm:$0xff]
  %v137 = vld [vmem:[%s2 + $0x40] sm:$0xff]
  %v138 = vld [vmem:[%s2 + $0x50] sm:$0xff]
  %v139 = vld [vmem:[%s2 + $0x58] sm:$0xff]
  %v140 = vld [vmem:[%s2 + $0x68] sm:$0xff]
  %v141 = vld [vmem:[%s2 + $0x70] sm:$0xff]
  %v142 = vld [vmem:[%s2 + $0x80] sm:$0xff]
  %v143 = vld [vmem:[%s2 + $0x88] sm:$0xff]
  %v144 = vld [vmem:[%s2 + $0x98] sm:$0xff]
  %v145 = vld [vmem:[%s2 + $0xa0] sm:$0xff]
  %v146 = vld [vmem:[%s2 + $0xb0] sm:$0xff]
  %v147 = vld [vmem:[%s2 + $0xb8] sm:$0xff]
  %v148 = vld [vmem:[%s2 + $0xc8] sm:$0xff]
  %v149 = vld [vmem:[%s2 + $0xd0] sm:$0xff]
  %v150 = vld [vmem:[%s2 + $0xe0] sm:$0xff]
  %v151 = vld [vmem:[%s2 + $0xe8] sm:$0xff]
  %v152 = vld [vmem:[%s2 + $0xf8] sm:$0xff]
  %v153 = vld [vmem:[%s2 + $0x100] sm:$0xff]
  %v154 = vld [vmem:[%s2 + $0x110] sm:$0xff]
  %v155 = vld [vmem:[%s2 + $0x118] sm:$0xff]
  %v156 = vld [vmem:[%s3] sm:$0xff]
  %v157 = vld [vmem:[%s3 + $0x8] sm:$0xff]
  %v158 = vld [vmem:[%s3 + $0x10] sm:$0xff]
  %v159 = vld [vmem:[%s3 + $0x18] sm:$0xff]
  %v160 = vld [vmem:[%s3 + $0x20] sm:$0xff]
  %v161 = vld [vmem:[%s3 + $0x28] sm:$0xff]
  %v162 = vld [vmem:[%s3 + $0x30] sm:$0xff]
  %v163 = vld [vmem:[%s3 + $0x38] sm:$0xff]
  %v164 = vld [vmem:[%s3 + $0x40] sm:$0xff]
  %v165 = vld [vmem:[%s3 + $0x48] sm:$0xff]
  %v166 = vld [vmem:[%s3 + $0x50] sm:$0xff]
  %v167 = vld [vmem:[%s3 + $0x58] sm:$0xff]
  %v168 = vld [vmem:[%s3 + $0x60] sm:$0xff]
  %v169 = vld [vmem:[%s3 + $0x68] sm:$0xff]
  %v170 = vld [vmem:[%s3 + $0x70] sm:$0xff]
  %v171 = vld [vmem:[%s3 + $0x78] sm:$0xff]
  %v172 = vld [vmem:[%s3 + $0x80] sm:$0xff]
  %v173 = vld [vmem:[%s3 + $0x88] sm:$0xff]
  %v174 = vld [vmem:[%s3 + $0x90] sm:$0xff]
  %v175 = vld [vmem:[%s3 + $0x98] sm:$0xff]
  %v176 = vld [vmem:[%s3 + $0xa0] sm:$0xff]
  %v177 = vld [vmem:[%s3 + $0xa8] sm:$0xff]
  %v178 = vld [vmem:[%s3 + $0xb0] sm:$0xff]
  %v179 = vld [vmem:[%s3 + $0xb8] sm:$0xff]
  %v180 = vld [vmem:[%s10] sm:$0xff]
  %v181 = vld [vmem:[%s10 + $0x8] sm:$0xff]
  %v182 = vld [vmem:[%s10 + $0x10] sm:$0xff]
  %v183 = vld [vmem:[%s10 + $0x38] sm:$0xff]
  %v184 = vld [vmem:[%s10 + $0x40] sm:$0xff]
  %v185 = vld [vmem:[%s10 + $0x48] sm:$0xff]
  %v186 = vld [vmem:[%s10 + $0x18] sm:$0xff]
  %v187 = vld [vmem:[%s10 + $0x20] sm:$0xff]
  %v188 = vld [vmem:[%s10 + $0x28] sm:$0xff]
  %v189 = vld [vmem:[%s10 + $0x50] sm:$0xff]
  %v190 = vld [vmem:[%s10 + $0x58] sm:$0xff]
  %v191 = vld [vmem:[%s10 + $0x60] sm:$0xff]
  %v192 = vld [vmem:[%s11] sm:$0xff]
  %v193 = vld [vmem:[%s11 + $0x8] sm:$0xff]
  %v194 = vld [vmem:[%s11 + $0x10] sm:$0xff]
  %v195 = vld [vmem:[%s11 + $0x20] sm:$0xff]
  %v196 = vld [vmem:[%s11 + $0x28] sm:$0xff]
  %v197 = vld [vmem:[%s11 + $0x30] sm:$0xff]
  %v198 = vld [vmem:[%s11 + $0x40] sm:$0xff]
  %v199 = vld [vmem:[%s11 + $0x48] sm:$0xff]
  %v200 = vld [vmem:[%s11 + $0x50] sm:$0xff]
  %v201 = vld [vmem:[%s11 + $0x60] sm:$0xff]
  %v202 = vld [vmem:[%s11 + $0x68] sm:$0xff]
  %v203 = vld [vmem:[%s11 + $0x70] sm:$0xff]
  %v204 = vld [vmem:[%s11 + $0x80] sm:$0xff]
  %v205 = vld [vmem:[%s11 + $0x88] sm:$0xff]
  %v206 = vld [vmem:[%s11 + $0x90] sm:$0xff]
  %v207 = vld [vmem:[%s11 + $0xa0] sm:$0xff]
  %v208 = vld [vmem:[%s11 + $0xa8] sm:$0xff]
  %v209 = vld [vmem:[%s11 + $0xb0] sm:$0xff]
  %v210 = vld [vmem:[%s11 + $0xc0] sm:$0xff]
  %v211 = vld [vmem:[%s11 + $0xc8] sm:$0xff]
  %v212 = vld [vmem:[%s11 + $0xd0] sm:$0xff]
  %v213 = vld [vmem:[%s11 + $0xe0] sm:$0xff]
  %v214 = vld [vmem:[%s11 + $0xe8] sm:$0xff]
  %v215 = vld [vmem:[%s11 + $0xf0] sm:$0xff]
  %v216 = vld [vmem:[%s11 + $0x100] sm:$0xff]
  %v217 = vld [vmem:[%s11 + $0x108] sm:$0xff]
  %v218 = vld [vmem:[%s11 + $0x110] sm:$0xff]
  %v219 = vld [vmem:[%s11 + $0x120] sm:$0xff]
  %v220 = vld [vmem:[%s11 + $0x128] sm:$0xff]
  %v221 = vld [vmem:[%s11 + $0x130] sm:$0xff]
  %v222 = vld [vmem:[%s11 + $0x140] sm:$0xff]
  %v223 = vld [vmem:[%s11 + $0x148] sm:$0xff]
  %v224 = vld [vmem:[%s11 + $0x150] sm:$0xff]
  %v225 = vld [vmem:[%s11 + $0x160] sm:$0xff]
  %v226 = vld [vmem:[%s11 + $0x168] sm:$0xff]
  %v227 = vld [vmem:[%s11 + $0x170] sm:$0xff]
  %v228 = vld [vmem:[%s12] sm:$0xff]
  %v229 = vld [vmem:[%s12 + $0x10] sm:$0xff]
  %v230 = vld [vmem:[%s12 + $0x20] sm:$0xff]
  %v231 = vld [vmem:[%s12 + $0x30] sm:$0xff]
  %v232 = vld [vmem:[%s12 + $0x40] sm:$0xff]
  %v233 = vld [vmem:[%s12 + $0x50] sm:$0xff]
  %v234 = vld [vmem:[%s12 + $0x60] sm:$0xff]
  %v235 = vld [vmem:[%s12 + $0x70] sm:$0xff]
  %v236 = vld [vmem:[%s12 + $0x80] sm:$0xff]
  %v237 = vld [vmem:[%s12 + $0x90] sm:$0xff]
  %v238 = vld [vmem:[%s12 + $0xa0] sm:$0xff]
  %v239 = vld [vmem:[%s12 + $0xb0] sm:$0xff]
  %v240 = vld [vmem:[%s12 + $0xc0] sm:$0xff]
  %v241 = vld [vmem:[%s12 + $0xd0] sm:$0xff]
  %v242 = vld [vmem:[%s12 + $0xe0] sm:$0xff]
  %v243 = vld [vmem:[%s12 + $0xf0] sm:$0xff]
  %v244 = vld [vmem:[%s12 + $0x100] sm:$0xff]
  %v245 = vld [vmem:[%s12 + $0x110] sm:$0xff]
  %v246 = vld [vmem:[%s12 + $0x120] sm:$0xff]
  %v247 = vld [vmem:[%s12 + $0x130] sm:$0xff]
  %v248 = vld [vmem:[%s12 + $0x140] sm:$0xff]
  %v249 = vld [vmem:[%s12 + $0x150] sm:$0xff]
  %v250 = vld [vmem:[%s12 + $0x160] sm:$0xff]
  %v251 = vld [vmem:[%s12 + $0x170] sm:$0xff]
  %v252 = vld [vmem:[%s12 + $0x180] sm:$0xff]
  %v253 = vld [vmem:[%s12 + $0x190] sm:$0xff]
  %v254 = vld [vmem:[%s12 + $0x1a0] sm:$0xff]
  %v255 = vld [vmem:[%s12 + $0x1b0] sm:$0xff]
  %v256 = vld [vmem:[%s12 + $0x1c0] sm:$0xff]
  %v257 = vld [vmem:[%s12 + $0x1d0] sm:$0xff]
  %v258 = vld [vmem:[%s12 + $0x1e0] sm:$0xff]
  %v259 = vld [vmem:[%s12 + $0x1f0] sm:$0xff]
  %v260 = vld [vmem:[%s12 + $0x200] sm:$0xff]
  %v261 = vld [vmem:[%s12 + $0x210] sm:$0xff]
  %v262 = vld [vmem:[%s12 + $0x220] sm:$0xff]
  %v263 = vld [vmem:[%s12 + $0x230] sm:$0xff]
  %v264 = vld [vmem:[%s12 + $0x240] sm:$0xff]
  %v265 = vld [vmem:[%s12 + $0x250] sm:$0xff]
  %v266 = vld [vmem:[%s12 + $0x260] sm:$0xff]
  %v267 = vld [vmem:[%s12 + $0x270] sm:$0xff]
  %v268 = vld [vmem:[%s12 + $0x280] sm:$0xff]
  %v269 = vld [vmem:[%s12 + $0x290] sm:$0xff]
  %v270 = vld [vmem:[%s12 + $0x2a0] sm:$0xff]
  %v271 = vld [vmem:[%s12 + $0x2b0] sm:$0xff]
  %v272 = vld [vmem:[%s12 + $0x2c0] sm:$0xff]
  %v273 = vld [vmem:[%s12 + $0x2d0] sm:$0xff]
  %v274 = vld [vmem:[%s12 + $0x2e0] sm:$0xff]
  %v275 = vld [vmem:[%s12 + $0x2f0] sm:$0xff]
  %v276 = vld [vmem:[%s12 + $0x8] sm:$0xff]
  %v277 = vld [vmem:[%s12 + $0x18] sm:$0xff]
  %v278 = vld [vmem:[%s12 + $0x28] sm:$0xff]
  %v279 = vld [vmem:[%s12 + $0x38] sm:$0xff]
  %v280 = vld [vmem:[%s12 + $0x48] sm:$0xff]
  %v281 = vld [vmem:[%s12 + $0x58] sm:$0xff]
  %v282 = vld [vmem:[%s12 + $0x68] sm:$0xff]
  %v283 = vld [vmem:[%s12 + $0x78] sm:$0xff]
  %v284 = vld [vmem:[%s12 + $0x88] sm:$0xff]
  %v285 = vld [vmem:[%s12 + $0x98] sm:$0xff]
  %v286 = vld [vmem:[%s12 + $0xa8] sm:$0xff]
  %v287 = vld [vmem:[%s12 + $0xb8] sm:$0xff]
  %v288 = vld [vmem:[%s12 + $0xc8] sm:$0xff]
  %v289 = vld [vmem:[%s12 + $0xd8] sm:$0xff]
  %v290 = vld [vmem:[%s12 + $0xe8] sm:$0xff]
  %v291 = vld [vmem:[%s12 + $0xf8] sm:$0xff]
  %v292 = vld [vmem:[%s12 + $0x108] sm:$0xff]
  %v293 = vld [vmem:[%s12 + $0x118] sm:$0xff]
  %v294 = vld [vmem:[%s12 + $0x128] sm:$0xff]
  %v295 = vld [vmem:[%s12 + $0x138] sm:$0xff]
  %v296 = vld [vmem:[%s12 + $0x148] sm:$0xff]
  %v297 = vld [vmem:[%s12 + $0x158] sm:$0xff]
  %v298 = vld [vmem:[%s12 + $0x168] sm:$0xff]
  %v299 = vld [vmem:[%s12 + $0x178] sm:$0xff]
  %v300 = vld [vmem:[%s12 + $0x188] sm:$0xff]
  %v301 = vld [vmem:[%s12 + $0x198] sm:$0xff]
  %v302 = vld [vmem:[%s12 + $0x1a8] sm:$0xff]
  %v303 = vld [vmem:[%s12 + $0x1b8] sm:$0xff]
  %v304 = vld [vmem:[%s12 + $0x1c8] sm:$0xff]
  %v305 = vld [vmem:[%s12 + $0x1d8] sm:$0xff]
  %v306 = vld [vmem:[%s12 + $0x1e8] sm:$0xff]
  %v307 = vld [vmem:[%s12 + $0x1f8] sm:$0xff]
  %v308 = vld [vmem:[%s12 + $0x208] sm:$0xff]
  %v309 = vld [vmem:[%s12 + $0x218] sm:$0xff]
  %v310 = vld [vmem:[%s12 + $0x228] sm:$0xff]
  %v311 = vld [vmem:[%s12 + $0x238] sm:$0xff]
  %v312 = vld [vmem:[%s12 + $0x248] sm:$0xff]
  %v313 = vld [vmem:[%s12 + $0x258] sm:$0xff]
  %v314 = vld [vmem:[%s12 + $0x268] sm:$0xff]
  %v315 = vld [vmem:[%s12 + $0x278] sm:$0xff]
  %v316 = vld [vmem:[%s12 + $0x288] sm:$0xff]
  %v317 = vld [vmem:[%s12 + $0x298] sm:$0xff]
  %v318 = vld [vmem:[%s12 + $0x2a8] sm:$0xff]
  %v319 = vld [vmem:[%s12 + $0x2b8] sm:$0xff]
  %v320 = vld [vmem:[%s12 + $0x2c8] sm:$0xff]
  %v321 = vld [vmem:[%s12 + $0x2d8] sm:$0xff]
  %v322 = vld [vmem:[%s12 + $0x2e8] sm:$0xff]
  %v323 = vld [vmem:[%s12 + $0x2f8] sm:$0xff]
  %v324 = vld [vmem:[%s11 + $0x18] sm:$0xff]
  %v325 = vld [vmem:[%s11 + $0x38] sm:$0xff]
  %v326 = vld [vmem:[%s11 + $0x58] sm:$0xff]
  %v327 = vld [vmem:[%s11 + $0x78] sm:$0xff]
  %v328 = vld [vmem:[%s11 + $0x98] sm:$0xff]
  %v329 = vld [vmem:[%s11 + $0xb8] sm:$0xff]
  %v330 = vld [vmem:[%s11 + $0xd8] sm:$0xff]
  %v331 = vld [vmem:[%s11 + $0xf8] sm:$0xff]
  %v332 = vld [vmem:[%s11 + $0x118] sm:$0xff]
  %v333 = vld [vmem:[%s11 + $0x138] sm:$0xff]
  %v334 = vld [vmem:[%s11 + $0x158] sm:$0xff]
  %v335 = vld [vmem:[%s11 + $0x178] sm:$0xff]
  %v336 = vperm.slane %v85, 0
  %v337 = vperm.slane %v86, 0
  %v338 = vperm.slane %v87, 0
  %v339 = vsel %vm102, %v80, 0
  %v341 = vsel %vm102, %v83, 0
  %343 = vmatpush.msra.mxu0 0.0
  %344 = vmatpush.msra.mxu0 0.0
  %345 = vmatpush.msra.mxu0 0.0
  %346 = vmatpush.msra.mxu0 0.0
  %347 = vmatpush.msra.mxu0 0.0
  %348 = vmatpush.msra.mxu0 0.0
  %349 = vmatpush.msra.mxu0 0.0
  %350 = vmatpush.msra.mxu0 0.0
  %351 = vmatpush.msra.mxu0 0.0
  %352 = vmatpush.msra.mxu0 0.0
  %353 = vmatpush.msra.mxu0 0.0
  %354 = vmatpush.msra.mxu0 0.0
  %355 = vmatpush.msra.mxu0 %v117
  %356 = vmatpush.msra.mxu0 %v114
  %357 = vmatpush.msra.mxu0 %v111
  %358 = vmatpush.msra.mxu0 %v108
  %359 = vmatmul.f32.gmra.mxu0 %v339
  %v360 = vpop.f32.mrf.mxu0
  %v361 = vadd.f32 %v336, %v360
  %362 = vmatmul.f32.gmra.mxu0 %v341
  %v363 = vpop.f32.mrf.mxu0
  %v364 = vadd.f32 %v336, %v363
  %365 = vdwg.mxu0
  %366 = vmatpush.msra.mxu0 0.0
  %367 = vmatpush.msra.mxu0 0.0
  %368 = vmatpush.msra.mxu0 0.0
  %369 = vmatpush.msra.mxu0 0.0
  %370 = vmatpush.msra.mxu0 0.0
  %371 = vmatpush.msra.mxu0 0.0
  %372 = vmatpush.msra.mxu0 0.0
  %373 = vmatpush.msra.mxu0 0.0
  %374 = vmatpush.msra.mxu0 0.0
  %375 = vmatpush.msra.mxu0 0.0
  %376 = vmatpush.msra.mxu0 0.0
  %377 = vmatpush.msra.mxu0 0.0
  %378 = vmatpush.msra.mxu0 %v118
  %379 = vmatpush.msra.mxu0 %v115
  %380 = vmatpush.msra.mxu0 %v112
  %381 = vmatpush.msra.mxu0 %v109
  %382 = vmatmul.f32.gmra.mxu0 %v339
  %v383 = vpop.f32.mrf.mxu0
  %v384 = vadd.f32 %v337, %v383
  %385 = vmatmul.f32.gmra.mxu0 %v341
  %v386 = vpop.f32.mrf.mxu0
  %v387 = vadd.f32 %v337, %v386
  %388 = vdwg.mxu0
  %389 = vmatpush.msra.mxu0 0.0
  %390 = vmatpush.msra.mxu0 0.0
  %391 = vmatpush.msra.mxu0 0.0
  %392 = vmatpush.msra.mxu0 0.0
  %393 = vmatpush.msra.mxu0 0.0
  %394 = vmatpush.msra.mxu0 0.0
  %395 = vmatpush.msra.mxu0 0.0
  %396 = vmatpush.msra.mxu0 0.0
  %397 = vmatpush.msra.mxu0 0.0
  %398 = vmatpush.msra.mxu0 0.0
  %399 = vmatpush.msra.mxu0 0.0
  %400 = vmatpush.msra.mxu0 0.0
  %401 = vmatpush.msra.mxu0 %v119
  %402 = vmatpush.msra.mxu0 %v116
  %403 = vmatpush.msra.mxu0 %v113
  %404 = vmatpush.msra.mxu0 %v110
  %405 = vmatmul.f32.gmra.mxu0 %v339
  %v406 = vpop.f32.mrf.mxu0
  %v407 = vadd.f32 %v338, %v406
  %408 = vmatmul.f32.gmra.mxu0 %v341
  %v409 = vpop.f32.mrf.mxu0
  %v410 = vadd.f32 %v338, %v409
  %411 = vdwg.mxu0
  %412 = vxpose.xlu0.b32.start [1/16] %v384, 128
  %413 = vxpose.xlu0.b32.cont [2/16] %v387, 128
  %414 = vxpose.xlu0.b32.cont [3/16] 0.0, 128
  %415 = vxpose.xlu0.b32.cont [4/16] 0.0, 128
  %416 = vxpose.xlu0.b32.cont [5/16] 0.0, 128
  %417 = vxpose.xlu0.b32.cont [6/16] 0.0, 128
  %418 = vxpose.xlu0.b32.cont [7/16] 0.0, 128
  %419 = vxpose.xlu0.b32.cont [8/16] 0.0, 128
  %420 = vxpose.xlu0.b32.cont [9/16] 0.0, 128
  %421 = vxpose.xlu0.b32.cont [10/16] 0.0, 128
  %422 = vxpose.xlu0.b32.cont [11/16] 0.0, 128
  %423 = vxpose.xlu0.b32.cont [12/16] 0.0, 128
  %424 = vxpose.xlu0.b32.cont [13/16] 0.0, 128
  %425 = vxpose.xlu0.b32.cont [14/16] 0.0, 128
  %426 = vxpose.xlu0.b32.cont [15/16] 0.0, 128
  %427 = vxpose.xlu0.b32.end [16/16] 0.0, 128
  %v428 = vpop.trf.xlu0
  %v429 = vpop.trf.xlu0
  %v430 = vpop.trf.xlu0
  %v431 = vpop.trf.xlu0
  %v432 = vpop.trf.xlu0
  %v433 = vpop.trf.xlu0
  %v434 = vpop.trf.xlu0
  %v435 = vpop.trf.xlu0
  %v436 = vpop.trf.xlu0
  %v437 = vpop.trf.xlu0
  %v438 = vpop.trf.xlu0
  %v439 = vpop.trf.xlu0
  %v440 = vpop.trf.xlu0
  %v441 = vpop.trf.xlu0
  %v442 = vpop.trf.xlu0
  %v443 = vpop.trf.xlu0
  %vm444 = vcmask 130048
  %v446 = vsel %vm444, %v428, 0
  %v449 = vsel %vm444, %v429, 0
  %v452 = vsel %vm444, %v430, 0
  %v455 = vsel %vm444, %v431, 0
  %v458 = vsel %vm444, %v432, 0
  %v461 = vsel %vm444, %v433, 0
  %v464 = vsel %vm444, %v434, 0
  %v467 = vsel %vm444, %v435, 0
  %v470 = vsel %vm444, %v436, 0
  %v473 = vsel %vm444, %v437, 0
  %v476 = vsel %vm444, %v438, 0
  %v479 = vsel %vm444, %v439, 0
  %481 = vmatpush.msra.mxu0 0.0
  %482 = vmatpush.msra.mxu0 0.0
  %483 = vmatpush.msra.mxu0 0.0
  %484 = vmatpush.msra.mxu0 0.0
  %485 = vmatpush.msra.mxu0 0.0
  %486 = vmatpush.msra.mxu0 0.0
  %487 = vmatpush.msra.mxu0 0.0
  %488 = vmatpush.msra.mxu0 0.0
  %489 = vmatpush.msra.mxu0 0.0
  %490 = vmatpush.msra.mxu0 0.0
  %491 = vmatpush.msra.mxu0 0.0
  %492 = vmatpush.msra.mxu0 0.0
  %493 = vmatpush.msra.mxu0 0.0
  %494 = vmatpush.msra.mxu0 0.0
  %495 = vmatpush.msra.mxu0 %v183
  %496 = vmatpush.msra.mxu0 %v180
  %497 = vmatmul.f32.gmra.mxu0 %v446
  %v498 = vpop.f32.mrf.mxu0
  %v499 = vadd.f32 0.0, %v498
  %500 = vmatmul.f32.gmra.mxu0 %v449
  %v501 = vpop.f32.mrf.mxu0
  %v502 = vadd.f32 0.0, %v501
  %503 = vmatmul.f32.gmra.mxu0 %v452
  %v504 = vpop.f32.mrf.mxu0
  %v505 = vadd.f32 0.0, %v504
  %506 = vmatmul.f32.gmra.mxu0 %v455
  %v507 = vpop.f32.mrf.mxu0
  %v508 = vadd.f32 0.0, %v507
  %509 = vmatmul.f32.gmra.mxu0 %v458
  %v510 = vpop.f32.mrf.mxu0
  %v511 = vadd.f32 0.0, %v510
  %512 = vmatmul.f32.gmra.mxu0 %v461
  %v513 = vpop.f32.mrf.mxu0
  %v514 = vadd.f32 0.0, %v513
  %515 = vmatmul.f32.gmra.mxu0 %v464
  %v516 = vpop.f32.mrf.mxu0
  %v517 = vadd.f32 0.0, %v516
  %518 = vmatmul.f32.gmra.mxu0 %v467
  %v519 = vpop.f32.mrf.mxu0
  %v520 = vadd.f32 0.0, %v519
  %521 = vmatmul.f32.gmra.mxu0 %v470
  %v522 = vpop.f32.mrf.mxu0
  %v523 = vadd.f32 0.0, %v522
  %524 = vmatmul.f32.gmra.mxu0 %v473
  %v525 = vpop.f32.mrf.mxu0
  %v526 = vadd.f32 0.0, %v525
  %527 = vmatmul.f32.gmra.mxu0 %v476
  %v528 = vpop.f32.mrf.mxu0
  %v529 = vadd.f32 0.0, %v528
  %530 = vmatmul.f32.gmra.mxu0 %v479
  %v531 = vpop.f32.mrf.mxu0
  %v532 = vadd.f32 0.0, %v531
  %533 = vdwg.mxu0
  %534 = vmatpush.msra.mxu0 0.0
  %535 = vmatpush.msra.mxu0 0.0
  %536 = vmatpush.msra.mxu0 0.0
  %537 = vmatpush.msra.mxu0 0.0
  %538 = vmatpush.msra.mxu0 0.0
  %539 = vmatpush.msra.mxu0 0.0
  %540 = vmatpush.msra.mxu0 0.0
  %541 = vmatpush.msra.mxu0 0.0
  %542 = vmatpush.msra.mxu0 0.0
  %543 = vmatpush.msra.mxu0 0.0
  %544 = vmatpush.msra.mxu0 0.0
  %545 = vmatpush.msra.mxu0 0.0
  %546 = vmatpush.msra.mxu0 0.0
  %547 = vmatpush.msra.mxu0 0.0
  %548 = vmatpush.msra.mxu0 %v184
  %549 = vmatpush.msra.mxu0 %v181
  %550 = vmatmul.f32.gmra.mxu0 %v446
  %v551 = vpop.f32.mrf.mxu0
  %v552 = vadd.f32 0.0, %v551
  %553 = vmatmul.f32.gmra.mxu0 %v449
  %v554 = vpop.f32.mrf.mxu0
  %v555 = vadd.f32 0.0, %v554
  %556 = vmatmul.f32.gmra.mxu0 %v452
  %v557 = vpop.f32.mrf.mxu0
  %v558 = vadd.f32 0.0, %v557
  %559 = vmatmul.f32.gmra.mxu0 %v455
  %v560 = vpop.f32.mrf.mxu0
  %v561 = vadd.f32 0.0, %v560
  %562 = vmatmul.f32.gmra.mxu0 %v458
  %v563 = vpop.f32.mrf.mxu0
  %v564 = vadd.f32 0.0, %v563
  %565 = vmatmul.f32.gmra.mxu0 %v461
  %v566 = vpop.f32.mrf.mxu0
  %v567 = vadd.f32 0.0, %v566
  %568 = vmatmul.f32.gmra.mxu0 %v464
  %v569 = vpop.f32.mrf.mxu0
  %v570 = vadd.f32 0.0, %v569
  %571 = vmatmul.f32.gmra.mxu0 %v467
  %v572 = vpop.f32.mrf.mxu0
  %v573 = vadd.f32 0.0, %v572
  %574 = vmatmul.f32.gmra.mxu0 %v470
  %v575 = vpop.f32.mrf.mxu0
  %v576 = vadd.f32 0.0, %v575
  %577 = vmatmul.f32.gmra.mxu0 %v473
  %v578 = vpop.f32.mrf.mxu0
  %v579 = vadd.f32 0.0, %v578
  %580 = vmatmul.f32.gmra.mxu0 %v476
  %v581 = vpop.f32.mrf.mxu0
  %v582 = vadd.f32 0.0, %v581
  %583 = vmatmul.f32.gmra.mxu0 %v479
  %v584 = vpop.f32.mrf.mxu0
  %v585 = vadd.f32 0.0, %v584
  %586 = vdwg.mxu0
  %587 = vmatpush.msra.mxu0 0.0
  %588 = vmatpush.msra.mxu0 0.0
  %589 = vmatpush.msra.mxu0 0.0
  %590 = vmatpush.msra.mxu0 0.0
  %591 = vmatpush.msra.mxu0 0.0
  %592 = vmatpush.msra.mxu0 0.0
  %593 = vmatpush.msra.mxu0 0.0
  %594 = vmatpush.msra.mxu0 0.0
  %595 = vmatpush.msra.mxu0 0.0
  %596 = vmatpush.msra.mxu0 0.0
  %597 = vmatpush.msra.mxu0 0.0
  %598 = vmatpush.msra.mxu0 0.0
  %599 = vmatpush.msra.mxu0 0.0
  %600 = vmatpush.msra.mxu0 0.0
  %601 = vmatpush.msra.mxu0 %v185
  %602 = vmatpush.msra.mxu0 %v182
  %603 = vmatmul.f32.gmra.mxu0 %v446
  %v604 = vpop.f32.mrf.mxu0
  %v605 = vadd.f32 0.0, %v604
  %606 = vmatmul.f32.gmra.mxu0 %v449
  %v607 = vpop.f32.mrf.mxu0
  %v608 = vadd.f32 0.0, %v607
  %609 = vmatmul.f32.gmra.mxu0 %v452
  %v610 = vpop.f32.mrf.mxu0
  %v611 = vadd.f32 0.0, %v610
  %612 = vmatmul.f32.gmra.mxu0 %v455
  %v613 = vpop.f32.mrf.mxu0
  %v614 = vadd.f32 0.0, %v613
  %615 = vmatmul.f32.gmra.mxu0 %v458
  %v616 = vpop.f32.mrf.mxu0
  %v617 = vadd.f32 0.0, %v616
  %618 = vmatmul.f32.gmra.mxu0 %v461
  %v619 = vpop.f32.mrf.mxu0
  %v620 = vadd.f32 0.0, %v619
  %621 = vmatmul.f32.gmra.mxu0 %v464
  %v622 = vpop.f32.mrf.mxu0
  %v623 = vadd.f32 0.0, %v622
  %624 = vmatmul.f32.gmra.mxu0 %v467
  %v625 = vpop.f32.mrf.mxu0
  %v626 = vadd.f32 0.0, %v625
  %627 = vmatmul.f32.gmra.mxu0 %v470
  %v628 = vpop.f32.mrf.mxu0
  %v629 = vadd.f32 0.0, %v628
  %630 = vmatmul.f32.gmra.mxu0 %v473
  %v631 = vpop.f32.mrf.mxu0
  %v632 = vadd.f32 0.0, %v631
  %633 = vmatmul.f32.gmra.mxu0 %v476
  %v634 = vpop.f32.mrf.mxu0
  %v635 = vadd.f32 0.0, %v634
  %636 = vmatmul.f32.gmra.mxu0 %v479
  %v637 = vpop.f32.mrf.mxu0
  %v638 = vadd.f32 0.0, %v637
  %639 = vdwg.mxu0
  %v640 = vmul.f32 %v499, %v192
  %v641 = vmul.f32 %v552, %v193
  %v642 = vmul.f32 %v605, %v194
  %v643 = vmul.f32 %v502, %v195
  %v644 = vmul.f32 %v555, %v196
  %v645 = vmul.f32 %v608, %v197
  %v646 = vmul.f32 %v505, %v198
  %v647 = vmul.f32 %v558, %v199
  %v648 = vmul.f32 %v611, %v200
  %v649 = vmul.f32 %v508, %v201
  %v650 = vmul.f32 %v561, %v202
  %v651 = vmul.f32 %v614, %v203
  %v652 = vmul.f32 %v511, %v204
  %v653 = vmul.f32 %v564, %v205
  %v654 = vmul.f32 %v617, %v206
  %v655 = vmul.f32 %v514, %v207
  %v656 = vmul.f32 %v567, %v208
  %v657 = vmul.f32 %v620, %v209
  %v658 = vmul.f32 %v517, %v210
  %v659 = vmul.f32 %v570, %v211
  %v660 = vmul.f32 %v623, %v212
  %v661 = vmul.f32 %v520, %v213
  %v662 = vmul.f32 %v573, %v214
  %v663 = vmul.f32 %v626, %v215
  %v664 = vmul.f32 %v523, %v216
  %v665 = vmul.f32 %v576, %v217
  %v666 = vmul.f32 %v629, %v218
  %v667 = vmul.f32 %v526, %v219
  %v668 = vmul.f32 %v579, %v220
  %v669 = vmul.f32 %v632, %v221
  %v670 = vmul.f32 %v529, %v222
  %v671 = vmul.f32 %v582, %v223
  %v672 = vmul.f32 %v635, %v224
  %v673 = vmul.f32 %v532, %v225
  %v674 = vmul.f32 %v585, %v226
  %v675 = vmul.f32 %v638, %v227
  %vm676 = vcmask 785408
  %v678 = vsel %vm676, %v361, 0
  %v681 = vsel %vm676, %v364, 0
  %683 = vmatpush.msra.mxu0 0.0
  %684 = vmatpush.msra.mxu0 0.0
  %685 = vmatpush.msra.mxu0 0.0
  %686 = vmatpush.msra.mxu0 0.0
  %687 = vmatpush.msra.mxu0 %v673
  %688 = vmatpush.msra.mxu0 %v670
  %689 = vmatpush.msra.mxu0 %v667
  %690 = vmatpush.msra.mxu0 %v664
  %691 = vmatpush.msra.mxu0 %v661
  %692 = vmatpush.msra.mxu0 %v658
  %693 = vmatpush.msra.mxu0 %v655
  %694 = vmatpush.msra.mxu0 %v652
  %695 = vmatpush.msra.mxu0 %v649
  %696 = vmatpush.msra.mxu0 %v646
  %697 = vmatpush.msra.mxu0 %v643
  %698 = vmatpush.msra.mxu0 %v640
  %699 = vmatmul.f32.gmra.mxu0 %v678
  %v700 = vpop.f32.mrf.mxu0
  %v701 = vadd.f32 0.0, %v700
  %702 = vmatmul.f32.gmra.mxu0 %v681
  %v703 = vpop.f32.mrf.mxu0
  %v704 = vadd.f32 0.0, %v703
  %705 = vdwg.mxu0
  %706 = vmatpush.msra.mxu0 0.0
  %707 = vmatpush.msra.mxu0 0.0
  %708 = vmatpush.msra.mxu0 0.0
  %709 = vmatpush.msra.mxu0 0.0
  %710 = vmatpush.msra.mxu0 %v674
  %711 = vmatpush.msra.mxu0 %v671
  %712 = vmatpush.msra.mxu0 %v668
  %713 = vmatpush.msra.mxu0 %v665
  %714 = vmatpush.msra.mxu0 %v662
  %715 = vmatpush.msra.mxu0 %v659
  %716 = vmatpush.msra.mxu0 %v656
  %717 = vmatpush.msra.mxu0 %v653
  %718 = vmatpush.msra.mxu0 %v650
  %719 = vmatpush.msra.mxu0 %v647
  %720 = vmatpush.msra.mxu0 %v644
  %721 = vmatpush.msra.mxu0 %v641
  %722 = vmatmul.f32.gmra.mxu0 %v678
  %v723 = vpop.f32.mrf.mxu0
  %v724 = vadd.f32 0.0, %v723
  %725 = vmatmul.f32.gmra.mxu0 %v681
  %v726 = vpop.f32.mrf.mxu0
  %v727 = vadd.f32 0.0, %v726
  %728 = vdwg.mxu0
  %729 = vmatpush.msra.mxu0 0.0
  %730 = vmatpush.msra.mxu0 0.0
  %731 = vmatpush.msra.mxu0 0.0
  %732 = vmatpush.msra.mxu0 0.0
  %733 = vmatpush.msra.mxu0 %v675
  %734 = vmatpush.msra.mxu0 %v672
  %735 = vmatpush.msra.mxu0 %v669
  %736 = vmatpush.msra.mxu0 %v666
  %737 = vmatpush.msra.mxu0 %v663
  %738 = vmatpush.msra.mxu0 %v660
  %739 = vmatpush.msra.mxu0 %v657
  %740 = vmatpush.msra.mxu0 %v654
  %741 = vmatpush.msra.mxu0 %v651
  %742 = vmatpush.msra.mxu0 %v648
  %743 = vmatpush.msra.mxu0 %v645
  %744 = vmatpush.msra.mxu0 %v642
  %745 = vmatmul.f32.gmra.mxu0 %v678
  %v746 = vpop.f32.mrf.mxu0
  %v747 = vadd.f32 0.0, %v746
  %748 = vmatmul.f32.gmra.mxu0 %v681
  %v749 = vpop.f32.mrf.mxu0
  %v750 = vadd.f32 0.0, %v749
  %751 = vdwg.mxu0
  %v752 = vmax.f32 %v701, %v747
  %v753 = vmax.f32 %v752, %v724
  %754 = vmax.xlane.f32.xlu0 %v753
  %v755 = vpop.xlane.xlu0 %754
  %v756 = vmax.f32 %v704, %v750
  %v757 = vmax.f32 %v756, %v727
  %758 = vmax.xlane.f32.xlu0 %v757
  %v759 = vpop.xlane.xlu0 %758
  %v760 = vsub.f32 %v701, %v755
  %v761 = vsub.f32 %v724, %v755
  %v762 = vsub.f32 %v747, %v755
  %v763 = vsub.f32 %v704, %v759
  %v764 = vsub.f32 %v727, %v759
  %v765 = vsub.f32 %v750, %v759
  %v766 = vmul.f32 %v760, 1.442695
  %v767 = vpow.pop %v766
  %v768 = vmul.f32 %v761, 1.442695
  %v769 = vpow.pop %v768
  %v770 = vmul.f32 %v762, 1.442695
  %v771 = vpow.pop %v770
  %v772 = vmul.f32 %v763, 1.442695
  %v773 = vpow.pop %v772
  %v774 = vmul.f32 %v764, 1.442695
  %v775 = vpow.pop %v774
  %v776 = vmul.f32 %v765, 1.442695
  %v777 = vpow.pop %v776
  %v778 = vmul.f32 %v767, %v186
  %v779 = vmul.f32 %v769, %v187
  %v780 = vmul.f32 %v771, %v188
  %v781 = vmul.f32 %v773, %v189
  %v782 = vmul.f32 %v775, %v190
  %v783 = vmul.f32 %v777, %v191
  %v785 = vsel %vm444, %v276, 0
  %v788 = vsel %vm444, %v277, 0
  %v791 = vsel %vm444, %v278, 0
  %v794 = vsel %vm444, %v279, 0
  %v797 = vsel %vm444, %v280, 0
  %v800 = vsel %vm444, %v281, 0
  %v803 = vsel %vm444, %v282, 0
  %v806 = vsel %vm444, %v283, 0
  %v809 = vsel %vm444, %v284, 0
  %v812 = vsel %vm444, %v285, 0
  %v815 = vsel %vm444, %v286, 0
  %v818 = vsel %vm444, %v287, 0
  %v821 = vsel %vm444, %v288, 0
  %v824 = vsel %vm444, %v289, 0
  %v827 = vsel %vm444, %v290, 0
  %v830 = vsel %vm444, %v291, 0
  %v833 = vsel %vm444, %v292, 0
  %v836 = vsel %vm444, %v293, 0
  %v839 = vsel %vm444, %v294, 0
  %v842 = vsel %vm444, %v295, 0
  %v845 = vsel %vm444, %v296, 0
  %v848 = vsel %vm444, %v297, 0
  %v851 = vsel %vm444, %v298, 0
  %v854 = vsel %vm444, %v299, 0
  %v857 = vsel %vm444, %v300, 0
  %v860 = vsel %vm444, %v301, 0
  %v863 = vsel %vm444, %v302, 0
  %v866 = vsel %vm444, %v303, 0
  %v869 = vsel %vm444, %v304, 0
  %v872 = vsel %vm444, %v305, 0
  %v875 = vsel %vm444, %v306, 0
  %v878 = vsel %vm444, %v307, 0
  %v881 = vsel %vm444, %v308, 0
  %v884 = vsel %vm444, %v309, 0
  %v887 = vsel %vm444, %v310, 0
  %v890 = vsel %vm444, %v311, 0
  %v893 = vsel %vm444, %v312, 0
  %v896 = vsel %vm444, %v313, 0
  %v899 = vsel %vm444, %v314, 0
  %v902 = vsel %vm444, %v315, 0
  %v905 = vsel %vm444, %v316, 0
  %v908 = vsel %vm444, %v317, 0
  %v911 = vsel %vm444, %v318, 0
  %v914 = vsel %vm444, %v319, 0
  %v917 = vsel %vm444, %v320, 0
  %v920 = vsel %vm444, %v321, 0
  %v923 = vsel %vm444, %v322, 0
  %v926 = vsel %vm444, %v323, 0
  %928 = vmatpush.msra.mxu0 0.0
  %929 = vmatpush.msra.mxu0 0.0
  %930 = vmatpush.msra.mxu0 0.0
  %931 = vmatpush.msra.mxu0 0.0
  %932 = vmatpush.msra.mxu0 0.0
  %933 = vmatpush.msra.mxu0 0.0
  %934 = vmatpush.msra.mxu0 0.0
  %935 = vmatpush.msra.mxu0 0.0
  %936 = vmatpush.msra.mxu0 0.0
  %937 = vmatpush.msra.mxu0 0.0
  %938 = vmatpush.msra.mxu0 0.0
  %939 = vmatpush.msra.mxu0 0.0
  %940 = vmatpush.msra.mxu0 0.0
  %941 = vmatpush.msra.mxu0 0.0
  %942 = vmatpush.msra.mxu0 %v410
  %943 = vmatpush.msra.mxu0 %v407
  %944 = vmatmul.f32.gmra.mxu0 %v785
  %v945 = vpop.f32.mrf.mxu0
  %v946 = vadd.f32 0.0, %v945
  %947 = vmatmul.f32.gmra.mxu0 %v788
  %v948 = vpop.f32.mrf.mxu0
  %v949 = vadd.f32 0.0, %v948
  %950 = vmatmul.f32.gmra.mxu0 %v791
  %v951 = vpop.f32.mrf.mxu0
  %v952 = vadd.f32 0.0, %v951
  %953 = vmatmul.f32.gmra.mxu0 %v794
  %v954 = vpop.f32.mrf.mxu0
  %v955 = vadd.f32 0.0, %v954
  %956 = vmatmul.f32.gmra.mxu0 %v797
  %v957 = vpop.f32.mrf.mxu0
  %v958 = vadd.f32 0.0, %v957
  %959 = vmatmul.f32.gmra.mxu0 %v800
  %v960 = vpop.f32.mrf.mxu0
  %v961 = vadd.f32 0.0, %v960
  %962 = vmatmul.f32.gmra.mxu0 %v803
  %v963 = vpop.f32.mrf.mxu0
  %v964 = vadd.f32 0.0, %v963
  %965 = vmatmul.f32.gmra.mxu0 %v806
  %v966 = vpop.f32.mrf.mxu0
  %v967 = vadd.f32 0.0, %v966
  %968 = vmatmul.f32.gmra.mxu0 %v809
  %v969 = vpop.f32.mrf.mxu0
  %v970 = vadd.f32 0.0, %v969
  %971 = vmatmul.f32.gmra.mxu0 %v812
  %v972 = vpop.f32.mrf.mxu0
  %v973 = vadd.f32 0.0, %v972
  %974 = vmatmul.f32.gmra.mxu0 %v815
  %v975 = vpop.f32.mrf.mxu0
  %v976 = vadd.f32 0.0, %v975
  %977 = vmatmul.f32.gmra.mxu0 %v818
  %v978 = vpop.f32.mrf.mxu0
  %v979 = vadd.f32 0.0, %v978
  %980 = vmatmul.f32.gmra.mxu0 %v821
  %v981 = vpop.f32.mrf.mxu0
  %v982 = vadd.f32 0.0, %v981
  %983 = vmatmul.f32.gmra.mxu0 %v824
  %v984 = vpop.f32.mrf.mxu0
  %v985 = vadd.f32 0.0, %v984
  %986 = vmatmul.f32.gmra.mxu0 %v827
  %v987 = vpop.f32.mrf.mxu0
  %v988 = vadd.f32 0.0, %v987
  %989 = vmatmul.f32.gmra.mxu0 %v830
  %v990 = vpop.f32.mrf.mxu0
  %v991 = vadd.f32 0.0, %v990
  %992 = vmatmul.f32.gmra.mxu0 %v833
  %v993 = vpop.f32.mrf.mxu0
  %v994 = vadd.f32 0.0, %v993
  %995 = vmatmul.f32.gmra.mxu0 %v836
  %v996 = vpop.f32.mrf.mxu0
  %v997 = vadd.f32 0.0, %v996
  %998 = vmatmul.f32.gmra.mxu0 %v839
  %v999 = vpop.f32.mrf.mxu0
  %v1000 = vadd.f32 0.0, %v999
  %1001 = vmatmul.f32.gmra.mxu0 %v842
  %v1002 = vpop.f32.mrf.mxu0
  %v1003 = vadd.f32 0.0, %v1002
  %1004 = vmatmul.f32.gmra.mxu0 %v845
  %v1005 = vpop.f32.mrf.mxu0
  %v1006 = vadd.f32 0.0, %v1005
  %1007 = vmatmul.f32.gmra.mxu0 %v848
  %v1008 = vpop.f32.mrf.mxu0
  %v1009 = vadd.f32 0.0, %v1008
  %1010 = vmatmul.f32.gmra.mxu0 %v851
  %v1011 = vpop.f32.mrf.mxu0
  %v1012 = vadd.f32 0.0, %v1011
  %1013 = vmatmul.f32.gmra.mxu0 %v854
  %v1014 = vpop.f32.mrf.mxu0
  %v1015 = vadd.f32 0.0, %v1014
  %1016 = vmatmul.f32.gmra.mxu0 %v857
  %v1017 = vpop.f32.mrf.mxu0
  %v1018 = vadd.f32 0.0, %v1017
  %1019 = vmatmul.f32.gmra.mxu0 %v860
  %v1020 = vpop.f32.mrf.mxu0
  %v1021 = vadd.f32 0.0, %v1020
  %1022 = vmatmul.f32.gmra.mxu0 %v863
  %v1023 = vpop.f32.mrf.mxu0
  %v1024 = vadd.f32 0.0, %v1023
  %1025 = vmatmul.f32.gmra.mxu0 %v866
  %v1026 = vpop.f32.mrf.mxu0
  %v1027 = vadd.f32 0.0, %v1026
  %1028 = vmatmul.f32.gmra.mxu0 %v869
  %v1029 = vpop.f32.mrf.mxu0
  %v1030 = vadd.f32 0.0, %v1029
  %1031 = vmatmul.f32.gmra.mxu0 %v872
  %v1032 = vpop.f32.mrf.mxu0
  %v1033 = vadd.f32 0.0, %v1032
  %1034 = vmatmul.f32.gmra.mxu0 %v875
  %v1035 = vpop.f32.mrf.mxu0
  %v1036 = vadd.f32 0.0, %v1035
  %1037 = vmatmul.f32.gmra.mxu0 %v878
  %v1038 = vpop.f32.mrf.mxu0
  %v1039 = vadd.f32 0.0, %v1038
  %1040 = vmatmul.f32.gmra.mxu0 %v881
  %v1041 = vpop.f32.mrf.mxu0
  %v1042 = vadd.f32 0.0, %v1041
  %1043 = vmatmul.f32.gmra.mxu0 %v884
  %v1044 = vpop.f32.mrf.mxu0
  %v1045 = vadd.f32 0.0, %v1044
  %1046 = vmatmul.f32.gmra.mxu0 %v887
  %v1047 = vpop.f32.mrf.mxu0
  %v1048 = vadd.f32 0.0, %v1047
  %1049 = vmatmul.f32.gmra.mxu0 %v890
  %v1050 = vpop.f32.mrf.mxu0
  %v1051 = vadd.f32 0.0, %v1050
  %1052 = vmatmul.f32.gmra.mxu0 %v893
  %v1053 = vpop.f32.mrf.mxu0
  %v1054 = vadd.f32 0.0, %v1053
  %1055 = vmatmul.f32.gmra.mxu0 %v896
  %v1056 = vpop.f32.mrf.mxu0
  %v1057 = vadd.f32 0.0, %v1056
  %1058 = vmatmul.f32.gmra.mxu0 %v899
  %v1059 = vpop.f32.mrf.mxu0
  %v1060 = vadd.f32 0.0, %v1059
  %1061 = vmatmul.f32.gmra.mxu0 %v902
  %v1062 = vpop.f32.mrf.mxu0
  %v1063 = vadd.f32 0.0, %v1062
  %1064 = vmatmul.f32.gmra.mxu0 %v905
  %v1065 = vpop.f32.mrf.mxu0
  %v1066 = vadd.f32 0.0, %v1065
  %1067 = vmatmul.f32.gmra.mxu0 %v908
  %v1068 = vpop.f32.mrf.mxu0
  %v1069 = vadd.f32 0.0, %v1068
  %1070 = vmatmul.f32.gmra.mxu0 %v911
  %v1071 = vpop.f32.mrf.mxu0
  %v1072 = vadd.f32 0.0, %v1071
  %1073 = vmatmul.f32.gmra.mxu0 %v914
  %v1074 = vpop.f32.mrf.mxu0
  %v1075 = vadd.f32 0.0, %v1074
  %1076 = vmatmul.f32.gmra.mxu0 %v917
  %v1077 = vpop.f32.mrf.mxu0
  %v1078 = vadd.f32 0.0, %v1077
  %1079 = vmatmul.f32.gmra.mxu0 %v920
  %v1080 = vpop.f32.mrf.mxu0
  %v1081 = vadd.f32 0.0, %v1080
  %1082 = vmatmul.f32.gmra.mxu0 %v923
  %v1083 = vpop.f32.mrf.mxu0
  %v1084 = vadd.f32 0.0, %v1083
  %1085 = vmatmul.f32.gmra.mxu0 %v926
  %v1086 = vpop.f32.mrf.mxu0
  %v1087 = vadd.f32 0.0, %v1086
  %1088 = vdwg.mxu0
  %v1089 = vmul.f32 %v946, %v228
  %v1090 = vmul.f32 %v949, %v229
  %v1091 = vmul.f32 %v952, %v230
  %v1092 = vmul.f32 %v955, %v231
  %v1093 = vmul.f32 %v958, %v232
  %v1094 = vmul.f32 %v961, %v233
  %v1095 = vmul.f32 %v964, %v234
  %v1096 = vmul.f32 %v967, %v235
  %v1097 = vmul.f32 %v970, %v236
  %v1098 = vmul.f32 %v973, %v237
  %v1099 = vmul.f32 %v976, %v238
  %v1100 = vmul.f32 %v979, %v239
  %v1101 = vmul.f32 %v982, %v240
  %v1102 = vmul.f32 %v985, %v241
  %v1103 = vmul.f32 %v988, %v242
  %v1104 = vmul.f32 %v991, %v243
  %v1105 = vmul.f32 %v994, %v244
  %v1106 = vmul.f32 %v997, %v245
  %v1107 = vmul.f32 %v1000, %v246
  %v1108 = vmul.f32 %v1003, %v247
  %v1109 = vmul.f32 %v1006, %v248
  %v1110 = vmul.f32 %v1009, %v249
  %v1111 = vmul.f32 %v1012, %v250
  %v1112 = vmul.f32 %v1015, %v251
  %v1113 = vmul.f32 %v1018, %v252
  %v1114 = vmul.f32 %v1021, %v253
  %v1115 = vmul.f32 %v1024, %v254
  %v1116 = vmul.f32 %v1027, %v255
  %v1117 = vmul.f32 %v1030, %v256
  %v1118 = vmul.f32 %v1033, %v257
  %v1119 = vmul.f32 %v1036, %v258
  %v1120 = vmul.f32 %v1039, %v259
  %v1121 = vmul.f32 %v1042, %v260
  %v1122 = vmul.f32 %v1045, %v261
  %v1123 = vmul.f32 %v1048, %v262
  %v1124 = vmul.f32 %v1051, %v263
  %v1125 = vmul.f32 %v1054, %v264
  %v1126 = vmul.f32 %v1057, %v265
  %v1127 = vmul.f32 %v1060, %v266
  %v1128 = vmul.f32 %v1063, %v267
  %v1129 = vmul.f32 %v1066, %v268
  %v1130 = vmul.f32 %v1069, %v269
  %v1131 = vmul.f32 %v1072, %v270
  %v1132 = vmul.f32 %v1075, %v271
  %v1133 = vmul.f32 %v1078, %v272
  %v1134 = vmul.f32 %v1081, %v273
  %v1135 = vmul.f32 %v1084, %v274
  %v1136 = vmul.f32 %v1087, %v275
  %1137 = vmatpush.msra.mxu0 %v1104
  %1138 = vmatpush.msra.mxu0 %v1103
  %1139 = vmatpush.msra.mxu0 %v1102
  %1140 = vmatpush.msra.mxu0 %v1101
  %1141 = vmatpush.msra.mxu0 %v1100
  %1142 = vmatpush.msra.mxu0 %v1099
  %1143 = vmatpush.msra.mxu0 %v1098
  %1144 = vmatpush.msra.mxu0 %v1097
  %1145 = vmatpush.msra.mxu0 %v1096
  %1146 = vmatpush.msra.mxu0 %v1095
  %1147 = vmatpush.msra.mxu0 %v1094
  %1148 = vmatpush.msra.mxu0 %v1093
  %1149 = vmatpush.msra.mxu0 %v1092
  %1150 = vmatpush.msra.mxu0 %v1091
  %1151 = vmatpush.msra.mxu0 %v1090
  %1152 = vmatpush.msra.mxu0 %v1089
  %1153 = vmatmul.f32.gmra.mxu0 %v778
  %v1154 = vpop.f32.mrf.mxu0
  %v1155 = vadd.f32 0.0, %v1154
  %1156 = vmatmul.f32.gmra.mxu0 %v781
  %v1157 = vpop.f32.mrf.mxu0
  %v1158 = vadd.f32 0.0, %v1157
  %1159 = vdwg.mxu0
  %1160 = vmatpush.msra.mxu0 %v1120
  %1161 = vmatpush.msra.mxu0 %v1119
  %1162 = vmatpush.msra.mxu0 %v1118
  %1163 = vmatpush.msra.mxu0 %v1117
  %1164 = vmatpush.msra.mxu0 %v1116
  %1165 = vmatpush.msra.mxu0 %v1115
  %1166 = vmatpush.msra.mxu0 %v1114
  %1167 = vmatpush.msra.mxu0 %v1113
  %1168 = vmatpush.msra.mxu0 %v1112
  %1169 = vmatpush.msra.mxu0 %v1111
  %1170 = vmatpush.msra.mxu0 %v1110
  %1171 = vmatpush.msra.mxu0 %v1109
  %1172 = vmatpush.msra.mxu0 %v1108
  %1173 = vmatpush.msra.mxu0 %v1107
  %1174 = vmatpush.msra.mxu0 %v1106
  %1175 = vmatpush.msra.mxu0 %v1105
  %1176 = vmatmul.f32.gmra.mxu0 %v779
  %v1177 = vpop.f32.mrf.mxu0
  %v1178 = vadd.f32 %v1155, %v1177
  %1179 = vmatmul.f32.gmra.mxu0 %v782
  %v1180 = vpop.f32.mrf.mxu0
  %v1181 = vadd.f32 %v1158, %v1180
  %1182 = vdwg.mxu0
  %1183 = vmatpush.msra.mxu0 %v1136
  %1184 = vmatpush.msra.mxu0 %v1135
  %1185 = vmatpush.msra.mxu0 %v1134
  %1186 = vmatpush.msra.mxu0 %v1133
  %1187 = vmatpush.msra.mxu0 %v1132
  %1188 = vmatpush.msra.mxu0 %v1131
  %1189 = vmatpush.msra.mxu0 %v1130
  %1190 = vmatpush.msra.mxu0 %v1129
  %1191 = vmatpush.msra.mxu0 %v1128
  %1192 = vmatpush.msra.mxu0 %v1127
  %1193 = vmatpush.msra.mxu0 %v1126
  %1194 = vmatpush.msra.mxu0 %v1125
  %1195 = vmatpush.msra.mxu0 %v1124
  %1196 = vmatpush.msra.mxu0 %v1123
  %1197 = vmatpush.msra.mxu0 %v1122
  %1198 = vmatpush.msra.mxu0 %v1121
  %1199 = vmatmul.f32.gmra.mxu0 %v780
  %v1200 = vpop.f32.mrf.mxu0
  %v1201 = vadd.f32 %v1178, %v1200
  %1202 = vmatmul.f32.gmra.mxu0 %v783
  %v1203 = vpop.f32.mrf.mxu0
  %v1204 = vadd.f32 %v1181, %v1203
  %1205 = vdwg.mxu0
  %1206 = vmatpush.msra.mxu0 %v243
  %1207 = vmatpush.msra.mxu0 %v242
  %1208 = vmatpush.msra.mxu0 %v241
  %1209 = vmatpush.msra.mxu0 %v240
  %1210 = vmatpush.msra.mxu0 %v239
  %1211 = vmatpush.msra.mxu0 %v238
  %1212 = vmatpush.msra.mxu0 %v237
  %1213 = vmatpush.msra.mxu0 %v236
  %1214 = vmatpush.msra.mxu0 %v235
  %1215 = vmatpush.msra.mxu0 %v234
  %1216 = vmatpush.msra.mxu0 %v233
  %1217 = vmatpush.msra.mxu0 %v232
  %1218 = vmatpush.msra.mxu0 %v231
  %1219 = vmatpush.msra.mxu0 %v230
  %1220 = vmatpush.msra.mxu0 %v229
  %1221 = vmatpush.msra.mxu0 %v228
  %1222 = vmatmul.f32.gmra.mxu0 %v778
  %v1223 = vpop.f32.mrf.mxu0
  %v1224 = vadd.f32 0.0, %v1223
  %1225 = vmatmul.f32.gmra.mxu0 %v781
  %v1226 = vpop.f32.mrf.mxu0
  %v1227 = vadd.f32 0.0, %v1226
  %1228 = vdwg.mxu0
  %1229 = vmatpush.msra.mxu0 %v259
  %1230 = vmatpush.msra.mxu0 %v258
  %1231 = vmatpush.msra.mxu0 %v257
  %1232 = vmatpush.msra.mxu0 %v256
  %1233 = vmatpush.msra.mxu0 %v255
  %1234 = vmatpush.msra.mxu0 %v254
  %1235 = vmatpush.msra.mxu0 %v253
  %1236 = vmatpush.msra.mxu0 %v252
  %1237 = vmatpush.msra.mxu0 %v251
  %1238 = vmatpush.msra.mxu0 %v250
  %1239 = vmatpush.msra.mxu0 %v249
  %1240 = vmatpush.msra.mxu0 %v248
  %1241 = vmatpush.msra.mxu0 %v247
  %1242 = vmatpush.msra.mxu0 %v246
  %1243 = vmatpush.msra.mxu0 %v245
  %1244 = vmatpush.msra.mxu0 %v244
  %1245 = vmatmul.f32.gmra.mxu0 %v779
  %v1246 = vpop.f32.mrf.mxu0
  %v1247 = vadd.f32 %v1224, %v1246
  %1248 = vmatmul.f32.gmra.mxu0 %v782
  %v1249 = vpop.f32.mrf.mxu0
  %v1250 = vadd.f32 %v1227, %v1249
  %1251 = vdwg.mxu0
  %1252 = vmatpush.msra.mxu0 %v275
  %1253 = vmatpush.msra.mxu0 %v274
  %1254 = vmatpush.msra.mxu0 %v273
  %1255 = vmatpush.msra.mxu0 %v272
  %1256 = vmatpush.msra.mxu0 %v271
  %1257 = vmatpush.msra.mxu0 %v270
  %1258 = vmatpush.msra.mxu0 %v269
  %1259 = vmatpush.msra.mxu0 %v268
  %1260 = vmatpush.msra.mxu0 %v267
  %1261 = vmatpush.msra.mxu0 %v266
  %1262 = vmatpush.msra.mxu0 %v265
  %1263 = vmatpush.msra.mxu0 %v264
  %1264 = vmatpush.msra.mxu0 %v263
  %1265 = vmatpush.msra.mxu0 %v262
  %1266 = vmatpush.msra.mxu0 %v261
  %1267 = vmatpush.msra.mxu0 %v260
  %1268 = vmatmul.f32.gmra.mxu0 %v780
  %v1269 = vpop.f32.mrf.mxu0
  %v1270 = vadd.f32 %v1247, %v1269
  %1271 = vmatmul.f32.gmra.mxu0 %v783
  %v1272 = vpop.f32.mrf.mxu0
  %v1273 = vadd.f32 %v1250, %v1272
  %1274 = vdwg.mxu0
  %v1275 = vmax.f32 %v1270, 1e-30
  %v1276 = vmax.f32 %v1273, 1e-30
  %v1277 = vrcp.pop %v1275
  %v1278 = vrcp.pop %v1276
  %v1279 = vmul.f32 %v1201, %v1277
  %v1280 = vmul.f32 %v1204, %v1278
  %v1281 = vperm.slane %v85, 1
  %v1283 = vsel %vm676, %v1279, 0
  %v1286 = vsel %vm676, %v1280, 0
  %1288 = vmatpush.msra.mxu0 0.0
  %1289 = vmatpush.msra.mxu0 0.0
  %1290 = vmatpush.msra.mxu0 0.0
  %1291 = vmatpush.msra.mxu0 0.0
  %1292 = vmatpush.msra.mxu0 %v131
  %1293 = vmatpush.msra.mxu0 %v130
  %1294 = vmatpush.msra.mxu0 %v129
  %1295 = vmatpush.msra.mxu0 %v128
  %1296 = vmatpush.msra.mxu0 %v127
  %1297 = vmatpush.msra.mxu0 %v126
  %1298 = vmatpush.msra.mxu0 %v125
  %1299 = vmatpush.msra.mxu0 %v124
  %1300 = vmatpush.msra.mxu0 %v123
  %1301 = vmatpush.msra.mxu0 %v122
  %1302 = vmatpush.msra.mxu0 %v121
  %1303 = vmatpush.msra.mxu0 %v120
  %1304 = vmatmul.f32.gmra.mxu0 %v1283
  %v1305 = vpop.f32.mrf.mxu0
  %v1306 = vadd.f32 %v1281, %v1305
  %1307 = vmatmul.f32.gmra.mxu0 %v1286
  %v1308 = vpop.f32.mrf.mxu0
  %v1309 = vadd.f32 %v1281, %v1308
  %1310 = vdwg.mxu0
  %v1311 = vadd.f32 %v106, %v1306
  %v1312 = vadd.f32 %v107, %v1309
  %v1314 = vsel %vm676, %v1311, 0
  %v1317 = vsel %vm676, %v1312, 0
  %1319 = vmatpush.msra.mxu0 0.0
  %1320 = vmatpush.msra.mxu0 0.0
  %1321 = vmatpush.msra.mxu0 0.0
  %1322 = vmatpush.msra.mxu0 0.0
  %1323 = vmatpush.msra.mxu0 %v335
  %1324 = vmatpush.msra.mxu0 %v334
  %1325 = vmatpush.msra.mxu0 %v333
  %1326 = vmatpush.msra.mxu0 %v332
  %1327 = vmatpush.msra.mxu0 %v331
  %1328 = vmatpush.msra.mxu0 %v330
  %1329 = vmatpush.msra.mxu0 %v329
  %1330 = vmatpush.msra.mxu0 %v328
  %1331 = vmatpush.msra.mxu0 %v327
  %1332 = vmatpush.msra.mxu0 %v326
  %1333 = vmatpush.msra.mxu0 %v325
  %1334 = vmatpush.msra.mxu0 %v324
  %1335 = vmatmul.f32.gmra.mxu0 %v1314
  %v1336 = vpop.f32.mrf.mxu0
  %v1337 = vadd.f32 0.0, %v1336
  %1338 = vmatmul.f32.gmra.mxu0 %v1317
  %v1339 = vpop.f32.mrf.mxu0
  %v1340 = vadd.f32 0.0, %v1339
  %1341 = vdwg.mxu0
  %v1342 = vmul.f32 %v1311, %v1311
  %v1343 = vmul.f32 %v1312, %v1312
  %v1345 = vsel %vm676, %v1342, 0
  %v1348 = vsel %vm676, %v1343, 0
  %1350 = vmatpush.msra.mxu0 0.0
  %1351 = vmatpush.msra.mxu0 0.0
  %1352 = vmatpush.msra.mxu0 0.0
  %1353 = vmatpush.msra.mxu0 0.0
  %1354 = vmatpush.msra.mxu0 %v335
  %1355 = vmatpush.msra.mxu0 %v334
  %1356 = vmatpush.msra.mxu0 %v333
  %1357 = vmatpush.msra.mxu0 %v332
  %1358 = vmatpush.msra.mxu0 %v331
  %1359 = vmatpush.msra.mxu0 %v330
  %1360 = vmatpush.msra.mxu0 %v329
  %1361 = vmatpush.msra.mxu0 %v328
  %1362 = vmatpush.msra.mxu0 %v327
  %1363 = vmatpush.msra.mxu0 %v326
  %1364 = vmatpush.msra.mxu0 %v325
  %1365 = vmatpush.msra.mxu0 %v324
  %1366 = vmatmul.f32.gmra.mxu0 %v1345
  %v1367 = vpop.f32.mrf.mxu0
  %v1368 = vadd.f32 0.0, %v1367
  %1369 = vmatmul.f32.gmra.mxu0 %v1348
  %v1370 = vpop.f32.mrf.mxu0
  %v1371 = vadd.f32 0.0, %v1370
  %1372 = vdwg.mxu0
  %v1373 = vmul.f32 %v1337, %v1337
  %v1374 = vmul.f32 %v1340, %v1340
  %v1375 = vsub.f32 %v1368, %v1373
  %v1376 = vsub.f32 %v1371, %v1374
  %v1377 = vsub.f32 %v1311, %v1337
  %v1378 = vsub.f32 %v1312, %v1340
  %v1379 = vadd.f32 %v1375, 1e-05
  %v1380 = vadd.f32 %v1376, 1e-05
  %v1381 = vrsqrt.pop %v1379
  %v1382 = vmul.f32 %v1381, %v1379
  %v1383 = vmul.f32 %v1382, %v1381
  %v1384 = vmul.f32 0.5, %v1383
  %v1385 = vsub.f32 1.5, %v1384
  %v1386 = vmul.f32 %v1381, %v1385
  %vm1387 = vweird.f32 %v1379
  %vm1388 = vweird.f32 %v1381
  %vm1389 = vmor %vm1387, %vm1388
  %v1390 = vsel %vm1389, %v1381, %v1386
  %v1391 = vrsqrt.pop %v1380
  %v1392 = vmul.f32 %v1391, %v1380
  %v1393 = vmul.f32 %v1392, %v1391
  %v1394 = vmul.f32 0.5, %v1393
  %v1395 = vsub.f32 1.5, %v1394
  %v1396 = vmul.f32 %v1391, %v1395
  %vm1397 = vweird.f32 %v1380
  %vm1398 = vweird.f32 %v1391
  %vm1399 = vmor %vm1397, %vm1398
  %v1400 = vsel %vm1399, %v1391, %v1396
  %v1401 = vmul.f32 %v1377, %v1390
  %v1402 = vmul.f32 %v1378, %v1400
  %v1403 = vperm.slane %v85, 2
  %v1404 = vmul.f32 %v1401, %v1403
  %v1405 = vmul.f32 %v1402, %v1403
  %v1406 = vperm.slane %v85, 3
  %v1407 = vadd.f32 %v1404, %v1406
  %v1408 = vadd.f32 %v1405, %v1406
  %v1409 = vperm.slane %v85, 6
  %v1410 = vperm.slane %v86, 6
  %v1412 = vsel %vm676, %v1407, 0
  %v1415 = vsel %vm676, %v1408, 0
  %1417 = vmatpush.msra.mxu0 0.0
  %1418 = vmatpush.msra.mxu0 0.0
  %1419 = vmatpush.msra.mxu0 0.0
  %1420 = vmatpush.msra.mxu0 0.0
  %1421 = vmatpush.msra.mxu0 %v154
  %1422 = vmatpush.msra.mxu0 %v152
  %1423 = vmatpush.msra.mxu0 %v150
  %1424 = vmatpush.msra.mxu0 %v148
  %1425 = vmatpush.msra.mxu0 %v146
  %1426 = vmatpush.msra.mxu0 %v144
  %1427 = vmatpush.msra.mxu0 %v142
  %1428 = vmatpush.msra.mxu0 %v140
  %1429 = vmatpush.msra.mxu0 %v138
  %1430 = vmatpush.msra.mxu0 %v136
  %1431 = vmatpush.msra.mxu0 %v134
  %1432 = vmatpush.msra.mxu0 %v132
  %1433 = vmatmul.f32.gmra.mxu0 %v1412
  %v1434 = vpop.f32.mrf.mxu0
  %v1435 = vadd.f32 %v1409, %v1434
  %1436 = vmatmul.f32.gmra.mxu0 %v1415
  %v1437 = vpop.f32.mrf.mxu0
  %v1438 = vadd.f32 %v1409, %v1437
  %1439 = vdwg.mxu0
  %1440 = vmatpush.msra.mxu0 0.0
  %1441 = vmatpush.msra.mxu0 0.0
  %1442 = vmatpush.msra.mxu0 0.0
  %1443 = vmatpush.msra.mxu0 0.0
  %1444 = vmatpush.msra.mxu0 %v155
  %1445 = vmatpush.msra.mxu0 %v153
  %1446 = vmatpush.msra.mxu0 %v151
  %1447 = vmatpush.msra.mxu0 %v149
  %1448 = vmatpush.msra.mxu0 %v147
  %1449 = vmatpush.msra.mxu0 %v145
  %1450 = vmatpush.msra.mxu0 %v143
  %1451 = vmatpush.msra.mxu0 %v141
  %1452 = vmatpush.msra.mxu0 %v139
  %1453 = vmatpush.msra.mxu0 %v137
  %1454 = vmatpush.msra.mxu0 %v135
  %1455 = vmatpush.msra.mxu0 %v133
  %1456 = vmatmul.f32.gmra.mxu0 %v1412
  %v1457 = vpop.f32.mrf.mxu0
  %v1458 = vadd.f32 %v1410, %v1457
  %1459 = vmatmul.f32.gmra.mxu0 %v1415
  %v1460 = vpop.f32.mrf.mxu0
  %v1461 = vadd.f32 %v1410, %v1460
  %1462 = vdwg.mxu0
  %v1463 = vmax.f32 %v1435, 0.0
  %v1464 = vmax.f32 %v1458, 0.0
  %v1465 = vmax.f32 %v1438, 0.0
  %v1466 = vmax.f32 %v1461, 0.0
  %v1467 = vperm.slane %v85, 7
  %v1469 = vsel %vm105, %v1464, 0
  %v1472 = vsel %vm105, %v1466, 0
  %1474 = vmatpush.msra.mxu0 %v171
  %1475 = vmatpush.msra.mxu0 %v170
  %1476 = vmatpush.msra.mxu0 %v169
  %1477 = vmatpush.msra.mxu0 %v168
  %1478 = vmatpush.msra.mxu0 %v167
  %1479 = vmatpush.msra.mxu0 %v166
  %1480 = vmatpush.msra.mxu0 %v165
  %1481 = vmatpush.msra.mxu0 %v164
  %1482 = vmatpush.msra.mxu0 %v163
  %1483 = vmatpush.msra.mxu0 %v162
  %1484 = vmatpush.msra.mxu0 %v161
  %1485 = vmatpush.msra.mxu0 %v160
  %1486 = vmatpush.msra.mxu0 %v159
  %1487 = vmatpush.msra.mxu0 %v158
  %1488 = vmatpush.msra.mxu0 %v157
  %1489 = vmatpush.msra.mxu0 %v156
  %1490 = vmatmul.f32.gmra.mxu0 %v1463
  %v1491 = vpop.f32.mrf.mxu0
  %v1492 = vadd.f32 %v1467, %v1491
  %1493 = vmatmul.f32.gmra.mxu0 %v1465
  %v1494 = vpop.f32.mrf.mxu0
  %v1495 = vadd.f32 %v1467, %v1494
  %1496 = vdwg.mxu0
  %1497 = vmatpush.msra.mxu0 0.0
  %1498 = vmatpush.msra.mxu0 0.0
  %1499 = vmatpush.msra.mxu0 0.0
  %1500 = vmatpush.msra.mxu0 0.0
  %1501 = vmatpush.msra.mxu0 0.0
  %1502 = vmatpush.msra.mxu0 0.0
  %1503 = vmatpush.msra.mxu0 0.0
  %1504 = vmatpush.msra.mxu0 0.0
  %1505 = vmatpush.msra.mxu0 %v179
  %1506 = vmatpush.msra.mxu0 %v178
  %1507 = vmatpush.msra.mxu0 %v177
  %1508 = vmatpush.msra.mxu0 %v176
  %1509 = vmatpush.msra.mxu0 %v175
  %1510 = vmatpush.msra.mxu0 %v174
  %1511 = vmatpush.msra.mxu0 %v173
  %1512 = vmatpush.msra.mxu0 %v172
  %1513 = vmatmul.f32.gmra.mxu0 %v1469
  %v1514 = vpop.f32.mrf.mxu0
  %v1515 = vadd.f32 %v1492, %v1514
  %1516 = vmatmul.f32.gmra.mxu0 %v1472
  %v1517 = vpop.f32.mrf.mxu0
  %v1518 = vadd.f32 %v1495, %v1517
  %1519 = vdwg.mxu0
  %v1520 = vadd.f32 %v1407, %v1515
  %v1521 = vadd.f32 %v1408, %v1518
  %v1523 = vsel %vm676, %v1520, 0
  %v1526 = vsel %vm676, %v1521, 0
  %1528 = vmatpush.msra.mxu0 0.0
  %1529 = vmatpush.msra.mxu0 0.0
  %1530 = vmatpush.msra.mxu0 0.0
  %1531 = vmatpush.msra.mxu0 0.0
  %1532 = vmatpush.msra.mxu0 %v335
  %1533 = vmatpush.msra.mxu0 %v334
  %1534 = vmatpush.msra.mxu0 %v333
  %1535 = vmatpush.msra.mxu0 %v332
  %1536 = vmatpush.msra.mxu0 %v331
  %1537 = vmatpush.msra.mxu0 %v330
  %1538 = vmatpush.msra.mxu0 %v329
  %1539 = vmatpush.msra.mxu0 %v328
  %1540 = vmatpush.msra.mxu0 %v327
  %1541 = vmatpush.msra.mxu0 %v326
  %1542 = vmatpush.msra.mxu0 %v325
  %1543 = vmatpush.msra.mxu0 %v324
  %1544 = vmatmul.f32.gmra.mxu0 %v1523
  %v1545 = vpop.f32.mrf.mxu0
  %v1546 = vadd.f32 0.0, %v1545
  %1547 = vmatmul.f32.gmra.mxu0 %v1526
  %v1548 = vpop.f32.mrf.mxu0
  %v1549 = vadd.f32 0.0, %v1548
  %1550 = vdwg.mxu0
  %v1551 = vmul.f32 %v1520, %v1520
  %v1552 = vmul.f32 %v1521, %v1521
  %v1554 = vsel %vm676, %v1551, 0
  %v1557 = vsel %vm676, %v1552, 0
  %1559 = vmatpush.msra.mxu0 0.0
  %1560 = vmatpush.msra.mxu0 0.0
  %1561 = vmatpush.msra.mxu0 0.0
  %1562 = vmatpush.msra.mxu0 0.0
  %1563 = vmatpush.msra.mxu0 %v335
  %1564 = vmatpush.msra.mxu0 %v334
  %1565 = vmatpush.msra.mxu0 %v333
  %1566 = vmatpush.msra.mxu0 %v332
  %1567 = vmatpush.msra.mxu0 %v331
  %1568 = vmatpush.msra.mxu0 %v330
  %1569 = vmatpush.msra.mxu0 %v329
  %1570 = vmatpush.msra.mxu0 %v328
  %1571 = vmatpush.msra.mxu0 %v327
  %1572 = vmatpush.msra.mxu0 %v326
  %1573 = vmatpush.msra.mxu0 %v325
  %1574 = vmatpush.msra.mxu0 %v324
  %1575 = vmatmul.f32.gmra.mxu0 %v1554
  %v1576 = vpop.f32.mrf.mxu0
  %v1577 = vadd.f32 0.0, %v1576
  %1578 = vmatmul.f32.gmra.mxu0 %v1557
  %v1579 = vpop.f32.mrf.mxu0
  %v1580 = vadd.f32 0.0, %v1579
  %1581 = vdwg.mxu0
  %v1582 = vmul.f32 %v1546, %v1546
  %v1583 = vmul.f32 %v1549, %v1549
  %v1584 = vsub.f32 %v1577, %v1582
  %v1585 = vsub.f32 %v1580, %v1583
  %v1586 = vsub.f32 %v1520, %v1546
  %v1587 = vsub.f32 %v1521, %v1549
  %v1588 = vadd.f32 %v1584, 1e-05
  %v1589 = vadd.f32 %v1585, 1e-05
  %v1590 = vrsqrt.pop %v1588
  %v1591 = vmul.f32 %v1590, %v1588
  %v1592 = vmul.f32 %v1591, %v1590
  %v1593 = vmul.f32 0.5, %v1592
  %v1594 = vsub.f32 1.5, %v1593
  %v1595 = vmul.f32 %v1590, %v1594
  %vm1596 = vweird.f32 %v1588
  %vm1597 = vweird.f32 %v1590
  %vm1598 = vmor %vm1596, %vm1597
  %v1599 = vsel %vm1598, %v1590, %v1595
  %v1600 = vrsqrt.pop %v1589
  %v1601 = vmul.f32 %v1600, %v1589
  %v1602 = vmul.f32 %v1601, %v1600
  %v1603 = vmul.f32 0.5, %v1602
  %v1604 = vsub.f32 1.5, %v1603
  %v1605 = vmul.f32 %v1600, %v1604
  %vm1606 = vweird.f32 %v1589
  %vm1607 = vweird.f32 %v1600
  %vm1608 = vmor %vm1606, %vm1607
  %v1609 = vsel %vm1608, %v1600, %v1605
  %v1610 = vmul.f32 %v1586, %v1599
  %v1611 = vmul.f32 %v1587, %v1609
  %v1612 = vperm.slane %v85, 4
  %v1613 = vmul.f32 %v1610, %v1612
  %v1614 = vmul.f32 %v1611, %v1612
  %v1615 = vperm.slane %v85, 5
  %v1616 = vadd.f32 %v1613, %v1615
  %v1617 = vadd.f32 %v1614, %v1615
  %v1618 = vld [vmem:[%s8] sm:$0xff]
  %v1619 = vld [vmem:[%s8 + $0x8] sm:$0xff]
  %v1620 = vld [vmem:[%s8 + $0x10] sm:$0xff]
  %v1621 = vld [vmem:[%s8 + $0x18] sm:$0xff]
  %v1622 = vld [vmem:[%s8 + $0x20] sm:$0xff]
  %v1623 = vld [vmem:[%s8 + $0x28] sm:$0xff]
  %v1624 = vld [vmem:[%s8 + $0x30] sm:$0xff]
  %v1625 = vld [vmem:[%s8 + $0x38] sm:$0xff]
  %v1626 = vld [vmem:[%s8 + $0x40] sm:$0xff]
  %v1627 = vld [vmem:[%s8 + $0x48] sm:$0xff]
  %v1628 = vld [vmem:[%s8 + $0x50] sm:$0xff]
  %v1629 = vld [vmem:[%s8 + $0x58] sm:$0xff]
  %v1630 = vld [vmem:[%s9 + $0x1] sm:$0x1]
  %v1631 = vperm.slane %v1630, 0
  %v1633 = vsel %vm676, %v1616, 0
  %v1636 = vsel %vm676, %v1617, 0
  %1638 = vmatpush.msra.mxu0 0.0
  %1639 = vmatpush.msra.mxu0 0.0
  %1640 = vmatpush.msra.mxu0 0.0
  %1641 = vmatpush.msra.mxu0 0.0
  %1642 = vmatpush.msra.mxu0 %v1629
  %1643 = vmatpush.msra.mxu0 %v1628
  %1644 = vmatpush.msra.mxu0 %v1627
  %1645 = vmatpush.msra.mxu0 %v1626
  %1646 = vmatpush.msra.mxu0 %v1625
  %1647 = vmatpush.msra.mxu0 %v1624
  %1648 = vmatpush.msra.mxu0 %v1623
  %1649 = vmatpush.msra.mxu0 %v1622
  %1650 = vmatpush.msra.mxu0 %v1621
  %1651 = vmatpush.msra.mxu0 %v1620
  %1652 = vmatpush.msra.mxu0 %v1619
  %1653 = vmatpush.msra.mxu0 %v1618
  %1654 = vmatmul.f32.gmra.mxu0 %v1633
  %v1655 = vpop.f32.mrf.mxu0
  %v1656 = vadd.f32 %v1631, %v1655
  %1657 = vmatmul.f32.gmra.mxu0 %v1636
  %v1658 = vpop.f32.mrf.mxu0
  %v1659 = vadd.f32 %v1631, %v1658
  %1660 = vdwg.mxu0
  %v1661 = vld [vmem:[%s4] sm:$0xff]
  %v1662 = vld [vmem:[%s4 + $0x8] sm:$0xff]
  %v1663 = vld [vmem:[%s4 + $0x10] sm:$0xff]
  %v1664 = vld [vmem:[%s4 + $0x18] sm:$0xff]
  %v1665 = vld [vmem:[%s4 + $0x20] sm:$0xff]
  %v1666 = vld [vmem:[%s4 + $0x28] sm:$0xff]
  %v1667 = vld [vmem:[%s4 + $0x30] sm:$0xff]
  %v1668 = vld [vmem:[%s4 + $0x38] sm:$0xff]
  %v1669 = vld [vmem:[%s4 + $0x40] sm:$0xff]
  %v1670 = vld [vmem:[%s4 + $0x48] sm:$0xff]
  %v1671 = vld [vmem:[%s4 + $0x50] sm:$0xff]
  %v1672 = vld [vmem:[%s4 + $0x58] sm:$0xff]
  %v1673 = vld [vmem:[%s7] sm:$0xff]
  %v1674 = vld [vmem:[%s5] sm:$0xff]
  %v1675 = vld [vmem:[%s5 + $0x8] sm:$0xff]
  %v1676 = vld [vmem:[%s5 + $0x10] sm:$0xff]
  %v1677 = vld [vmem:[%s5 + $0x18] sm:$0xff]
  %v1678 = vld [vmem:[%s5 + $0x20] sm:$0xff]
  %v1679 = vld [vmem:[%s5 + $0x28] sm:$0xff]
  %v1680 = vld [vmem:[%s5 + $0x30] sm:$0xff]
  %v1681 = vld [vmem:[%s5 + $0x38] sm:$0xff]
  %v1682 = vld [vmem:[%s10] sm:$0xff]
  %v1683 = vld [vmem:[%s10 + $0x38] sm:$0xff]
  %v1684 = vld [vmem:[%s10 + $0x18] sm:$0xff]
  %v1685 = vld [vmem:[%s10 + $0x50] sm:$0xff]
  %v1686 = vld [vmem:[%s11] sm:$0xff]
  %v1687 = vld [vmem:[%s11 + $0x20] sm:$0xff]
  %v1688 = vld [vmem:[%s11 + $0x40] sm:$0xff]
  %v1689 = vld [vmem:[%s11 + $0x60] sm:$0xff]
  %v1690 = vld [vmem:[%s12] sm:$0xff]
  %v1691 = vld [vmem:[%s12 + $0x10] sm:$0xff]
  %v1692 = vld [vmem:[%s12 + $0x20] sm:$0xff]
  %v1693 = vld [vmem:[%s12 + $0x30] sm:$0xff]
  %v1694 = vld [vmem:[%s12 + $0x40] sm:$0xff]
  %v1695 = vld [vmem:[%s12 + $0x50] sm:$0xff]
  %v1696 = vld [vmem:[%s12 + $0x60] sm:$0xff]
  %v1697 = vld [vmem:[%s12 + $0x70] sm:$0xff]
  %v1698 = vld [vmem:[%s12 + $0x80] sm:$0xff]
  %v1699 = vld [vmem:[%s12 + $0x90] sm:$0xff]
  %v1700 = vld [vmem:[%s12 + $0xa0] sm:$0xff]
  %v1701 = vld [vmem:[%s12 + $0xb0] sm:$0xff]
  %v1702 = vld [vmem:[%s12 + $0xc0] sm:$0xff]
  %v1703 = vld [vmem:[%s12 + $0xd0] sm:$0xff]
  %v1704 = vld [vmem:[%s12 + $0xe0] sm:$0xff]
  %v1705 = vld [vmem:[%s12 + $0xf0] sm:$0xff]
  %v1706 = vld [vmem:[%s12 + $0x8] sm:$0xff]
  %v1707 = vld [vmem:[%s12 + $0x18] sm:$0xff]
  %v1708 = vld [vmem:[%s12 + $0x28] sm:$0xff]
  %v1709 = vld [vmem:[%s12 + $0x38] sm:$0xff]
  %v1710 = vld [vmem:[%s12 + $0x48] sm:$0xff]
  %v1711 = vld [vmem:[%s12 + $0x58] sm:$0xff]
  %v1712 = vld [vmem:[%s12 + $0x68] sm:$0xff]
  %v1713 = vld [vmem:[%s12 + $0x78] sm:$0xff]
  %v1714 = vld [vmem:[%s12 + $0x88] sm:$0xff]
  %v1715 = vld [vmem:[%s12 + $0x98] sm:$0xff]
  %v1716 = vld [vmem:[%s12 + $0xa8] sm:$0xff]
  %v1717 = vld [vmem:[%s12 + $0xb8] sm:$0xff]
  %v1718 = vld [vmem:[%s12 + $0xc8] sm:$0xff]
  %v1719 = vld [vmem:[%s12 + $0xd8] sm:$0xff]
  %v1720 = vld [vmem:[%s12 + $0xe8] sm:$0xff]
  %v1721 = vld [vmem:[%s12 + $0xf8] sm:$0xff]
  %v1722 = vperm.slane %v1673, 0
  %v1724 = vsel %vm102, %v1656, 0
  %v1727 = vsel %vm102, %v1659, 0
  %1729 = vmatpush.msra.mxu0 0.0
  %1730 = vmatpush.msra.mxu0 0.0
  %1731 = vmatpush.msra.mxu0 0.0
  %1732 = vmatpush.msra.mxu0 0.0
  %1733 = vmatpush.msra.mxu0 0.0
  %1734 = vmatpush.msra.mxu0 0.0
  %1735 = vmatpush.msra.mxu0 0.0
  %1736 = vmatpush.msra.mxu0 0.0
  %1737 = vmatpush.msra.mxu0 0.0
  %1738 = vmatpush.msra.mxu0 0.0
  %1739 = vmatpush.msra.mxu0 0.0
  %1740 = vmatpush.msra.mxu0 0.0
  %1741 = vmatpush.msra.mxu0 %v1670
  %1742 = vmatpush.msra.mxu0 %v1667
  %1743 = vmatpush.msra.mxu0 %v1664
  %1744 = vmatpush.msra.mxu0 %v1661
  %1745 = vmatmul.f32.gmra.mxu0 %v1724
  %v1746 = vpop.f32.mrf.mxu0
  %v1747 = vadd.f32 %v1722, %v1746
  %1748 = vmatmul.f32.gmra.mxu0 %v1727
  %v1749 = vpop.f32.mrf.mxu0
  %v1750 = vadd.f32 %v1722, %v1749
  %1751 = vdwg.mxu0
  %1754 = vrot.lane.b32.xlu0 %v1747, 96
  %v1755 = vpop.permute.xlu0 %1754
  %1756 = vrot.lane.b32.xlu0 %v1750, 96
  %v1757 = vpop.permute.xlu0 %1756
  %1760 = vxpose.xlu0.b32.start [1/16] %v1755, 128
  %1761 = vxpose.xlu0.b32.cont [2/16] %v1757, 128
  %1762 = vxpose.xlu0.b32.cont [3/16] 0.0, 128
  %1763 = vxpose.xlu0.b32.cont [4/16] 0.0, 128
  %1764 = vxpose.xlu0.b32.cont [5/16] 0.0, 128
  %1765 = vxpose.xlu0.b32.cont [6/16] 0.0, 128
  %1766 = vxpose.xlu0.b32.cont [7/16] 0.0, 128
  %1767 = vxpose.xlu0.b32.cont [8/16] 0.0, 128
  %1768 = vxpose.xlu0.b32.cont [9/16] 0.0, 128
  %1769 = vxpose.xlu0.b32.cont [10/16] 0.0, 128
  %1770 = vxpose.xlu0.b32.cont [11/16] 0.0, 128
  %1771 = vxpose.xlu0.b32.cont [12/16] 0.0, 128
  %1772 = vxpose.xlu0.b32.cont [13/16] 0.0, 128
  %1773 = vxpose.xlu0.b32.cont [14/16] 0.0, 128
  %1774 = vxpose.xlu0.b32.cont [15/16] 0.0, 128
  %1775 = vxpose.xlu0.b32.end [16/16] 0.0, 128
  %v1776 = vpop.trf.xlu0
  %v1777 = vpop.trf.xlu0
  %v1778 = vpop.trf.xlu0
  %v1779 = vpop.trf.xlu0
  %v1780 = vpop.trf.xlu0
  %v1781 = vpop.trf.xlu0
  %v1782 = vpop.trf.xlu0
  %v1783 = vpop.trf.xlu0
  %v1784 = vpop.trf.xlu0
  %v1785 = vpop.trf.xlu0
  %v1786 = vpop.trf.xlu0
  %v1787 = vpop.trf.xlu0
  %v1788 = vpop.trf.xlu0
  %v1789 = vpop.trf.xlu0
  %v1790 = vpop.trf.xlu0
  %v1791 = vpop.trf.xlu0
  %v1793 = vsel %vm444, %v1776, 0
  %v1796 = vsel %vm444, %v1777, 0
  %v1799 = vsel %vm444, %v1778, 0
  %v1802 = vsel %vm444, %v1779, 0
  %1804 = vmatpush.msra.mxu0 0.0
  %1805 = vmatpush.msra.mxu0 0.0
  %1806 = vmatpush.msra.mxu0 0.0
  %1807 = vmatpush.msra.mxu0 0.0
  %1808 = vmatpush.msra.mxu0 0.0
  %1809 = vmatpush.msra.mxu0 0.0
  %1810 = vmatpush.msra.mxu0 0.0
  %1811 = vmatpush.msra.mxu0 0.0
  %1812 = vmatpush.msra.mxu0 0.0
  %1813 = vmatpush.msra.mxu0 0.0
  %1814 = vmatpush.msra.mxu0 0.0
  %1815 = vmatpush.msra.mxu0 0.0
  %1816 = vmatpush.msra.mxu0 0.0
  %1817 = vmatpush.msra.mxu0 0.0
  %1818 = vmatpush.msra.mxu0 %v1683
  %1819 = vmatpush.msra.mxu0 %v1682
  %1820 = vmatmul.f32.gmra.mxu0 %v1793
  %v1821 = vpop.f32.mrf.mxu0
  %v1822 = vadd.f32 0.0, %v1821
  %1823 = vmatmul.f32.gmra.mxu0 %v1796
  %v1824 = vpop.f32.mrf.mxu0
  %v1825 = vadd.f32 0.0, %v1824
  %1826 = vmatmul.f32.gmra.mxu0 %v1799
  %v1827 = vpop.f32.mrf.mxu0
  %v1828 = vadd.f32 0.0, %v1827
  %1829 = vmatmul.f32.gmra.mxu0 %v1802
  %v1830 = vpop.f32.mrf.mxu0
  %v1831 = vadd.f32 0.0, %v1830
  %1832 = vdwg.mxu0
  %v1833 = vmul.f32 %v1822, %v1686
  %v1834 = vmul.f32 %v1825, %v1687
  %v1835 = vmul.f32 %v1828, %v1688
  %v1836 = vmul.f32 %v1831, %v1689
  %v1837 = vsel %vm102, %v1747, 0
  %v1839 = vsel %vm102, %v1750, 0
  %1841 = vmatpush.msra.mxu0 0.0
  %1842 = vmatpush.msra.mxu0 0.0
  %1843 = vmatpush.msra.mxu0 0.0
  %1844 = vmatpush.msra.mxu0 0.0
  %1845 = vmatpush.msra.mxu0 0.0
  %1846 = vmatpush.msra.mxu0 0.0
  %1847 = vmatpush.msra.mxu0 0.0
  %1848 = vmatpush.msra.mxu0 0.0
  %1849 = vmatpush.msra.mxu0 0.0
  %1850 = vmatpush.msra.mxu0 0.0
  %1851 = vmatpush.msra.mxu0 0.0
  %1852 = vmatpush.msra.mxu0 0.0
  %1853 = vmatpush.msra.mxu0 %v1836
  %1854 = vmatpush.msra.mxu0 %v1835
  %1855 = vmatpush.msra.mxu0 %v1834
  %1856 = vmatpush.msra.mxu0 %v1833
  %1857 = vmatmul.f32.gmra.mxu0 %v1837
  %v1858 = vpop.f32.mrf.mxu0
  %v1859 = vadd.f32 0.0, %v1858
  %1860 = vmatmul.f32.gmra.mxu0 %v1839
  %v1861 = vpop.f32.mrf.mxu0
  %v1862 = vadd.f32 0.0, %v1861
  %1863 = vdwg.mxu0
  %1864 = vmax.xlane.f32.xlu0 %v1859
  %v1865 = vpop.xlane.xlu0 %1864
  %1866 = vmax.xlane.f32.xlu0 %v1862
  %v1867 = vpop.xlane.xlu0 %1866
  %v1868 = vsub.f32 %v1859, %v1865
  %v1869 = vsub.f32 %v1862, %v1867
  %v1870 = vmul.f32 %v1868, 1.442695
  %v1871 = vpow.pop %v1870
  %v1872 = vmul.f32 %v1869, 1.442695
  %v1873 = vpow.pop %v1872
  %v1874 = vmul.f32 %v1871, %v1684
  %v1875 = vmul.f32 %v1873, %v1685
  %1876 = vrot.lane.b32.xlu0 %v1747, 64
  %v1877 = vpop.permute.xlu0 %1876
  %1878 = vrot.lane.b32.xlu0 %v1750, 64
  %v1879 = vpop.permute.xlu0 %1878
  %v1883 = vsel %vm444, %v1706, 0
  %v1886 = vsel %vm444, %v1707, 0
  %v1889 = vsel %vm444, %v1708, 0
  %v1892 = vsel %vm444, %v1709, 0
  %v1895 = vsel %vm444, %v1710, 0
  %v1898 = vsel %vm444, %v1711, 0
  %v1901 = vsel %vm444, %v1712, 0
  %v1904 = vsel %vm444, %v1713, 0
  %v1907 = vsel %vm444, %v1714, 0
  %v1910 = vsel %vm444, %v1715, 0
  %v1913 = vsel %vm444, %v1716, 0
  %v1916 = vsel %vm444, %v1717, 0
  %v1919 = vsel %vm444, %v1718, 0
  %v1922 = vsel %vm444, %v1719, 0
  %v1925 = vsel %vm444, %v1720, 0
  %v1928 = vsel %vm444, %v1721, 0
  %1930 = vmatpush.msra.mxu0 0.0
  %1931 = vmatpush.msra.mxu0 0.0
  %1932 = vmatpush.msra.mxu0 0.0
  %1933 = vmatpush.msra.mxu0 0.0
  %1934 = vmatpush.msra.mxu0 0.0
  %1935 = vmatpush.msra.mxu0 0.0
  %1936 = vmatpush.msra.mxu0 0.0
  %1937 = vmatpush.msra.mxu0 0.0
  %1938 = vmatpush.msra.mxu0 0.0
  %1939 = vmatpush.msra.mxu0 0.0
  %1940 = vmatpush.msra.mxu0 0.0
  %1941 = vmatpush.msra.mxu0 0.0
  %1942 = vmatpush.msra.mxu0 0.0
  %1943 = vmatpush.msra.mxu0 0.0
  %1944 = vmatpush.msra.mxu0 %v1879
  %1945 = vmatpush.msra.mxu0 %v1877
  %1946 = vmatmul.f32.gmra.mxu0 %v1883
  %v1947 = vpop.f32.mrf.mxu0
  %v1948 = vadd.f32 0.0, %v1947
  %1949 = vmatmul.f32.gmra.mxu0 %v1886
  %v1950 = vpop.f32.mrf.mxu0
  %v1951 = vadd.f32 0.0, %v1950
  %1952 = vmatmul.f32.gmra.mxu0 %v1889
  %v1953 = vpop.f32.mrf.mxu0
  %v1954 = vadd.f32 0.0, %v1953
  %1955 = vmatmul.f32.gmra.mxu0 %v1892
  %v1956 = vpop.f32.mrf.mxu0
  %v1957 = vadd.f32 0.0, %v1956
  %1958 = vmatmul.f32.gmra.mxu0 %v1895
  %v1959 = vpop.f32.mrf.mxu0
  %v1960 = vadd.f32 0.0, %v1959
  %1961 = vmatmul.f32.gmra.mxu0 %v1898
  %v1962 = vpop.f32.mrf.mxu0
  %v1963 = vadd.f32 0.0, %v1962
  %1964 = vmatmul.f32.gmra.mxu0 %v1901
  %v1965 = vpop.f32.mrf.mxu0
  %v1966 = vadd.f32 0.0, %v1965
  %1967 = vmatmul.f32.gmra.mxu0 %v1904
  %v1968 = vpop.f32.mrf.mxu0
  %v1969 = vadd.f32 0.0, %v1968
  %1970 = vmatmul.f32.gmra.mxu0 %v1907
  %v1971 = vpop.f32.mrf.mxu0
  %v1972 = vadd.f32 0.0, %v1971
  %1973 = vmatmul.f32.gmra.mxu0 %v1910
  %v1974 = vpop.f32.mrf.mxu0
  %v1975 = vadd.f32 0.0, %v1974
  %1976 = vmatmul.f32.gmra.mxu0 %v1913
  %v1977 = vpop.f32.mrf.mxu0
  %v1978 = vadd.f32 0.0, %v1977
  %1979 = vmatmul.f32.gmra.mxu0 %v1916
  %v1980 = vpop.f32.mrf.mxu0
  %v1981 = vadd.f32 0.0, %v1980
  %1982 = vmatmul.f32.gmra.mxu0 %v1919
  %v1983 = vpop.f32.mrf.mxu0
  %v1984 = vadd.f32 0.0, %v1983
  %1985 = vmatmul.f32.gmra.mxu0 %v1922
  %v1986 = vpop.f32.mrf.mxu0
  %v1987 = vadd.f32 0.0, %v1986
  %1988 = vmatmul.f32.gmra.mxu0 %v1925
  %v1989 = vpop.f32.mrf.mxu0
  %v1990 = vadd.f32 0.0, %v1989
  %1991 = vmatmul.f32.gmra.mxu0 %v1928
  %v1992 = vpop.f32.mrf.mxu0
  %v1993 = vadd.f32 0.0, %v1992
  %1994 = vdwg.mxu0
  %v1995 = vmul.f32 %v1948, %v1690
  %v1996 = vmul.f32 %v1951, %v1691
  %v1997 = vmul.f32 %v1954, %v1692
  %v1998 = vmul.f32 %v1957, %v1693
  %v1999 = vmul.f32 %v1960, %v1694
  %v2000 = vmul.f32 %v1963, %v1695
  %v2001 = vmul.f32 %v1966, %v1696
  %v2002 = vmul.f32 %v1969, %v1697
  %v2003 = vmul.f32 %v1972, %v1698
  %v2004 = vmul.f32 %v1975, %v1699
  %v2005 = vmul.f32 %v1978, %v1700
  %v2006 = vmul.f32 %v1981, %v1701
  %v2007 = vmul.f32 %v1984, %v1702
  %v2008 = vmul.f32 %v1987, %v1703
  %v2009 = vmul.f32 %v1990, %v1704
  %v2010 = vmul.f32 %v1993, %v1705
  %2011 = vmatpush.msra.mxu0 %v2010
  %2012 = vmatpush.msra.mxu0 %v2009
  %2013 = vmatpush.msra.mxu0 %v2008
  %2014 = vmatpush.msra.mxu0 %v2007
  %2015 = vmatpush.msra.mxu0 %v2006
  %2016 = vmatpush.msra.mxu0 %v2005
  %2017 = vmatpush.msra.mxu0 %v2004
  %2018 = vmatpush.msra.mxu0 %v2003
  %2019 = vmatpush.msra.mxu0 %v2002
  %2020 = vmatpush.msra.mxu0 %v2001
  %2021 = vmatpush.msra.mxu0 %v2000
  %2022 = vmatpush.msra.mxu0 %v1999
  %2023 = vmatpush.msra.mxu0 %v1998
  %2024 = vmatpush.msra.mxu0 %v1997
  %2025 = vmatpush.msra.mxu0 %v1996
  %2026 = vmatpush.msra.mxu0 %v1995
  %2027 = vmatmul.f32.gmra.mxu0 %v1874
  %v2028 = vpop.f32.mrf.mxu0
  %v2029 = vadd.f32 0.0, %v2028
  %2030 = vmatmul.f32.gmra.mxu0 %v1875
  %v2031 = vpop.f32.mrf.mxu0
  %v2032 = vadd.f32 0.0, %v2031
  %2033 = vdwg.mxu0
  %2034 = vmatpush.msra.mxu0 %v1705
  %2035 = vmatpush.msra.mxu0 %v1704
  %2036 = vmatpush.msra.mxu0 %v1703
  %2037 = vmatpush.msra.mxu0 %v1702
  %2038 = vmatpush.msra.mxu0 %v1701
  %2039 = vmatpush.msra.mxu0 %v1700
  %2040 = vmatpush.msra.mxu0 %v1699
  %2041 = vmatpush.msra.mxu0 %v1698
  %2042 = vmatpush.msra.mxu0 %v1697
  %2043 = vmatpush.msra.mxu0 %v1696
  %2044 = vmatpush.msra.mxu0 %v1695
  %2045 = vmatpush.msra.mxu0 %v1694
  %2046 = vmatpush.msra.mxu0 %v1693
  %2047 = vmatpush.msra.mxu0 %v1692
  %2048 = vmatpush.msra.mxu0 %v1691
  %2049 = vmatpush.msra.mxu0 %v1690
  %2050 = vmatmul.f32.gmra.mxu0 %v1874
  %v2051 = vpop.f32.mrf.mxu0
  %v2052 = vadd.f32 0.0, %v2051
  %2053 = vmatmul.f32.gmra.mxu0 %v1875
  %v2054 = vpop.f32.mrf.mxu0
  %v2055 = vadd.f32 0.0, %v2054
  %2056 = vdwg.mxu0
  %v2057 = vmax.f32 %v2052, 1e-30
  %v2058 = vmax.f32 %v2055, 1e-30
  %v2059 = vrcp.pop %v2057
  %v2060 = vrcp.pop %v2058
  %v2061 = vmul.f32 %v2029, %v2059
  %v2062 = vmul.f32 %v2032, %v2060
  %v2063 = vperm.slane %v1673, 1
  %v2065 = vsel %vm102, %v2061, 0
  %v2068 = vsel %vm102, %v2062, 0
  %2070 = vmatpush.msra.mxu0 0.0
  %2071 = vmatpush.msra.mxu0 0.0
  %2072 = vmatpush.msra.mxu0 0.0
  %2073 = vmatpush.msra.mxu0 0.0
  %2074 = vmatpush.msra.mxu0 0.0
  %2075 = vmatpush.msra.mxu0 0.0
  %2076 = vmatpush.msra.mxu0 0.0
  %2077 = vmatpush.msra.mxu0 0.0
  %2078 = vmatpush.msra.mxu0 0.0
  %2079 = vmatpush.msra.mxu0 0.0
  %2080 = vmatpush.msra.mxu0 0.0
  %2081 = vmatpush.msra.mxu0 0.0
  %2082 = vmatpush.msra.mxu0 %v1671
  %2083 = vmatpush.msra.mxu0 %v1668
  %2084 = vmatpush.msra.mxu0 %v1665
  %2085 = vmatpush.msra.mxu0 %v1662
  %2086 = vmatmul.f32.gmra.mxu0 %v2065
  %v2087 = vpop.f32.mrf.mxu0
  %v2088 = vadd.f32 %v2063, %v2087
  %2089 = vmatmul.f32.gmra.mxu0 %v2068
  %v2090 = vpop.f32.mrf.mxu0
  %v2091 = vadd.f32 %v2063, %v2090
  %2092 = vdwg.mxu0
  %v2093 = vadd.f32 %v1656, %v2088
  %v2094 = vadd.f32 %v1659, %v2091
  %v2095 = vsel %vm102, %v2093, 0.0
  %2096 = vadd.xlane.f32.xlu0 %v2095
  %v2097 = vpop.xlane.xlu0 %2096
  %v2098 = vsel %vm102, %v2094, 0.0
  %2099 = vadd.xlane.f32.xlu0 %v2098
  %v2100 = vpop.xlane.xlu0 %2099
  %v2101 = vrcp.pop 32.0
  %v2102 = vmul.f32 32.0, %v2101
  %v2103 = vsub.f32 1.0, %v2102
  %v2104 = vmul.f32 %v2101, %v2103
  %v2105 = vadd.f32 %v2101, %v2104
  %vm2106 = vweird.f32 %v2101
  %v2107 = vsel %vm2106, %v2101, %v2105
  %v2108 = vmul.f32 %v2097, %v2107
  %v2109 = vmul.f32 %v2100, %v2107
  %v2110 = vmul.f32 %v2093, %v2093
  %v2111 = vmul.f32 %v2094, %v2094
  %v2112 = vsel %vm102, %v2110, 0.0
  %2113 = vadd.xlane.f32.xlu0 %v2112
  %v2114 = vpop.xlane.xlu0 %2113
  %v2115 = vsel %vm102, %v2111, 0.0
  %2116 = vadd.xlane.f32.xlu0 %v2115
  %v2117 = vpop.xlane.xlu0 %2116
  %v2118 = vmul.f32 %v2114, %v2107
  %v2119 = vmul.f32 %v2117, %v2107
  %v2120 = vmul.f32 %v2108, %v2108
  %v2121 = vmul.f32 %v2109, %v2109
  %v2122 = vsub.f32 %v2118, %v2120
  %v2123 = vsub.f32 %v2119, %v2121
  %v2124 = vsub.f32 %v2093, %v2108
  %v2125 = vsub.f32 %v2094, %v2109
  %v2126 = vadd.f32 %v2122, 1e-05
  %v2127 = vadd.f32 %v2123, 1e-05
  %v2128 = vrsqrt.pop %v2126
  %v2129 = vmul.f32 %v2128, %v2126
  %v2130 = vmul.f32 %v2129, %v2128
  %v2131 = vmul.f32 0.5, %v2130
  %v2132 = vsub.f32 1.5, %v2131
  %v2133 = vmul.f32 %v2128, %v2132
  %vm2134 = vweird.f32 %v2126
  %vm2135 = vweird.f32 %v2128
  %vm2136 = vmor %vm2134, %vm2135
  %v2137 = vsel %vm2136, %v2128, %v2133
  %v2138 = vrsqrt.pop %v2127
  %v2139 = vmul.f32 %v2138, %v2127
  %v2140 = vmul.f32 %v2139, %v2138
  %v2141 = vmul.f32 0.5, %v2140
  %v2142 = vsub.f32 1.5, %v2141
  %v2143 = vmul.f32 %v2138, %v2142
  %vm2144 = vweird.f32 %v2127
  %vm2145 = vweird.f32 %v2138
  %vm2146 = vmor %vm2144, %vm2145
  %v2147 = vsel %vm2146, %v2138, %v2143
  %v2148 = vmul.f32 %v2124, %v2137
  %v2149 = vmul.f32 %v2125, %v2147
  %v2150 = vperm.slane %v1673, 2
  %v2151 = vmul.f32 %v2148, %v2150
  %v2152 = vmul.f32 %v2149, %v2150
  %v2153 = vperm.slane %v1673, 3
  %v2154 = vadd.f32 %v2151, %v2153
  %v2155 = vadd.f32 %v2152, %v2153
  %v2156 = vperm.slane %v1673, 6
  %v2158 = vsel %vm102, %v2154, 0
  %v2161 = vsel %vm102, %v2155, 0
  %2163 = vmatpush.msra.mxu0 0.0
  %2164 = vmatpush.msra.mxu0 0.0
  %2165 = vmatpush.msra.mxu0 0.0
  %2166 = vmatpush.msra.mxu0 0.0
  %2167 = vmatpush.msra.mxu0 0.0
  %2168 = vmatpush.msra.mxu0 0.0
  %2169 = vmatpush.msra.mxu0 0.0
  %2170 = vmatpush.msra.mxu0 0.0
  %2171 = vmatpush.msra.mxu0 0.0
  %2172 = vmatpush.msra.mxu0 0.0
  %2173 = vmatpush.msra.mxu0 0.0
  %2174 = vmatpush.msra.mxu0 0.0
  %2175 = vmatpush.msra.mxu0 %v1672
  %2176 = vmatpush.msra.mxu0 %v1669
  %2177 = vmatpush.msra.mxu0 %v1666
  %2178 = vmatpush.msra.mxu0 %v1663
  %2179 = vmatmul.f32.gmra.mxu0 %v2158
  %v2180 = vpop.f32.mrf.mxu0
  %v2181 = vadd.f32 %v2156, %v2180
  %2182 = vmatmul.f32.gmra.mxu0 %v2161
  %v2183 = vpop.f32.mrf.mxu0
  %v2184 = vadd.f32 %v2156, %v2183
  %2185 = vdwg.mxu0
  %v2186 = vmax.f32 %v2181, 0.0
  %v2187 = vmax.f32 %v2184, 0.0
  %v2188 = vperm.slane %v1673, 7
  %v2190 = vsel %vm105, %v2186, 0
  %v2193 = vsel %vm105, %v2187, 0
  %2195 = vmatpush.msra.mxu0 0.0
  %2196 = vmatpush.msra.mxu0 0.0
  %2197 = vmatpush.msra.mxu0 0.0
  %2198 = vmatpush.msra.mxu0 0.0
  %2199 = vmatpush.msra.mxu0 0.0
  %2200 = vmatpush.msra.mxu0 0.0
  %2201 = vmatpush.msra.mxu0 0.0
  %2202 = vmatpush.msra.mxu0 0.0
  %2203 = vmatpush.msra.mxu0 %v1681
  %2204 = vmatpush.msra.mxu0 %v1680
  %2205 = vmatpush.msra.mxu0 %v1679
  %2206 = vmatpush.msra.mxu0 %v1678
  %2207 = vmatpush.msra.mxu0 %v1677
  %2208 = vmatpush.msra.mxu0 %v1676
  %2209 = vmatpush.msra.mxu0 %v1675
  %2210 = vmatpush.msra.mxu0 %v1674
  %2211 = vmatmul.f32.gmra.mxu0 %v2190
  %v2212 = vpop.f32.mrf.mxu0
  %v2213 = vadd.f32 %v2188, %v2212
  %2214 = vmatmul.f32.gmra.mxu0 %v2193
  %v2215 = vpop.f32.mrf.mxu0
  %v2216 = vadd.f32 %v2188, %v2215
  %2217 = vdwg.mxu0
  %v2218 = vadd.f32 %v2154, %v2213
  %v2219 = vadd.f32 %v2155, %v2216
  %v2220 = vsel %vm102, %v2218, 0.0
  %2221 = vadd.xlane.f32.xlu0 %v2220
  %v2222 = vpop.xlane.xlu0 %2221
  %v2223 = vsel %vm102, %v2219, 0.0
  %2224 = vadd.xlane.f32.xlu0 %v2223
  %v2225 = vpop.xlane.xlu0 %2224
  %v2226 = vmul.f32 %v2222, %v2107
  %v2227 = vmul.f32 %v2225, %v2107
  %v2228 = vmul.f32 %v2218, %v2218
  %v2229 = vmul.f32 %v2219, %v2219
  %v2230 = vsel %vm102, %v2228, 0.0
  %2231 = vadd.xlane.f32.xlu0 %v2230
  %v2232 = vpop.xlane.xlu0 %2231
  %v2233 = vsel %vm102, %v2229, 0.0
  %2234 = vadd.xlane.f32.xlu0 %v2233
  %v2235 = vpop.xlane.xlu0 %2234
  %v2236 = vmul.f32 %v2232, %v2107
  %v2237 = vmul.f32 %v2235, %v2107
  %v2238 = vmul.f32 %v2226, %v2226
  %v2239 = vmul.f32 %v2227, %v2227
  %v2240 = vsub.f32 %v2236, %v2238
  %v2241 = vsub.f32 %v2237, %v2239
  %v2242 = vsub.f32 %v2218, %v2226
  %v2243 = vsub.f32 %v2219, %v2227
  %v2244 = vadd.f32 %v2240, 1e-05
  %v2245 = vadd.f32 %v2241, 1e-05
  %v2246 = vrsqrt.pop %v2244
  %v2247 = vmul.f32 %v2246, %v2244
  %v2248 = vmul.f32 %v2247, %v2246
  %v2249 = vmul.f32 0.5, %v2248
  %v2250 = vsub.f32 1.5, %v2249
  %v2251 = vmul.f32 %v2246, %v2250
  %vm2252 = vweird.f32 %v2244
  %vm2253 = vweird.f32 %v2246
  %vm2254 = vmor %vm2252, %vm2253
  %v2255 = vsel %vm2254, %v2246, %v2251
  %v2256 = vrsqrt.pop %v2245
  %v2257 = vmul.f32 %v2256, %v2245
  %v2258 = vmul.f32 %v2257, %v2256
  %v2259 = vmul.f32 0.5, %v2258
  %v2260 = vsub.f32 1.5, %v2259
  %v2261 = vmul.f32 %v2256, %v2260
  %vm2262 = vweird.f32 %v2245
  %vm2263 = vweird.f32 %v2256
  %vm2264 = vmor %vm2262, %vm2263
  %v2265 = vsel %vm2264, %v2256, %v2261
  %v2266 = vmul.f32 %v2242, %v2255
  %v2267 = vmul.f32 %v2243, %v2265
  %v2268 = vperm.slane %v1673, 4
  %v2269 = vmul.f32 %v2266, %v2268
  %v2270 = vmul.f32 %v2267, %v2268
  %v2271 = vperm.slane %v1673, 5
  %v2272 = vadd.f32 %v2269, %v2271
  %v2273 = vadd.f32 %v2270, %v2271
  %s2274 = scalar_lea.vmem %s4, 96
  %v2275 = vld [vmem:[%s2274] sm:$0xff]
  %v2276 = vld [vmem:[%s2274 + $0x8] sm:$0xff]
  %v2277 = vld [vmem:[%s2274 + $0x10] sm:$0xff]
  %v2278 = vld [vmem:[%s2274 + $0x18] sm:$0xff]
  %v2279 = vld [vmem:[%s2274 + $0x20] sm:$0xff]
  %v2280 = vld [vmem:[%s2274 + $0x28] sm:$0xff]
  %v2281 = vld [vmem:[%s2274 + $0x30] sm:$0xff]
  %v2282 = vld [vmem:[%s2274 + $0x38] sm:$0xff]
  %v2283 = vld [vmem:[%s2274 + $0x40] sm:$0xff]
  %v2284 = vld [vmem:[%s2274 + $0x48] sm:$0xff]
  %v2285 = vld [vmem:[%s2274 + $0x50] sm:$0xff]
  %v2286 = vld [vmem:[%s2274 + $0x58] sm:$0xff]
  %s2287 = scalar_lea.vmem %s7, 8
  %v2288 = vld [vmem:[%s2287] sm:$0xff]
  %s2289 = scalar_lea.vmem %s5, 64
  %v2290 = vld [vmem:[%s2289] sm:$0xff]
  %v2291 = vld [vmem:[%s2289 + $0x8] sm:$0xff]
  %v2292 = vld [vmem:[%s2289 + $0x10] sm:$0xff]
  %v2293 = vld [vmem:[%s2289 + $0x18] sm:$0xff]
  %v2294 = vld [vmem:[%s2289 + $0x20] sm:$0xff]
  %v2295 = vld [vmem:[%s2289 + $0x28] sm:$0xff]
  %v2296 = vld [vmem:[%s2289 + $0x30] sm:$0xff]
  %v2297 = vld [vmem:[%s2289 + $0x38] sm:$0xff]
  %v2298 = vperm.slane %v2288, 0
  %v2300 = vsel %vm102, %v2272, 0
  %v2303 = vsel %vm102, %v2273, 0
  %2305 = vmatpush.msra.mxu0 0.0
  %2306 = vmatpush.msra.mxu0 0.0
  %2307 = vmatpush.msra.mxu0 0.0
  %2308 = vmatpush.msra.mxu0 0.0
  %2309 = vmatpush.msra.mxu0 0.0
  %2310 = vmatpush.msra.mxu0 0.0
  %2311 = vmatpush.msra.mxu0 0.0
  %2312 = vmatpush.msra.mxu0 0.0
  %2313 = vmatpush.msra.mxu0 0.0
  %2314 = vmatpush.msra.mxu0 0.0
  %2315 = vmatpush.msra.mxu0 0.0
  %2316 = vmatpush.msra.mxu0 0.0
  %2317 = vmatpush.msra.mxu0 %v2284
  %2318 = vmatpush.msra.mxu0 %v2281
  %2319 = vmatpush.msra.mxu0 %v2278
  %2320 = vmatpush.msra.mxu0 %v2275
  %2321 = vmatmul.f32.gmra.mxu0 %v2300
  %v2322 = vpop.f32.mrf.mxu0
  %v2323 = vadd.f32 %v2298, %v2322
  %2324 = vmatmul.f32.gmra.mxu0 %v2303
  %v2325 = vpop.f32.mrf.mxu0
  %v2326 = vadd.f32 %v2298, %v2325
  %2327 = vdwg.mxu0
  %2330 = vrot.lane.b32.xlu0 %v2323, 96
  %v2331 = vpop.permute.xlu0 %2330
  %2332 = vrot.lane.b32.xlu0 %v2326, 96
  %v2333 = vpop.permute.xlu0 %2332
  %2336 = vxpose.xlu0.b32.start [1/16] %v2331, 128
  %2337 = vxpose.xlu0.b32.cont [2/16] %v2333, 128
  %2338 = vxpose.xlu0.b32.cont [3/16] 0.0, 128
  %2339 = vxpose.xlu0.b32.cont [4/16] 0.0, 128
  %2340 = vxpose.xlu0.b32.cont [5/16] 0.0, 128
  %2341 = vxpose.xlu0.b32.cont [6/16] 0.0, 128
  %2342 = vxpose.xlu0.b32.cont [7/16] 0.0, 128
  %2343 = vxpose.xlu0.b32.cont [8/16] 0.0, 128
  %2344 = vxpose.xlu0.b32.cont [9/16] 0.0, 128
  %2345 = vxpose.xlu0.b32.cont [10/16] 0.0, 128
  %2346 = vxpose.xlu0.b32.cont [11/16] 0.0, 128
  %2347 = vxpose.xlu0.b32.cont [12/16] 0.0, 128
  %2348 = vxpose.xlu0.b32.cont [13/16] 0.0, 128
  %2349 = vxpose.xlu0.b32.cont [14/16] 0.0, 128
  %2350 = vxpose.xlu0.b32.cont [15/16] 0.0, 128
  %2351 = vxpose.xlu0.b32.end [16/16] 0.0, 128
  %v2352 = vpop.trf.xlu0
  %v2353 = vpop.trf.xlu0
  %v2354 = vpop.trf.xlu0
  %v2355 = vpop.trf.xlu0
  %v2356 = vpop.trf.xlu0
  %v2357 = vpop.trf.xlu0
  %v2358 = vpop.trf.xlu0
  %v2359 = vpop.trf.xlu0
  %v2360 = vpop.trf.xlu0
  %v2361 = vpop.trf.xlu0
  %v2362 = vpop.trf.xlu0
  %v2363 = vpop.trf.xlu0
  %v2364 = vpop.trf.xlu0
  %v2365 = vpop.trf.xlu0
  %v2366 = vpop.trf.xlu0
  %v2367 = vpop.trf.xlu0
  %v2369 = vsel %vm444, %v2352, 0
  %v2372 = vsel %vm444, %v2353, 0
  %v2375 = vsel %vm444, %v2354, 0
  %v2378 = vsel %vm444, %v2355, 0
  %2380 = vmatpush.msra.mxu0 0.0
  %2381 = vmatpush.msra.mxu0 0.0
  %2382 = vmatpush.msra.mxu0 0.0
  %2383 = vmatpush.msra.mxu0 0.0
  %2384 = vmatpush.msra.mxu0 0.0
  %2385 = vmatpush.msra.mxu0 0.0
  %2386 = vmatpush.msra.mxu0 0.0
  %2387 = vmatpush.msra.mxu0 0.0
  %2388 = vmatpush.msra.mxu0 0.0
  %2389 = vmatpush.msra.mxu0 0.0
  %2390 = vmatpush.msra.mxu0 0.0
  %2391 = vmatpush.msra.mxu0 0.0
  %2392 = vmatpush.msra.mxu0 0.0
  %2393 = vmatpush.msra.mxu0 0.0
  %2394 = vmatpush.msra.mxu0 %v1683
  %2395 = vmatpush.msra.mxu0 %v1682
  %2396 = vmatmul.f32.gmra.mxu0 %v2369
  %v2397 = vpop.f32.mrf.mxu0
  %v2398 = vadd.f32 0.0, %v2397
  %2399 = vmatmul.f32.gmra.mxu0 %v2372
  %v2400 = vpop.f32.mrf.mxu0
  %v2401 = vadd.f32 0.0, %v2400
  %2402 = vmatmul.f32.gmra.mxu0 %v2375
  %v2403 = vpop.f32.mrf.mxu0
  %v2404 = vadd.f32 0.0, %v2403
  %2405 = vmatmul.f32.gmra.mxu0 %v2378
  %v2406 = vpop.f32.mrf.mxu0
  %v2407 = vadd.f32 0.0, %v2406
  %2408 = vdwg.mxu0
  %v2409 = vmul.f32 %v2398, %v1686
  %v2410 = vmul.f32 %v2401, %v1687
  %v2411 = vmul.f32 %v2404, %v1688
  %v2412 = vmul.f32 %v2407, %v1689
  %v2413 = vsel %vm102, %v2323, 0
  %v2415 = vsel %vm102, %v2326, 0
  %2417 = vmatpush.msra.mxu0 0.0
  %2418 = vmatpush.msra.mxu0 0.0
  %2419 = vmatpush.msra.mxu0 0.0
  %2420 = vmatpush.msra.mxu0 0.0
  %2421 = vmatpush.msra.mxu0 0.0
  %2422 = vmatpush.msra.mxu0 0.0
  %2423 = vmatpush.msra.mxu0 0.0
  %2424 = vmatpush.msra.mxu0 0.0
  %2425 = vmatpush.msra.mxu0 0.0
  %2426 = vmatpush.msra.mxu0 0.0
  %2427 = vmatpush.msra.mxu0 0.0
  %2428 = vmatpush.msra.mxu0 0.0
  %2429 = vmatpush.msra.mxu0 %v2412
  %2430 = vmatpush.msra.mxu0 %v2411
  %2431 = vmatpush.msra.mxu0 %v2410
  %2432 = vmatpush.msra.mxu0 %v2409
  %2433 = vmatmul.f32.gmra.mxu0 %v2413
  %v2434 = vpop.f32.mrf.mxu0
  %v2435 = vadd.f32 0.0, %v2434
  %2436 = vmatmul.f32.gmra.mxu0 %v2415
  %v2437 = vpop.f32.mrf.mxu0
  %v2438 = vadd.f32 0.0, %v2437
  %2439 = vdwg.mxu0
  %2440 = vmax.xlane.f32.xlu0 %v2435
  %v2441 = vpop.xlane.xlu0 %2440
  %2442 = vmax.xlane.f32.xlu0 %v2438
  %v2443 = vpop.xlane.xlu0 %2442
  %v2444 = vsub.f32 %v2435, %v2441
  %v2445 = vsub.f32 %v2438, %v2443
  %v2446 = vmul.f32 %v2444, 1.442695
  %v2447 = vpow.pop %v2446
  %v2448 = vmul.f32 %v2445, 1.442695
  %v2449 = vpow.pop %v2448
  %v2450 = vmul.f32 %v2447, %v1684
  %v2451 = vmul.f32 %v2449, %v1685
  %2452 = vrot.lane.b32.xlu0 %v2323, 64
  %v2453 = vpop.permute.xlu0 %2452
  %2454 = vrot.lane.b32.xlu0 %v2326, 64
  %v2455 = vpop.permute.xlu0 %2454
  %2458 = vmatpush.msra.mxu0 0.0
  %2459 = vmatpush.msra.mxu0 0.0
  %2460 = vmatpush.msra.mxu0 0.0
  %2461 = vmatpush.msra.mxu0 0.0
  %2462 = vmatpush.msra.mxu0 0.0
  %2463 = vmatpush.msra.mxu0 0.0
  %2464 = vmatpush.msra.mxu0 0.0
  %2465 = vmatpush.msra.mxu0 0.0
  %2466 = vmatpush.msra.mxu0 0.0
  %2467 = vmatpush.msra.mxu0 0.0
  %2468 = vmatpush.msra.mxu0 0.0
  %2469 = vmatpush.msra.mxu0 0.0
  %2470 = vmatpush.msra.mxu0 0.0
  %2471 = vmatpush.msra.mxu0 0.0
  %2472 = vmatpush.msra.mxu0 %v2455
  %2473 = vmatpush.msra.mxu0 %v2453
  %2474 = vmatmul.f32.gmra.mxu0 %v1883
  %v2475 = vpop.f32.mrf.mxu0
  %v2476 = vadd.f32 0.0, %v2475
  %2477 = vmatmul.f32.gmra.mxu0 %v1886
  %v2478 = vpop.f32.mrf.mxu0
  %v2479 = vadd.f32 0.0, %v2478
  %2480 = vmatmul.f32.gmra.mxu0 %v1889
  %v2481 = vpop.f32.mrf.mxu0
  %v2482 = vadd.f32 0.0, %v2481
  %2483 = vmatmul.f32.gmra.mxu0 %v1892
  %v2484 = vpop.f32.mrf.mxu0
  %v2485 = vadd.f32 0.0, %v2484
  %2486 = vmatmul.f32.gmra.mxu0 %v1895
  %v2487 = vpop.f32.mrf.mxu0
  %v2488 = vadd.f32 0.0, %v2487
  %2489 = vmatmul.f32.gmra.mxu0 %v1898
  %v2490 = vpop.f32.mrf.mxu0
  %v2491 = vadd.f32 0.0, %v2490
  %2492 = vmatmul.f32.gmra.mxu0 %v1901
  %v2493 = vpop.f32.mrf.mxu0
  %v2494 = vadd.f32 0.0, %v2493
  %2495 = vmatmul.f32.gmra.mxu0 %v1904
  %v2496 = vpop.f32.mrf.mxu0
  %v2497 = vadd.f32 0.0, %v2496
  %2498 = vmatmul.f32.gmra.mxu0 %v1907
  %v2499 = vpop.f32.mrf.mxu0
  %v2500 = vadd.f32 0.0, %v2499
  %2501 = vmatmul.f32.gmra.mxu0 %v1910
  %v2502 = vpop.f32.mrf.mxu0
  %v2503 = vadd.f32 0.0, %v2502
  %2504 = vmatmul.f32.gmra.mxu0 %v1913
  %v2505 = vpop.f32.mrf.mxu0
  %v2506 = vadd.f32 0.0, %v2505
  %2507 = vmatmul.f32.gmra.mxu0 %v1916
  %v2508 = vpop.f32.mrf.mxu0
  %v2509 = vadd.f32 0.0, %v2508
  %2510 = vmatmul.f32.gmra.mxu0 %v1919
  %v2511 = vpop.f32.mrf.mxu0
  %v2512 = vadd.f32 0.0, %v2511
  %2513 = vmatmul.f32.gmra.mxu0 %v1922
  %v2514 = vpop.f32.mrf.mxu0
  %v2515 = vadd.f32 0.0, %v2514
  %2516 = vmatmul.f32.gmra.mxu0 %v1925
  %v2517 = vpop.f32.mrf.mxu0
  %v2518 = vadd.f32 0.0, %v2517
  %2519 = vmatmul.f32.gmra.mxu0 %v1928
  %v2520 = vpop.f32.mrf.mxu0
  %v2521 = vadd.f32 0.0, %v2520
  %2522 = vdwg.mxu0
  %v2523 = vmul.f32 %v2476, %v1690
  %v2524 = vmul.f32 %v2479, %v1691
  %v2525 = vmul.f32 %v2482, %v1692
  %v2526 = vmul.f32 %v2485, %v1693
  %v2527 = vmul.f32 %v2488, %v1694
  %v2528 = vmul.f32 %v2491, %v1695
  %v2529 = vmul.f32 %v2494, %v1696
  %v2530 = vmul.f32 %v2497, %v1697
  %v2531 = vmul.f32 %v2500, %v1698
  %v2532 = vmul.f32 %v2503, %v1699
  %v2533 = vmul.f32 %v2506, %v1700
  %v2534 = vmul.f32 %v2509, %v1701
  %v2535 = vmul.f32 %v2512, %v1702
  %v2536 = vmul.f32 %v2515, %v1703
  %v2537 = vmul.f32 %v2518, %v1704
  %v2538 = vmul.f32 %v2521, %v1705
  %2539 = vmatpush.msra.mxu0 %v2538
  %2540 = vmatpush.msra.mxu0 %v2537
  %2541 = vmatpush.msra.mxu0 %v2536
  %2542 = vmatpush.msra.mxu0 %v2535
  %2543 = vmatpush.msra.mxu0 %v2534
  %2544 = vmatpush.msra.mxu0 %v2533
  %2545 = vmatpush.msra.mxu0 %v2532
  %2546 = vmatpush.msra.mxu0 %v2531
  %2547 = vmatpush.msra.mxu0 %v2530
  %2548 = vmatpush.msra.mxu0 %v2529
  %2549 = vmatpush.msra.mxu0 %v2528
  %2550 = vmatpush.msra.mxu0 %v2527
  %2551 = vmatpush.msra.mxu0 %v2526
  %2552 = vmatpush.msra.mxu0 %v2525
  %2553 = vmatpush.msra.mxu0 %v2524
  %2554 = vmatpush.msra.mxu0 %v2523
  %2555 = vmatmul.f32.gmra.mxu0 %v2450
  %v2556 = vpop.f32.mrf.mxu0
  %v2557 = vadd.f32 0.0, %v2556
  %2558 = vmatmul.f32.gmra.mxu0 %v2451
  %v2559 = vpop.f32.mrf.mxu0
  %v2560 = vadd.f32 0.0, %v2559
  %2561 = vdwg.mxu0
  %2562 = vmatpush.msra.mxu0 %v1705
  %2563 = vmatpush.msra.mxu0 %v1704
  %2564 = vmatpush.msra.mxu0 %v1703
  %2565 = vmatpush.msra.mxu0 %v1702
  %2566 = vmatpush.msra.mxu0 %v1701
  %2567 = vmatpush.msra.mxu0 %v1700
  %2568 = vmatpush.msra.mxu0 %v1699
  %2569 = vmatpush.msra.mxu0 %v1698
  %2570 = vmatpush.msra.mxu0 %v1697
  %2571 = vmatpush.msra.mxu0 %v1696
  %2572 = vmatpush.msra.mxu0 %v1695
  %2573 = vmatpush.msra.mxu0 %v1694
  %2574 = vmatpush.msra.mxu0 %v1693
  %2575 = vmatpush.msra.mxu0 %v1692
  %2576 = vmatpush.msra.mxu0 %v1691
  %2577 = vmatpush.msra.mxu0 %v1690
  %2578 = vmatmul.f32.gmra.mxu0 %v2450
  %v2579 = vpop.f32.mrf.mxu0
  %v2580 = vadd.f32 0.0, %v2579
  %2581 = vmatmul.f32.gmra.mxu0 %v2451
  %v2582 = vpop.f32.mrf.mxu0
  %v2583 = vadd.f32 0.0, %v2582
  %2584 = vdwg.mxu0
  %v2585 = vmax.f32 %v2580, 1e-30
  %v2586 = vmax.f32 %v2583, 1e-30
  %v2587 = vrcp.pop %v2585
  %v2588 = vrcp.pop %v2586
  %v2589 = vmul.f32 %v2557, %v2587
  %v2590 = vmul.f32 %v2560, %v2588
  %v2591 = vperm.slane %v2288, 1
  %v2593 = vsel %vm102, %v2589, 0
  %v2596 = vsel %vm102, %v2590, 0
  %2598 = vmatpush.msra.mxu0 0.0
  %2599 = vmatpush.msra.mxu0 0.0
  %2600 = vmatpush.msra.mxu0 0.0
  %2601 = vmatpush.msra.mxu0 0.0
  %2602 = vmatpush.msra.mxu0 0.0
  %2603 = vmatpush.msra.mxu0 0.0
  %2604 = vmatpush.msra.mxu0 0.0
  %2605 = vmatpush.msra.mxu0 0.0
  %2606 = vmatpush.msra.mxu0 0.0
  %2607 = vmatpush.msra.mxu0 0.0
  %2608 = vmatpush.msra.mxu0 0.0
  %2609 = vmatpush.msra.mxu0 0.0
  %2610 = vmatpush.msra.mxu0 %v2285
  %2611 = vmatpush.msra.mxu0 %v2282
  %2612 = vmatpush.msra.mxu0 %v2279
  %2613 = vmatpush.msra.mxu0 %v2276
  %2614 = vmatmul.f32.gmra.mxu0 %v2593
  %v2615 = vpop.f32.mrf.mxu0
  %v2616 = vadd.f32 %v2591, %v2615
  %2617 = vmatmul.f32.gmra.mxu0 %v2596
  %v2618 = vpop.f32.mrf.mxu0
  %v2619 = vadd.f32 %v2591, %v2618
  %2620 = vdwg.mxu0
  %v2621 = vadd.f32 %v2272, %v2616
  %v2622 = vadd.f32 %v2273, %v2619
  %v2623 = vsel %vm102, %v2621, 0.0
  %2624 = vadd.xlane.f32.xlu0 %v2623
  %v2625 = vpop.xlane.xlu0 %2624
  %v2626 = vsel %vm102, %v2622, 0.0
  %2627 = vadd.xlane.f32.xlu0 %v2626
  %v2628 = vpop.xlane.xlu0 %2627
  %v2629 = vmul.f32 %v2625, %v2107
  %v2630 = vmul.f32 %v2628, %v2107
  %v2631 = vmul.f32 %v2621, %v2621
  %v2632 = vmul.f32 %v2622, %v2622
  %v2633 = vsel %vm102, %v2631, 0.0
  %2634 = vadd.xlane.f32.xlu0 %v2633
  %v2635 = vpop.xlane.xlu0 %2634
  %v2636 = vsel %vm102, %v2632, 0.0
  %2637 = vadd.xlane.f32.xlu0 %v2636
  %v2638 = vpop.xlane.xlu0 %2637
  %v2639 = vmul.f32 %v2635, %v2107
  %v2640 = vmul.f32 %v2638, %v2107
  %v2641 = vmul.f32 %v2629, %v2629
  %v2642 = vmul.f32 %v2630, %v2630
  %v2643 = vsub.f32 %v2639, %v2641
  %v2644 = vsub.f32 %v2640, %v2642
  %v2645 = vsub.f32 %v2621, %v2629
  %v2646 = vsub.f32 %v2622, %v2630
  %v2647 = vadd.f32 %v2643, 1e-05
  %v2648 = vadd.f32 %v2644, 1e-05
  %v2649 = vrsqrt.pop %v2647
  %v2650 = vmul.f32 %v2649, %v2647
  %v2651 = vmul.f32 %v2650, %v2649
  %v2652 = vmul.f32 0.5, %v2651
  %v2653 = vsub.f32 1.5, %v2652
  %v2654 = vmul.f32 %v2649, %v2653
  %vm2655 = vweird.f32 %v2647
  %vm2656 = vweird.f32 %v2649
  %vm2657 = vmor %vm2655, %vm2656
  %v2658 = vsel %vm2657, %v2649, %v2654
  %v2659 = vrsqrt.pop %v2648
  %v2660 = vmul.f32 %v2659, %v2648
  %v2661 = vmul.f32 %v2660, %v2659
  %v2662 = vmul.f32 0.5, %v2661
  %v2663 = vsub.f32 1.5, %v2662
  %v2664 = vmul.f32 %v2659, %v2663
  %vm2665 = vweird.f32 %v2648
  %vm2666 = vweird.f32 %v2659
  %vm2667 = vmor %vm2665, %vm2666
  %v2668 = vsel %vm2667, %v2659, %v2664
  %v2669 = vmul.f32 %v2645, %v2658
  %v2670 = vmul.f32 %v2646, %v2668
  %v2671 = vperm.slane %v2288, 2
  %v2672 = vmul.f32 %v2669, %v2671
  %v2673 = vmul.f32 %v2670, %v2671
  %v2674 = vperm.slane %v2288, 3
  %v2675 = vadd.f32 %v2672, %v2674
  %v2676 = vadd.f32 %v2673, %v2674
  %v2677 = vperm.slane %v2288, 6
  %v2679 = vsel %vm102, %v2675, 0
  %v2682 = vsel %vm102, %v2676, 0
  %2684 = vmatpush.msra.mxu0 0.0
  %2685 = vmatpush.msra.mxu0 0.0
  %2686 = vmatpush.msra.mxu0 0.0
  %2687 = vmatpush.msra.mxu0 0.0
  %2688 = vmatpush.msra.mxu0 0.0
  %2689 = vmatpush.msra.mxu0 0.0
  %2690 = vmatpush.msra.mxu0 0.0
  %2691 = vmatpush.msra.mxu0 0.0
  %2692 = vmatpush.msra.mxu0 0.0
  %2693 = vmatpush.msra.mxu0 0.0
  %2694 = vmatpush.msra.mxu0 0.0
  %2695 = vmatpush.msra.mxu0 0.0
  %2696 = vmatpush.msra.mxu0 %v2286
  %2697 = vmatpush.msra.mxu0 %v2283
  %2698 = vmatpush.msra.mxu0 %v2280
  %2699 = vmatpush.msra.mxu0 %v2277
  %2700 = vmatmul.f32.gmra.mxu0 %v2679
  %v2701 = vpop.f32.mrf.mxu0
  %v2702 = vadd.f32 %v2677, %v2701
  %2703 = vmatmul.f32.gmra.mxu0 %v2682
  %v2704 = vpop.f32.mrf.mxu0
  %v2705 = vadd.f32 %v2677, %v2704
  %2706 = vdwg.mxu0
  %v2707 = vmax.f32 %v2702, 0.0
  %v2708 = vmax.f32 %v2705, 0.0
  %v2709 = vperm.slane %v2288, 7
  %v2711 = vsel %vm105, %v2707, 0
  %v2714 = vsel %vm105, %v2708, 0
  %2716 = vmatpush.msra.mxu0 0.0
  %2717 = vmatpush.msra.mxu0 0.0
  %2718 = vmatpush.msra.mxu0 0.0
  %2719 = vmatpush.msra.mxu0 0.0
  %2720 = vmatpush.msra.mxu0 0.0
  %2721 = vmatpush.msra.mxu0 0.0
  %2722 = vmatpush.msra.mxu0 0.0
  %2723 = vmatpush.msra.mxu0 0.0
  %2724 = vmatpush.msra.mxu0 %v2297
  %2725 = vmatpush.msra.mxu0 %v2296
  %2726 = vmatpush.msra.mxu0 %v2295
  %2727 = vmatpush.msra.mxu0 %v2294
  %2728 = vmatpush.msra.mxu0 %v2293
  %2729 = vmatpush.msra.mxu0 %v2292
  %2730 = vmatpush.msra.mxu0 %v2291
  %2731 = vmatpush.msra.mxu0 %v2290
  %2732 = vmatmul.f32.gmra.mxu0 %v2711
  %v2733 = vpop.f32.mrf.mxu0
  %v2734 = vadd.f32 %v2709, %v2733
  %2735 = vmatmul.f32.gmra.mxu0 %v2714
  %v2736 = vpop.f32.mrf.mxu0
  %v2737 = vadd.f32 %v2709, %v2736
  %2738 = vdwg.mxu0
  %v2739 = vadd.f32 %v2675, %v2734
  %v2740 = vadd.f32 %v2676, %v2737
  %v2741 = vsel %vm102, %v2739, 0.0
  %2742 = vadd.xlane.f32.xlu0 %v2741
  %v2743 = vpop.xlane.xlu0 %2742
  %v2744 = vsel %vm102, %v2740, 0.0
  %2745 = vadd.xlane.f32.xlu0 %v2744
  %v2746 = vpop.xlane.xlu0 %2745
  %v2747 = vmul.f32 %v2743, %v2107
  %v2748 = vmul.f32 %v2746, %v2107
  %v2749 = vmul.f32 %v2739, %v2739
  %v2750 = vmul.f32 %v2740, %v2740
  %v2751 = vsel %vm102, %v2749, 0.0
  %2752 = vadd.xlane.f32.xlu0 %v2751
  %v2753 = vpop.xlane.xlu0 %2752
  %v2754 = vsel %vm102, %v2750, 0.0
  %2755 = vadd.xlane.f32.xlu0 %v2754
  %v2756 = vpop.xlane.xlu0 %2755
  %v2757 = vmul.f32 %v2753, %v2107
  %v2758 = vmul.f32 %v2756, %v2107
  %v2759 = vmul.f32 %v2747, %v2747
  %v2760 = vmul.f32 %v2748, %v2748
  %v2761 = vsub.f32 %v2757, %v2759
  %v2762 = vsub.f32 %v2758, %v2760
  %v2763 = vsub.f32 %v2739, %v2747
  %v2764 = vsub.f32 %v2740, %v2748
  %v2765 = vadd.f32 %v2761, 1e-05
  %v2766 = vadd.f32 %v2762, 1e-05
  %v2767 = vrsqrt.pop %v2765
  %v2768 = vmul.f32 %v2767, %v2765
  %v2769 = vmul.f32 %v2768, %v2767
  %v2770 = vmul.f32 0.5, %v2769
  %v2771 = vsub.f32 1.5, %v2770
  %v2772 = vmul.f32 %v2767, %v2771
  %vm2773 = vweird.f32 %v2765
  %vm2774 = vweird.f32 %v2767
  %vm2775 = vmor %vm2773, %vm2774
  %v2776 = vsel %vm2775, %v2767, %v2772
  %v2777 = vrsqrt.pop %v2766
  %v2778 = vmul.f32 %v2777, %v2766
  %v2779 = vmul.f32 %v2778, %v2777
  %v2780 = vmul.f32 0.5, %v2779
  %v2781 = vsub.f32 1.5, %v2780
  %v2782 = vmul.f32 %v2777, %v2781
  %vm2783 = vweird.f32 %v2766
  %vm2784 = vweird.f32 %v2777
  %vm2785 = vmor %vm2783, %vm2784
  %v2786 = vsel %vm2785, %v2777, %v2782
  %v2787 = vmul.f32 %v2763, %v2776
  %v2788 = vmul.f32 %v2764, %v2786
  %v2789 = vperm.slane %v2288, 4
  %v2790 = vmul.f32 %v2787, %v2789
  %v2791 = vmul.f32 %v2788, %v2789
  %v2792 = vperm.slane %v2288, 5
  %v2793 = vadd.f32 %v2790, %v2792
  %v2794 = vadd.f32 %v2791, %v2792
  %s2795 = scalar_lea.vmem %s4, 192
  %v2796 = vld [vmem:[%s2795] sm:$0xff]
  %v2797 = vld [vmem:[%s2795 + $0x8] sm:$0xff]
  %v2798 = vld [vmem:[%s2795 + $0x10] sm:$0xff]
  %v2799 = vld [vmem:[%s2795 + $0x18] sm:$0xff]
  %v2800 = vld [vmem:[%s2795 + $0x20] sm:$0xff]
  %v2801 = vld [vmem:[%s2795 + $0x28] sm:$0xff]
  %v2802 = vld [vmem:[%s2795 + $0x30] sm:$0xff]
  %v2803 = vld [vmem:[%s2795 + $0x38] sm:$0xff]
  %v2804 = vld [vmem:[%s2795 + $0x40] sm:$0xff]
  %v2805 = vld [vmem:[%s2795 + $0x48] sm:$0xff]
  %v2806 = vld [vmem:[%s2795 + $0x50] sm:$0xff]
  %v2807 = vld [vmem:[%s2795 + $0x58] sm:$0xff]
  %s2808 = scalar_lea.vmem %s7, 16
  %v2809 = vld [vmem:[%s2808] sm:$0xff]
  %s2810 = scalar_lea.vmem %s5, 128
  %v2811 = vld [vmem:[%s2810] sm:$0xff]
  %v2812 = vld [vmem:[%s2810 + $0x8] sm:$0xff]
  %v2813 = vld [vmem:[%s2810 + $0x10] sm:$0xff]
  %v2814 = vld [vmem:[%s2810 + $0x18] sm:$0xff]
  %v2815 = vld [vmem:[%s2810 + $0x20] sm:$0xff]
  %v2816 = vld [vmem:[%s2810 + $0x28] sm:$0xff]
  %v2817 = vld [vmem:[%s2810 + $0x30] sm:$0xff]
  %v2818 = vld [vmem:[%s2810 + $0x38] sm:$0xff]
  %v2819 = vperm.slane %v2809, 0
  %v2821 = vsel %vm102, %v2793, 0
  %v2824 = vsel %vm102, %v2794, 0
  %2826 = vmatpush.msra.mxu0 0.0
  %2827 = vmatpush.msra.mxu0 0.0
  %2828 = vmatpush.msra.mxu0 0.0
  %2829 = vmatpush.msra.mxu0 0.0
  %2830 = vmatpush.msra.mxu0 0.0
  %2831 = vmatpush.msra.mxu0 0.0
  %2832 = vmatpush.msra.mxu0 0.0
  %2833 = vmatpush.msra.mxu0 0.0
  %2834 = vmatpush.msra.mxu0 0.0
  %2835 = vmatpush.msra.mxu0 0.0
  %2836 = vmatpush.msra.mxu0 0.0
  %2837 = vmatpush.msra.mxu0 0.0
  %2838 = vmatpush.msra.mxu0 %v2805
  %2839 = vmatpush.msra.mxu0 %v2802
  %2840 = vmatpush.msra.mxu0 %v2799
  %2841 = vmatpush.msra.mxu0 %v2796
  %2842 = vmatmul.f32.gmra.mxu0 %v2821
  %v2843 = vpop.f32.mrf.mxu0
  %v2844 = vadd.f32 %v2819, %v2843
  %2845 = vmatmul.f32.gmra.mxu0 %v2824
  %v2846 = vpop.f32.mrf.mxu0
  %v2847 = vadd.f32 %v2819, %v2846
  %2848 = vdwg.mxu0
  %2851 = vrot.lane.b32.xlu0 %v2844, 96
  %v2852 = vpop.permute.xlu0 %2851
  %2853 = vrot.lane.b32.xlu0 %v2847, 96
  %v2854 = vpop.permute.xlu0 %2853
  %2857 = vxpose.xlu0.b32.start [1/16] %v2852, 128
  %2858 = vxpose.xlu0.b32.cont [2/16] %v2854, 128
  %2859 = vxpose.xlu0.b32.cont [3/16] 0.0, 128
  %2860 = vxpose.xlu0.b32.cont [4/16] 0.0, 128
  %2861 = vxpose.xlu0.b32.cont [5/16] 0.0, 128
  %2862 = vxpose.xlu0.b32.cont [6/16] 0.0, 128
  %2863 = vxpose.xlu0.b32.cont [7/16] 0.0, 128
  %2864 = vxpose.xlu0.b32.cont [8/16] 0.0, 128
  %2865 = vxpose.xlu0.b32.cont [9/16] 0.0, 128
  %2866 = vxpose.xlu0.b32.cont [10/16] 0.0, 128
  %2867 = vxpose.xlu0.b32.cont [11/16] 0.0, 128
  %2868 = vxpose.xlu0.b32.cont [12/16] 0.0, 128
  %2869 = vxpose.xlu0.b32.cont [13/16] 0.0, 128
  %2870 = vxpose.xlu0.b32.cont [14/16] 0.0, 128
  %2871 = vxpose.xlu0.b32.cont [15/16] 0.0, 128
  %2872 = vxpose.xlu0.b32.end [16/16] 0.0, 128
  %v2873 = vpop.trf.xlu0
  %v2874 = vpop.trf.xlu0
  %v2875 = vpop.trf.xlu0
  %v2876 = vpop.trf.xlu0
  %v2877 = vpop.trf.xlu0
  %v2878 = vpop.trf.xlu0
  %v2879 = vpop.trf.xlu0
  %v2880 = vpop.trf.xlu0
  %v2881 = vpop.trf.xlu0
  %v2882 = vpop.trf.xlu0
  %v2883 = vpop.trf.xlu0
  %v2884 = vpop.trf.xlu0
  %v2885 = vpop.trf.xlu0
  %v2886 = vpop.trf.xlu0
  %v2887 = vpop.trf.xlu0
  %v2888 = vpop.trf.xlu0
  %v2890 = vsel %vm444, %v2873, 0
  %v2893 = vsel %vm444, %v2874, 0
  %v2896 = vsel %vm444, %v2875, 0
  %v2899 = vsel %vm444, %v2876, 0
  %2901 = vmatpush.msra.mxu0 0.0
  %2902 = vmatpush.msra.mxu0 0.0
  %2903 = vmatpush.msra.mxu0 0.0
  %2904 = vmatpush.msra.mxu0 0.0
  %2905 = vmatpush.msra.mxu0 0.0
  %2906 = vmatpush.msra.mxu0 0.0
  %2907 = vmatpush.msra.mxu0 0.0
  %2908 = vmatpush.msra.mxu0 0.0
  %2909 = vmatpush.msra.mxu0 0.0
  %2910 = vmatpush.msra.mxu0 0.0
  %2911 = vmatpush.msra.mxu0 0.0
  %2912 = vmatpush.msra.mxu0 0.0
  %2913 = vmatpush.msra.mxu0 0.0
  %2914 = vmatpush.msra.mxu0 0.0
  %2915 = vmatpush.msra.mxu0 %v1683
  %2916 = vmatpush.msra.mxu0 %v1682
  %2917 = vmatmul.f32.gmra.mxu0 %v2890
  %v2918 = vpop.f32.mrf.mxu0
  %v2919 = vadd.f32 0.0, %v2918
  %2920 = vmatmul.f32.gmra.mxu0 %v2893
  %v2921 = vpop.f32.mrf.mxu0
  %v2922 = vadd.f32 0.0, %v2921
  %2923 = vmatmul.f32.gmra.mxu0 %v2896
  %v2924 = vpop.f32.mrf.mxu0
  %v2925 = vadd.f32 0.0, %v2924
  %2926 = vmatmul.f32.gmra.mxu0 %v2899
  %v2927 = vpop.f32.mrf.mxu0
  %v2928 = vadd.f32 0.0, %v2927
  %2929 = vdwg.mxu0
  %v2930 = vmul.f32 %v2919, %v1686
  %v2931 = vmul.f32 %v2922, %v1687
  %v2932 = vmul.f32 %v2925, %v1688
  %v2933 = vmul.f32 %v2928, %v1689
  %v2934 = vsel %vm102, %v2844, 0
  %v2936 = vsel %vm102, %v2847, 0
  %2938 = vmatpush.msra.mxu0 0.0
  %2939 = vmatpush.msra.mxu0 0.0
  %2940 = vmatpush.msra.mxu0 0.0
  %2941 = vmatpush.msra.mxu0 0.0
  %2942 = vmatpush.msra.mxu0 0.0
  %2943 = vmatpush.msra.mxu0 0.0
  %2944 = vmatpush.msra.mxu0 0.0
  %2945 = vmatpush.msra.mxu0 0.0
  %2946 = vmatpush.msra.mxu0 0.0
  %2947 = vmatpush.msra.mxu0 0.0
  %2948 = vmatpush.msra.mxu0 0.0
  %2949 = vmatpush.msra.mxu0 0.0
  %2950 = vmatpush.msra.mxu0 %v2933
  %2951 = vmatpush.msra.mxu0 %v2932
  %2952 = vmatpush.msra.mxu0 %v2931
  %2953 = vmatpush.msra.mxu0 %v2930
  %2954 = vmatmul.f32.gmra.mxu0 %v2934
  %v2955 = vpop.f32.mrf.mxu0
  %v2956 = vadd.f32 0.0, %v2955
  %2957 = vmatmul.f32.gmra.mxu0 %v2936
  %v2958 = vpop.f32.mrf.mxu0
  %v2959 = vadd.f32 0.0, %v2958
  %2960 = vdwg.mxu0
  %2961 = vmax.xlane.f32.xlu0 %v2956
  %v2962 = vpop.xlane.xlu0 %2961
  %2963 = vmax.xlane.f32.xlu0 %v2959
  %v2964 = vpop.xlane.xlu0 %2963
  %v2965 = vsub.f32 %v2956, %v2962
  %v2966 = vsub.f32 %v2959, %v2964
  %v2967 = vmul.f32 %v2965, 1.442695
  %v2968 = vpow.pop %v2967
  %v2969 = vmul.f32 %v2966, 1.442695
  %v2970 = vpow.pop %v2969
  %v2971 = vmul.f32 %v2968, %v1684
  %v2972 = vmul.f32 %v2970, %v1685
  %2973 = vrot.lane.b32.xlu0 %v2844, 64
  %v2974 = vpop.permute.xlu0 %2973
  %2975 = vrot.lane.b32.xlu0 %v2847, 64
  %v2976 = vpop.permute.xlu0 %2975
  %2979 = vmatpush.msra.mxu0 0.0
  %2980 = vmatpush.msra.mxu0 0.0
  %2981 = vmatpush.msra.mxu0 0.0
  %2982 = vmatpush.msra.mxu0 0.0
  %2983 = vmatpush.msra.mxu0 0.0
  %2984 = vmatpush.msra.mxu0 0.0
  %2985 = vmatpush.msra.mxu0 0.0
  %2986 = vmatpush.msra.mxu0 0.0
  %2987 = vmatpush.msra.mxu0 0.0
  %2988 = vmatpush.msra.mxu0 0.0
  %2989 = vmatpush.msra.mxu0 0.0
  %2990 = vmatpush.msra.mxu0 0.0
  %2991 = vmatpush.msra.mxu0 0.0
  %2992 = vmatpush.msra.mxu0 0.0
  %2993 = vmatpush.msra.mxu0 %v2976
  %2994 = vmatpush.msra.mxu0 %v2974
  %2995 = vmatmul.f32.gmra.mxu0 %v1883
  %v2996 = vpop.f32.mrf.mxu0
  %v2997 = vadd.f32 0.0, %v2996
  %2998 = vmatmul.f32.gmra.mxu0 %v1886
  %v2999 = vpop.f32.mrf.mxu0
  %v3000 = vadd.f32 0.0, %v2999
  %3001 = vmatmul.f32.gmra.mxu0 %v1889
  %v3002 = vpop.f32.mrf.mxu0
  %v3003 = vadd.f32 0.0, %v3002
  %3004 = vmatmul.f32.gmra.mxu0 %v1892
  %v3005 = vpop.f32.mrf.mxu0
  %v3006 = vadd.f32 0.0, %v3005
  %3007 = vmatmul.f32.gmra.mxu0 %v1895
  %v3008 = vpop.f32.mrf.mxu0
  %v3009 = vadd.f32 0.0, %v3008
  %3010 = vmatmul.f32.gmra.mxu0 %v1898
  %v3011 = vpop.f32.mrf.mxu0
  %v3012 = vadd.f32 0.0, %v3011
  %3013 = vmatmul.f32.gmra.mxu0 %v1901
  %v3014 = vpop.f32.mrf.mxu0
  %v3015 = vadd.f32 0.0, %v3014
  %3016 = vmatmul.f32.gmra.mxu0 %v1904
  %v3017 = vpop.f32.mrf.mxu0
  %v3018 = vadd.f32 0.0, %v3017
  %3019 = vmatmul.f32.gmra.mxu0 %v1907
  %v3020 = vpop.f32.mrf.mxu0
  %v3021 = vadd.f32 0.0, %v3020
  %3022 = vmatmul.f32.gmra.mxu0 %v1910
  %v3023 = vpop.f32.mrf.mxu0
  %v3024 = vadd.f32 0.0, %v3023
  %3025 = vmatmul.f32.gmra.mxu0 %v1913
  %v3026 = vpop.f32.mrf.mxu0
  %v3027 = vadd.f32 0.0, %v3026
  %3028 = vmatmul.f32.gmra.mxu0 %v1916
  %v3029 = vpop.f32.mrf.mxu0
  %v3030 = vadd.f32 0.0, %v3029
  %3031 = vmatmul.f32.gmra.mxu0 %v1919
  %v3032 = vpop.f32.mrf.mxu0
  %v3033 = vadd.f32 0.0, %v3032
  %3034 = vmatmul.f32.gmra.mxu0 %v1922
  %v3035 = vpop.f32.mrf.mxu0
  %v3036 = vadd.f32 0.0, %v3035
  %3037 = vmatmul.f32.gmra.mxu0 %v1925
  %v3038 = vpop.f32.mrf.mxu0
  %v3039 = vadd.f32 0.0, %v3038
  %3040 = vmatmul.f32.gmra.mxu0 %v1928
  %v3041 = vpop.f32.mrf.mxu0
  %v3042 = vadd.f32 0.0, %v3041
  %3043 = vdwg.mxu0
  %v3044 = vmul.f32 %v2997, %v1690
  %v3045 = vmul.f32 %v3000, %v1691
  %v3046 = vmul.f32 %v3003, %v1692
  %v3047 = vmul.f32 %v3006, %v1693
  %v3048 = vmul.f32 %v3009, %v1694
  %v3049 = vmul.f32 %v3012, %v1695
  %v3050 = vmul.f32 %v3015, %v1696
  %v3051 = vmul.f32 %v3018, %v1697
  %v3052 = vmul.f32 %v3021, %v1698
  %v3053 = vmul.f32 %v3024, %v1699
  %v3054 = vmul.f32 %v3027, %v1700
  %v3055 = vmul.f32 %v3030, %v1701
  %v3056 = vmul.f32 %v3033, %v1702
  %v3057 = vmul.f32 %v3036, %v1703
  %v3058 = vmul.f32 %v3039, %v1704
  %v3059 = vmul.f32 %v3042, %v1705
  %3060 = vmatpush.msra.mxu0 %v3059
  %3061 = vmatpush.msra.mxu0 %v3058
  %3062 = vmatpush.msra.mxu0 %v3057
  %3063 = vmatpush.msra.mxu0 %v3056
  %3064 = vmatpush.msra.mxu0 %v3055
  %3065 = vmatpush.msra.mxu0 %v3054
  %3066 = vmatpush.msra.mxu0 %v3053
  %3067 = vmatpush.msra.mxu0 %v3052
  %3068 = vmatpush.msra.mxu0 %v3051
  %3069 = vmatpush.msra.mxu0 %v3050
  %3070 = vmatpush.msra.mxu0 %v3049
  %3071 = vmatpush.msra.mxu0 %v3048
  %3072 = vmatpush.msra.mxu0 %v3047
  %3073 = vmatpush.msra.mxu0 %v3046
  %3074 = vmatpush.msra.mxu0 %v3045
  %3075 = vmatpush.msra.mxu0 %v3044
  %3076 = vmatmul.f32.gmra.mxu0 %v2971
  %v3077 = vpop.f32.mrf.mxu0
  %v3078 = vadd.f32 0.0, %v3077
  %3079 = vmatmul.f32.gmra.mxu0 %v2972
  %v3080 = vpop.f32.mrf.mxu0
  %v3081 = vadd.f32 0.0, %v3080
  %3082 = vdwg.mxu0
  %3083 = vmatpush.msra.mxu0 %v1705
  %3084 = vmatpush.msra.mxu0 %v1704
  %3085 = vmatpush.msra.mxu0 %v1703
  %3086 = vmatpush.msra.mxu0 %v1702
  %3087 = vmatpush.msra.mxu0 %v1701
  %3088 = vmatpush.msra.mxu0 %v1700
  %3089 = vmatpush.msra.mxu0 %v1699
  %3090 = vmatpush.msra.mxu0 %v1698
  %3091 = vmatpush.msra.mxu0 %v1697
  %3092 = vmatpush.msra.mxu0 %v1696
  %3093 = vmatpush.msra.mxu0 %v1695
  %3094 = vmatpush.msra.mxu0 %v1694
  %3095 = vmatpush.msra.mxu0 %v1693
  %3096 = vmatpush.msra.mxu0 %v1692
  %3097 = vmatpush.msra.mxu0 %v1691
  %3098 = vmatpush.msra.mxu0 %v1690
  %3099 = vmatmul.f32.gmra.mxu0 %v2971
  %v3100 = vpop.f32.mrf.mxu0
  %v3101 = vadd.f32 0.0, %v3100
  %3102 = vmatmul.f32.gmra.mxu0 %v2972
  %v3103 = vpop.f32.mrf.mxu0
  %v3104 = vadd.f32 0.0, %v3103
  %3105 = vdwg.mxu0
  %v3106 = vmax.f32 %v3101, 1e-30
  %v3107 = vmax.f32 %v3104, 1e-30
  %v3108 = vrcp.pop %v3106
  %v3109 = vrcp.pop %v3107
  %v3110 = vmul.f32 %v3078, %v3108
  %v3111 = vmul.f32 %v3081, %v3109
  %v3112 = vperm.slane %v2809, 1
  %v3114 = vsel %vm102, %v3110, 0
  %v3117 = vsel %vm102, %v3111, 0
  %3119 = vmatpush.msra.mxu0 0.0
  %3120 = vmatpush.msra.mxu0 0.0
  %3121 = vmatpush.msra.mxu0 0.0
  %3122 = vmatpush.msra.mxu0 0.0
  %3123 = vmatpush.msra.mxu0 0.0
  %3124 = vmatpush.msra.mxu0 0.0
  %3125 = vmatpush.msra.mxu0 0.0
  %3126 = vmatpush.msra.mxu0 0.0
  %3127 = vmatpush.msra.mxu0 0.0
  %3128 = vmatpush.msra.mxu0 0.0
  %3129 = vmatpush.msra.mxu0 0.0
  %3130 = vmatpush.msra.mxu0 0.0
  %3131 = vmatpush.msra.mxu0 %v2806
  %3132 = vmatpush.msra.mxu0 %v2803
  %3133 = vmatpush.msra.mxu0 %v2800
  %3134 = vmatpush.msra.mxu0 %v2797
  %3135 = vmatmul.f32.gmra.mxu0 %v3114
  %v3136 = vpop.f32.mrf.mxu0
  %v3137 = vadd.f32 %v3112, %v3136
  %3138 = vmatmul.f32.gmra.mxu0 %v3117
  %v3139 = vpop.f32.mrf.mxu0
  %v3140 = vadd.f32 %v3112, %v3139
  %3141 = vdwg.mxu0
  %v3142 = vadd.f32 %v2793, %v3137
  %v3143 = vadd.f32 %v2794, %v3140
  %v3144 = vsel %vm102, %v3142, 0.0
  %3145 = vadd.xlane.f32.xlu0 %v3144
  %v3146 = vpop.xlane.xlu0 %3145
  %v3147 = vsel %vm102, %v3143, 0.0
  %3148 = vadd.xlane.f32.xlu0 %v3147
  %v3149 = vpop.xlane.xlu0 %3148
  %v3150 = vmul.f32 %v3146, %v2107
  %v3151 = vmul.f32 %v3149, %v2107
  %v3152 = vmul.f32 %v3142, %v3142
  %v3153 = vmul.f32 %v3143, %v3143
  %v3154 = vsel %vm102, %v3152, 0.0
  %3155 = vadd.xlane.f32.xlu0 %v3154
  %v3156 = vpop.xlane.xlu0 %3155
  %v3157 = vsel %vm102, %v3153, 0.0
  %3158 = vadd.xlane.f32.xlu0 %v3157
  %v3159 = vpop.xlane.xlu0 %3158
  %v3160 = vmul.f32 %v3156, %v2107
  %v3161 = vmul.f32 %v3159, %v2107
  %v3162 = vmul.f32 %v3150, %v3150
  %v3163 = vmul.f32 %v3151, %v3151
  %v3164 = vsub.f32 %v3160, %v3162
  %v3165 = vsub.f32 %v3161, %v3163
  %v3166 = vsub.f32 %v3142, %v3150
  %v3167 = vsub.f32 %v3143, %v3151
  %v3168 = vadd.f32 %v3164, 1e-05
  %v3169 = vadd.f32 %v3165, 1e-05
  %v3170 = vrsqrt.pop %v3168
  %v3171 = vmul.f32 %v3170, %v3168
  %v3172 = vmul.f32 %v3171, %v3170
  %v3173 = vmul.f32 0.5, %v3172
  %v3174 = vsub.f32 1.5, %v3173
  %v3175 = vmul.f32 %v3170, %v3174
  %vm3176 = vweird.f32 %v3168
  %vm3177 = vweird.f32 %v3170
  %vm3178 = vmor %vm3176, %vm3177
  %v3179 = vsel %vm3178, %v3170, %v3175
  %v3180 = vrsqrt.pop %v3169
  %v3181 = vmul.f32 %v3180, %v3169
  %v3182 = vmul.f32 %v3181, %v3180
  %v3183 = vmul.f32 0.5, %v3182
  %v3184 = vsub.f32 1.5, %v3183
  %v3185 = vmul.f32 %v3180, %v3184
  %vm3186 = vweird.f32 %v3169
  %vm3187 = vweird.f32 %v3180
  %vm3188 = vmor %vm3186, %vm3187
  %v3189 = vsel %vm3188, %v3180, %v3185
  %v3190 = vmul.f32 %v3166, %v3179
  %v3191 = vmul.f32 %v3167, %v3189
  %v3192 = vperm.slane %v2809, 2
  %v3193 = vmul.f32 %v3190, %v3192
  %v3194 = vmul.f32 %v3191, %v3192
  %v3195 = vperm.slane %v2809, 3
  %v3196 = vadd.f32 %v3193, %v3195
  %v3197 = vadd.f32 %v3194, %v3195
  %v3198 = vperm.slane %v2809, 6
  %v3200 = vsel %vm102, %v3196, 0
  %v3203 = vsel %vm102, %v3197, 0
  %3205 = vmatpush.msra.mxu0 0.0
  %3206 = vmatpush.msra.mxu0 0.0
  %3207 = vmatpush.msra.mxu0 0.0
  %3208 = vmatpush.msra.mxu0 0.0
  %3209 = vmatpush.msra.mxu0 0.0
  %3210 = vmatpush.msra.mxu0 0.0
  %3211 = vmatpush.msra.mxu0 0.0
  %3212 = vmatpush.msra.mxu0 0.0
  %3213 = vmatpush.msra.mxu0 0.0
  %3214 = vmatpush.msra.mxu0 0.0
  %3215 = vmatpush.msra.mxu0 0.0
  %3216 = vmatpush.msra.mxu0 0.0
  %3217 = vmatpush.msra.mxu0 %v2807
  %3218 = vmatpush.msra.mxu0 %v2804
  %3219 = vmatpush.msra.mxu0 %v2801
  %3220 = vmatpush.msra.mxu0 %v2798
  %3221 = vmatmul.f32.gmra.mxu0 %v3200
  %v3222 = vpop.f32.mrf.mxu0
  %v3223 = vadd.f32 %v3198, %v3222
  %3224 = vmatmul.f32.gmra.mxu0 %v3203
  %v3225 = vpop.f32.mrf.mxu0
  %v3226 = vadd.f32 %v3198, %v3225
  %3227 = vdwg.mxu0
  %v3228 = vmax.f32 %v3223, 0.0
  %v3229 = vmax.f32 %v3226, 0.0
  %v3230 = vperm.slane %v2809, 7
  %v3232 = vsel %vm105, %v3228, 0
  %v3235 = vsel %vm105, %v3229, 0
  %3237 = vmatpush.msra.mxu0 0.0
  %3238 = vmatpush.msra.mxu0 0.0
  %3239 = vmatpush.msra.mxu0 0.0
  %3240 = vmatpush.msra.mxu0 0.0
  %3241 = vmatpush.msra.mxu0 0.0
  %3242 = vmatpush.msra.mxu0 0.0
  %3243 = vmatpush.msra.mxu0 0.0
  %3244 = vmatpush.msra.mxu0 0.0
  %3245 = vmatpush.msra.mxu0 %v2818
  %3246 = vmatpush.msra.mxu0 %v2817
  %3247 = vmatpush.msra.mxu0 %v2816
  %3248 = vmatpush.msra.mxu0 %v2815
  %3249 = vmatpush.msra.mxu0 %v2814
  %3250 = vmatpush.msra.mxu0 %v2813
  %3251 = vmatpush.msra.mxu0 %v2812
  %3252 = vmatpush.msra.mxu0 %v2811
  %3253 = vmatmul.f32.gmra.mxu0 %v3232
  %v3254 = vpop.f32.mrf.mxu0
  %v3255 = vadd.f32 %v3230, %v3254
  %3256 = vmatmul.f32.gmra.mxu0 %v3235
  %v3257 = vpop.f32.mrf.mxu0
  %v3258 = vadd.f32 %v3230, %v3257
  %3259 = vdwg.mxu0
  %v3260 = vadd.f32 %v3196, %v3255
  %v3261 = vadd.f32 %v3197, %v3258
  %v3262 = vsel %vm102, %v3260, 0.0
  %3263 = vadd.xlane.f32.xlu0 %v3262
  %v3264 = vpop.xlane.xlu0 %3263
  %v3265 = vsel %vm102, %v3261, 0.0
  %3266 = vadd.xlane.f32.xlu0 %v3265
  %v3267 = vpop.xlane.xlu0 %3266
  %v3268 = vmul.f32 %v3264, %v2107
  %v3269 = vmul.f32 %v3267, %v2107
  %v3270 = vmul.f32 %v3260, %v3260
  %v3271 = vmul.f32 %v3261, %v3261
  %v3272 = vsel %vm102, %v3270, 0.0
  %3273 = vadd.xlane.f32.xlu0 %v3272
  %v3274 = vpop.xlane.xlu0 %3273
  %v3275 = vsel %vm102, %v3271, 0.0
  %3276 = vadd.xlane.f32.xlu0 %v3275
  %v3277 = vpop.xlane.xlu0 %3276
  %v3278 = vmul.f32 %v3274, %v2107
  %v3279 = vmul.f32 %v3277, %v2107
  %v3280 = vmul.f32 %v3268, %v3268
  %v3281 = vmul.f32 %v3269, %v3269
  %v3282 = vsub.f32 %v3278, %v3280
  %v3283 = vsub.f32 %v3279, %v3281
  %v3284 = vsub.f32 %v3260, %v3268
  %v3285 = vsub.f32 %v3261, %v3269
  %v3286 = vadd.f32 %v3282, 1e-05
  %v3287 = vadd.f32 %v3283, 1e-05
  %v3288 = vrsqrt.pop %v3286
  %v3289 = vmul.f32 %v3288, %v3286
  %v3290 = vmul.f32 %v3289, %v3288
  %v3291 = vmul.f32 0.5, %v3290
  %v3292 = vsub.f32 1.5, %v3291
  %v3293 = vmul.f32 %v3288, %v3292
  %vm3294 = vweird.f32 %v3286
  %vm3295 = vweird.f32 %v3288
  %vm3296 = vmor %vm3294, %vm3295
  %v3297 = vsel %vm3296, %v3288, %v3293
  %v3298 = vrsqrt.pop %v3287
  %v3299 = vmul.f32 %v3298, %v3287
  %v3300 = vmul.f32 %v3299, %v3298
  %v3301 = vmul.f32 0.5, %v3300
  %v3302 = vsub.f32 1.5, %v3301
  %v3303 = vmul.f32 %v3298, %v3302
  %vm3304 = vweird.f32 %v3287
  %vm3305 = vweird.f32 %v3298
  %vm3306 = vmor %vm3304, %vm3305
  %v3307 = vsel %vm3306, %v3298, %v3303
  %v3308 = vmul.f32 %v3284, %v3297
  %v3309 = vmul.f32 %v3285, %v3307
  %v3310 = vperm.slane %v2809, 4
  %v3311 = vmul.f32 %v3308, %v3310
  %v3312 = vmul.f32 %v3309, %v3310
  %v3313 = vperm.slane %v2809, 5
  %v3314 = vadd.f32 %v3311, %v3313
  %v3315 = vadd.f32 %v3312, %v3313
  %v3316 = vld [vmem:[%s10 + $0x30] sm:$0x3]
  %v3318 = vsel %vm444, %v3316, 0
  %3320 = vmatpush.msra.mxu0 0.0
  %3321 = vmatpush.msra.mxu0 0.0
  %3322 = vmatpush.msra.mxu0 0.0
  %3323 = vmatpush.msra.mxu0 0.0
  %3324 = vmatpush.msra.mxu0 0.0
  %3325 = vmatpush.msra.mxu0 0.0
  %3326 = vmatpush.msra.mxu0 0.0
  %3327 = vmatpush.msra.mxu0 0.0
  %3328 = vmatpush.msra.mxu0 0.0
  %3329 = vmatpush.msra.mxu0 0.0
  %3330 = vmatpush.msra.mxu0 0.0
  %3331 = vmatpush.msra.mxu0 0.0
  %3332 = vmatpush.msra.mxu0 0.0
  %3333 = vmatpush.msra.mxu0 0.0
  %3334 = vmatpush.msra.mxu0 %v3315
  %3335 = vmatpush.msra.mxu0 %v3314
  %3336 = vmatmul.f32.gmra.mxu0 %v3318
  %v3337 = vpop.f32.mrf.mxu0
  %v3338 = vadd.f32 0.0, %v3337
  %3339 = vdwg.mxu0
  %v3340 = vld [vmem:[%s8] sm:$0xff]
  %v3341 = vld [vmem:[%s8 + $0x8] sm:$0xff]
  %v3342 = vld [vmem:[%s8 + $0x10] sm:$0xff]
  %v3343 = vld [vmem:[%s8 + $0x18] sm:$0xff]
  %v3344 = vld [vmem:[%s9 + $0x2] sm:$0x1]
  %v3345 = vperm.slane %v3344, 0
  %3350 = vrot.lane.b32.xlu0 %v3340, 96
  %v3351 = vpop.permute.xlu0 %3350
  %3352 = vrot.lane.b32.xlu0 %v3341, 96
  %v3353 = vpop.permute.xlu0 %3352
  %3354 = vrot.lane.b32.xlu0 %v3342, 96
  %v3355 = vpop.permute.xlu0 %3354
  %3356 = vrot.lane.b32.xlu0 %v3343, 96
  %v3357 = vpop.permute.xlu0 %3356
  %v3363 = vsel %vm102, %v3338, 0
  %3365 = vmatpush.msra.mxu0 0.0
  %3366 = vmatpush.msra.mxu0 0.0
  %3367 = vmatpush.msra.mxu0 0.0
  %3368 = vmatpush.msra.mxu0 0.0
  %3369 = vmatpush.msra.mxu0 0.0
  %3370 = vmatpush.msra.mxu0 0.0
  %3371 = vmatpush.msra.mxu0 0.0
  %3372 = vmatpush.msra.mxu0 0.0
  %3373 = vmatpush.msra.mxu0 0.0
  %3374 = vmatpush.msra.mxu0 0.0
  %3375 = vmatpush.msra.mxu0 0.0
  %3376 = vmatpush.msra.mxu0 0.0
  %3377 = vmatpush.msra.mxu0 %v3357
  %3378 = vmatpush.msra.mxu0 %v3355
  %3379 = vmatpush.msra.mxu0 %v3353
  %3380 = vmatpush.msra.mxu0 %v3351
  %3381 = vmatmul.f32.gmra.mxu0 %v3363
  %v3382 = vpop.f32.mrf.mxu0
  %v3383 = vadd.f32 %v3345, %v3382
  %3384 = vdwg.mxu0
  %v3385 = vmax.f32 %v3383, 0.0
  %v3386 = vld [vmem:[%s9 + $0x3] sm:$0x1]
  %v3387 = vperm.slane %v3386, 0
  %3388 = vrot.lane.b32.xlu0 %v3340, 64
  %v3389 = vpop.permute.xlu0 %3388
  %3390 = vrot.lane.b32.xlu0 %v3341, 64
  %v3391 = vpop.permute.xlu0 %3390
  %3392 = vrot.lane.b32.xlu0 %v3342, 64
  %v3393 = vpop.permute.xlu0 %3392
  %3394 = vrot.lane.b32.xlu0 %v3343, 64
  %v3395 = vpop.permute.xlu0 %3394
  %v3401 = vsel %vm102, %v3385, 0
  %3403 = vmatpush.msra.mxu0 0.0
  %3404 = vmatpush.msra.mxu0 0.0
  %3405 = vmatpush.msra.mxu0 0.0
  %3406 = vmatpush.msra.mxu0 0.0
  %3407 = vmatpush.msra.mxu0 0.0
  %3408 = vmatpush.msra.mxu0 0.0
  %3409 = vmatpush.msra.mxu0 0.0
  %3410 = vmatpush.msra.mxu0 0.0
  %3411 = vmatpush.msra.mxu0 0.0
  %3412 = vmatpush.msra.mxu0 0.0
  %3413 = vmatpush.msra.mxu0 0.0
  %3414 = vmatpush.msra.mxu0 0.0
  %3415 = vmatpush.msra.mxu0 %v3395
  %3416 = vmatpush.msra.mxu0 %v3393
  %3417 = vmatpush.msra.mxu0 %v3391
  %3418 = vmatpush.msra.mxu0 %v3389
  %3419 = vmatmul.f32.gmra.mxu0 %v3401
  %v3420 = vpop.f32.mrf.mxu0
  %v3421 = vadd.f32 %v3387, %v3420
  %3422 = vdwg.mxu0
  %vm3423 = vcmask 123904
  %3424 = vst.msk [vmem:[%s13] sm:$0x3] %vm3423, %v3421
  // Predicated region
  $region54: #{seastar_forward.1} parent=0 // pred_check
    _
  $region55: #{seastar_forward.1} parent=0 // pred_check_branch
    %3426 = sbr.rel (0) target = $region57
  $region56: #{seastar_forward.1} parent=0 // pred_region
    _
  $region57: #{seastar_forward.1} parent=0 // pred_fallthru
    _
  // Predicated region
  $region58: #{seastar_forward.1} parent=0 // pred_check
    _
  $region59: #{seastar_forward.1} parent=0 // pred_check_branch
    %3428 = sbr.rel (0) target = $region61
  $region60: #{seastar_forward.1} parent=0 // pred_region
    _
  $region61: #{seastar_forward.1} parent=0 // pred_fallthru
    _

</llo_original>
